<compile_context>
chip_gen: v7x
topology: tpu7x:2x2x1
jax: 0.10.0
libtpu: 0.0.40
codegen_flags: <defaults>
</compile_context>

<pallas_src>
import jax
import jax.numpy as jnp
from jax.experimental import pallas as pl
from jax.experimental.pallas import tpu as pltpu

TM_MAX = 1024                   # propagation output-row tile (multiple of 8)
TK_MAX = 512                    # adj-column (reduction) tile (multiple of 128; divides TM_MAX)
LANE = 128                      # lane padding for feature / hidden dims
VMEM_LIMIT = 32 * 1024 * 1024   # explicit scoped-VMEM budget, safe on v5e/v6e/v7x


# ---------------------------------------------------------------------------
# Kernels
# ---------------------------------------------------------------------------

def _proj_gate_kernel(mean_ref, var_ref, wm_ref, bm_ref, wv_ref, bv_ref,
                      mg_ref, vg_ref):
    """Linear(mean), Linear(var), relu, attention gating -> bf16 gated outputs."""
    m = jnp.dot(mean_ref[...], wm_ref[...],
                preferred_element_type=jnp.float32) + bm_ref[...]
    v = jnp.dot(var_ref[...], wv_ref[...],
                preferred_element_type=jnp.float32) + bv_ref[...]
    m = jnp.maximum(m, 0.0)          # act0 = relu
    v = jnp.maximum(v, 0.0)          # act1 = relu
    att = jnp.exp(-v)                # EUP slot, nearly free
    mg_ref[...] = (m * att).astype(mg_ref.dtype)
    vg_ref[...] = (v * att * att).astype(vg_ref.dtype)


def _proj_gate_initial_kernel(mean_ref, wm_ref, bm_ref, mg_ref, vg_ref):
    """initial=True layer: var = mean*1; var_conv weights never touched."""
    m = jnp.dot(mean_ref[...], wm_ref[...],
                preferred_element_type=jnp.float32) + bm_ref[...]
    m = jnp.maximum(m, 0.0)          # relu(mean); var = relu(mean*1) == same value
    v = m
    att = jnp.exp(-v)
    mg_ref[...] = (m * att).astype(mg_ref.dtype)
    vg_ref[...] = (v * att * att).astype(vg_ref.dtype)


def _propagate_kernel(adj_ref, mg_ref, vg_ref, mean_out_ref, var_out_ref,
                      acc_m_ref, acc_v_ref):
    """mean = relu(adj @ mg); var = relu(adj @ vg)  -- tiled over (rows, adj-cols)."""
    k = pl.program_id(1)

    @pl.when(k == 0)
    def _():
        acc_m_ref[...] = jnp.zeros_like(acc_m_ref)
        acc_v_ref[...] = jnp.zeros_like(acc_v_ref)

    adj = adj_ref[...]
    acc_m_ref[...] += jnp.dot(adj, mg_ref[...], preferred_element_type=jnp.float32)
    acc_v_ref[...] += jnp.dot(adj, vg_ref[...], preferred_element_type=jnp.float32)

    @pl.when(k == pl.num_programs(1) - 1)
    def _():
        # dropout>0 branch in the reference: relu again; dropout itself is identity (eval)
        mean_out_ref[...] = jnp.maximum(acc_m_ref[...], 0.0)
        var_out_ref[...] = jnp.maximum(acc_v_ref[...], 0.0)


def _propagate_reparam_kernel(adj_ref, mg_ref, vg_ref, sample_ref, out_ref,
                              acc_m_ref, acc_v_ref):
    """Final layer: propagation + fused reparameterisation epilogue."""
    k = pl.program_id(1)

    @pl.when(k == 0)
    def _():
        acc_m_ref[...] = jnp.zeros_like(acc_m_ref)
        acc_v_ref[...] = jnp.zeros_like(acc_v_ref)

    adj = adj_ref[...]
    acc_m_ref[...] += jnp.dot(adj, mg_ref[...], preferred_element_type=jnp.float32)
    acc_v_ref[...] += jnp.dot(adj, vg_ref[...], preferred_element_type=jnp.float32)

    @pl.when(k == pl.num_programs(1) - 1)
    def _():
        m = jnp.maximum(acc_m_ref[...], 0.0)
        v = jnp.maximum(acc_v_ref[...], 0.0)
        out_ref[...] = (m + sample_ref[...] * jnp.sqrt(v)).astype(out_ref.dtype)


# ---------------------------------------------------------------------------
# Wrappers
# ---------------------------------------------------------------------------

def _round_up(x, m):
    return ((x + m - 1) // m) * m


def _pad2d(x, rows, cols):
    r, c = x.shape
    return jnp.pad(x, ((0, rows - r), (0, cols - c)))


def _choose_tiles(n):
    """Pick (row_tile, col_tile, padded_n). Both tiles divide padded_n."""
    n128 = _round_up(max(n, 1), LANE)
    if n128 <= TK_MAX:                     # small graph: one tile covers everything
        return n128, n128, n128
    n_p = _round_up(n128, TM_MAX)          # TK_MAX divides TM_MAX -> divides n_p too
    return TM_MAX, TK_MAX, n_p


def proj_gate(mean, var, wm, bm, wv, bv, *, initial, row_tile):
    """Row-tiled projection + gating. Emits bf16 gated (mean, var)."""
    n_p, fin = mean.shape
    h_p = wm.shape[1]
    grid = (n_p // row_tile,)
    row_spec = pl.BlockSpec((row_tile, fin), lambda i: (i, 0))
    w_spec = pl.BlockSpec((fin, h_p), lambda i: (0, 0))
    b_spec = pl.BlockSpec((1, h_p), lambda i: (0, 0))
    out_spec = pl.BlockSpec((row_tile, h_p), lambda i: (i, 0))
    out_shapes = (jax.ShapeDtypeStruct((n_p, h_p), jnp.bfloat16),
                  jax.ShapeDtypeStruct((n_p, h_p), jnp.bfloat16))
    cp = pltpu.CompilerParams(dimension_semantics=("parallel",),
                              vmem_limit_bytes=VMEM_LIMIT)
    if initial:
        return pl.pallas_call(
            _proj_gate_initial_kernel,
            out_shape=out_shapes,
            grid=grid,
            in_specs=[row_spec, w_spec, b_spec],
            out_specs=(out_spec, out_spec),
            compiler_params=cp,
        )(mean, wm, bm)
    return pl.pallas_call(
        _proj_gate_kernel,
        out_shape=out_shapes,
        grid=grid,
        in_specs=[row_spec, row_spec, w_spec, b_spec, w_spec, b_spec],
        out_specs=(out_spec, out_spec),
        compiler_params=cp,
    )(mean, var, wm, bm, wv, bv)


def propagate(adj, mg, vg, *, tm, tk, sample=None):
    """adj @ gated with f32 accumulators; optionally fuses the reparam epilogue."""
    n_p = adj.shape[0]
    h_p = mg.shape[1]
    grid = (n_p // tm, n_p // tk)
    adj_spec = pl.BlockSpec((tm, tk), lambda i, k: (i, k))
    g_spec = pl.BlockSpec((tk, h_p), lambda i, k: (k, 0))
    o_spec = pl.BlockSpec((tm, h_p), lambda i, k: (i, 0))   # resident across k
    scratch = [pltpu.VMEM((tm, h_p), jnp.float32),
               pltpu.VMEM((tm, h_p), jnp.float32)]
    cp = pltpu.CompilerParams(dimension_semantics=("parallel", "arbitrary"),
                              vmem_limit_bytes=VMEM_LIMIT)
    if sample is None:
        return pl.pallas_call(
            _propagate_kernel,
            out_shape=(jax.ShapeDtypeStruct((n_p, h_p), jnp.float32),
                       jax.ShapeDtypeStruct((n_p, h_p), jnp.float32)),
            grid=grid,
            in_specs=[adj_spec, g_spec, g_spec],
            out_specs=(o_spec, o_spec),
            scratch_shapes=scratch,
            compiler_params=cp,
        )(adj, mg, vg)
    return pl.pallas_call(
        _propagate_reparam_kernel,
        out_shape=jax.ShapeDtypeStruct((n_p, h_p), jnp.float32),
        grid=grid,
        in_specs=[adj_spec, g_spec, g_spec, o_spec],
        out_specs=o_spec,
        scratch_shapes=scratch,
        compiler_params=cp,
    )(adj, mg, vg, sample)


def to_dense_adj(edge_index, num_nodes):
    """Dense (N, N) adjacency; duplicate edges sum (matches torch_geometric)."""
    src, dst = edge_index[0], edge_index[1]
    adj = jnp.zeros((num_nodes, num_nodes), dtype=jnp.float32)
    return adj.at[src, dst].add(1.0)


def init_linear_params(key, in_features, out_features):
    """Deterministic init mimicking nn.Linear default (uniform in +-1/sqrt(fan_in))."""
    k_w, k_b = jax.random.split(key)
    bound = 1.0 / jnp.sqrt(jnp.float32(in_features))
    w = jax.random.uniform(k_w, (in_features, out_features), jnp.float32, -bound, bound)
    b = jax.random.uniform(k_b, (1, out_features), jnp.float32, -bound, bound)
    return w, b


def encoder_forward(x, adj, params, sample):
    """Pallas equivalent of Encoder.forward (dropout in eval mode)."""
    n, nfeat = x.shape
    nhid = params["gc1_wm"].shape[1]

    # --- pad to hardware-friendly shapes (zero padding is inert, sliced at end) ---
    tm, tk, n_p = _choose_tiles(n)
    f_p = _round_up(nfeat, LANE)
    h_p = _round_up(nhid, LANE)

    adj_p = _pad2d(adj, n_p, n_p).astype(jnp.bfloat16)   # 0/1 (and small ints) exact
    x_p = _pad2d(x, n_p, f_p)
    sample_p = _pad2d(sample, n_p, h_p)

    wm1 = _pad2d(params["gc1_wm"], f_p, h_p)
    bm1 = _pad2d(params["gc1_bm"], 1, h_p)
    wm2 = _pad2d(params["gc2_wm"], h_p, h_p)
    bm2 = _pad2d(params["gc2_bm"], 1, h_p)
    wv2 = _pad2d(params["gc2_wv"], h_p, h_p)
    bv2 = _pad2d(params["gc2_bv"], 1, h_p)

    # gc1 (initial=True): var_conv weights are never used -> never DMA'd
    mg, vg = proj_gate(x_p, None, wm1, bm1, None, None, initial=True, row_tile=tk)
    mean, var = propagate(adj_p, mg, vg, tm=tm, tk=tk)

    # gc2 (initial=False) with fused reparameterisation epilogue
    mg, vg = proj_gate(mean, var, wm2, bm2, wv2, bv2, initial=False, row_tile=tk)
    out = propagate(adj_p, mg, vg, tm=tm, tk=tk, sample=sample_p)

    return out[:n, :nhid]


def encoder_reference(x, adj, params, sample):
    """Pure-JAX f32 reference of the same forward pass (for a sanity check)."""
    def layer(mean, var, wm, bm, wv, bv, initial):
        m = mean @ wm + bm
        v = m if initial else var @ wv + bv
        m = jnp.maximum(m, 0.0)
        v = jnp.maximum(v, 0.0)
        att = jnp.exp(-v)
        m = adj @ (m * att)
        v = adj @ (v * att * att)
        return jnp.maximum(m, 0.0), jnp.maximum(v, 0.0)   # dropout>0 branch, eval mode

    m, v = layer(x, x, params["gc1_wm"], params["gc1_bm"], None, None, True)
    m, v = layer(m, v, params["gc2_wm"], params["gc2_bm"],
                 params["gc2_wv"], params["gc2_bv"], False)
    return m + sample * jnp.sqrt(v)


# ---------------------------------------------------------------------------
# Main
# ---------------------------------------------------------------------------

if __name__ == "__main__":
    NFEAT, NHID, N_NODES, N_EDGES = 16, 32, 8, 20

    key = jax.random.PRNGKey(0)
    k_x, k_e1, k_e2, k_p1, k_p2, k_p3, k_p4, k_s = jax.random.split(key, 8)

    x = jax.random.normal(k_x, (N_NODES, NFEAT), jnp.float32)
    edge_index = jnp.stack([
        jax.random.randint(k_e1, (N_EDGES,), 0, N_NODES),
        jax.random.randint(k_e2, (N_EDGES,), 0, N_NODES),
    ], axis=0)

    gc1_wm, gc1_bm = init_linear_params(k_p1, NFEAT, NHID)
    gc1_wv, gc1_bv = init_linear_params(k_p2, NFEAT, NHID)   # unused (initial=True)
    gc2_wm, gc2_bm = init_linear_params(k_p3, NHID, NHID)
    gc2_wv, gc2_bv = init_linear_params(k_p4, NHID, NHID)
    params = dict(gc1_wm=gc1_wm, gc1_bm=gc1_bm, gc1_wv=gc1_wv, gc1_bv=gc1_bv,
                  gc2_wm=gc2_wm, gc2_bm=gc2_bm, gc2_wv=gc2_wv, gc2_bv=gc2_bv)

    # torch.randn(var.shape) equivalent, drawn deterministically up front
    sample = jax.random.normal(k_s, (N_NODES, NHID), jnp.float32)

    # Build the dense adjacency once, outside the kernels / hot path.
    adj = to_dense_adj(edge_index, N_NODES)

    fwd = jax.jit(encoder_forward)
    out = fwd(x, adj, params, sample)
    jax.block_until_ready(out)
    assert out.shape == (N_NODES, NHID) and out.dtype == jnp.float32

    # Sanity check against the pure-JAX f32 reference (bf16 gating on the MXU).
    ref = encoder_reference(x, adj, params, sample)
    assert jnp.allclose(out, ref, rtol=5e-2, atol=5e-2), \
        f"max abs err {jnp.max(jnp.abs(out - ref))}"

    print("KERNEL_OK")
</pallas_src>

<mosaic_0001>
module attributes {stable_mosaic.version = 11 : i64} {
  func.func @_proj_gate_initial_kernel(%arg0: i32, %arg1: memref<128x128xf32, #tpu.memory_space<vmem>>, %arg2: memref<128x128xf32, #tpu.memory_space<vmem>>, %arg3: memref<1x128xf32, #tpu.memory_space<vmem>>, %arg4: memref<128x128xbf16, #tpu.memory_space<vmem>>, %arg5: memref<128x128xbf16, #tpu.memory_space<vmem>>) attributes {dimension_semantics = [#tpu.dimension_semantics<parallel>], iteration_bounds = array<i64: 1>, scalar_prefetch = 0 : i64, scratch_operands = 0 : i64, tpu.core_type = #tpu.core_type<tc>, window_params = [{transform_indices = @transform_0, window_bounds = array<i64: 128, 128>}, {pipeline_mode = #tpu.pipeline_mode<synchronous>, transform_indices = @transform_1, window_bounds = array<i64: 128, 128>}, {pipeline_mode = #tpu.pipeline_mode<synchronous>, transform_indices = @transform_2, window_bounds = array<i64: 1, 128>}, {transform_indices = @transform_3, window_bounds = array<i64: 128, 128>}, {transform_indices = @transform_4, window_bounds = array<i64: 128, 128>}]} {
    %c0 = arith.constant 0 : index
    %c0_0 = arith.constant 0 : index
    %0 = vector.load %arg1[%c0, %c0_0] : memref<128x128xf32, #tpu.memory_space<vmem>>, vector<128x128xf32>
    %c0_1 = arith.constant 0 : index
    %c0_2 = arith.constant 0 : index
    %1 = vector.load %arg2[%c0_1, %c0_2] : memref<128x128xf32, #tpu.memory_space<vmem>>, vector<128x128xf32>
    %cst = arith.constant dense<0.000000e+00> : vector<128x128xf32>
    %2 = tpu.matmul %0, %1, %cst {dimension_numbers = #tpu.dot_dimension_numbers<[1], [0], [0], [1], [0, 0, 1, 1], [], []>} : vector<128x128xf32>, vector<128x128xf32>, vector<128x128xf32> -> vector<128x128xf32>
    %c0_3 = arith.constant 0 : index
    %c0_4 = arith.constant 0 : index
    %3 = vector.load %arg3[%c0_3, %c0_4] : memref<1x128xf32, #tpu.memory_space<vmem>>, vector<1x128xf32>
    %4 = vector.broadcast %3 : vector<1x128xf32> to vector<128x128xf32>
    %5 = arith.addf %2, %4 : vector<128x128xf32>
    %cst_5 = arith.constant 0.000000e+00 : f32
    %6 = vector.broadcast %cst_5 : f32 to vector<128x128xf32>
    %7 = arith.maximumf %5, %6 : vector<128x128xf32>
    %cst_6 = arith.constant 0.000000e+00 : f32
    %8 = vector.broadcast %cst_6 : f32 to vector<128x128xf32>
    %9 = arith.subf %8, %7 : vector<128x128xf32>
    %10 = math.exp %9 : vector<128x128xf32>
    %11 = arith.mulf %7, %10 : vector<128x128xf32>
    %12 = arith.truncf %11 : vector<128x128xf32> to vector<128x128xbf16>
    %c0_7 = arith.constant 0 : index
    %c0_8 = arith.constant 0 : index
    %13 = vector.load %arg4[%c0_7, %c0_8] : memref<128x128xbf16, #tpu.memory_space<vmem>>, vector<128x128xbf16>
    tpu.vector_store %arg4[%c0_7, %c0_8], %12 {strides = array<i32>} : memref<128x128xbf16, #tpu.memory_space<vmem>>, vector<128x128xbf16>,
    %14 = arith.mulf %7, %10 : vector<128x128xf32>
    %15 = arith.mulf %14, %10 : vector<128x128xf32>
    %16 = arith.truncf %15 : vector<128x128xf32> to vector<128x128xbf16>
    %c0_9 = arith.constant 0 : index
    %c0_10 = arith.constant 0 : index
    %17 = vector.load %arg5[%c0_9, %c0_10] : memref<128x128xbf16, #tpu.memory_space<vmem>>, vector<128x128xbf16>
    tpu.vector_store %arg5[%c0_9, %c0_10], %16 {strides = array<i32>} : memref<128x128xbf16, #tpu.memory_space<vmem>>, vector<128x128xbf16>,
    return
  }
  func.func @transform_0(%arg0: i32) -> (i32, i32) {
    %c0_i32 = arith.constant 0 : i32
    %c0_i32_0 = arith.constant 0 : i32
    return %arg0, %c0_i32 : i32, i32
  }
  func.func @transform_1(%arg0: i32) -> (i32, i32) {
    %c0_i32 = arith.constant 0 : i32
    %c0_i32_0 = arith.constant 0 : i32
    %c0_i32_1 = arith.constant 0 : i32
    return %c0_i32, %c0_i32_0 : i32, i32
  }
  func.func @transform_2(%arg0: i32) -> (i32, i32) {
    %c0_i32 = arith.constant 0 : i32
    %c0_i32_0 = arith.constant 0 : i32
    %c0_i32_1 = arith.constant 0 : i32
    return %c0_i32, %c0_i32_0 : i32, i32
  }
  func.func @transform_3(%arg0: i32) -> (i32, i32) {
    %c0_i32 = arith.constant 0 : i32
    %c0_i32_0 = arith.constant 0 : i32
    return %arg0, %c0_i32 : i32, i32
  }
  func.func @transform_4(%arg0: i32) -> (i32, i32) {
    %c0_i32 = arith.constant 0 : i32
    %c0_i32_0 = arith.constant 0 : i32
    return %arg0, %c0_i32 : i32, i32
  }
}

module attributes {stable_mosaic.version = 11 : i64} {
  func.func @_propagate_kernel(%arg0: i32, %arg1: i32, %arg2: memref<128x128xbf16, #tpu.memory_space<vmem>>, %arg3: memref<128x128xbf16, #tpu.memory_space<vmem>>, %arg4: memref<128x128xbf16, #tpu.memory_space<vmem>>, %arg5: memref<128x128xf32, #tpu.memory_space<vmem>>, %arg6: memref<128x128xf32, #tpu.memory_space<vmem>>, %arg7: memref<128x128xf32, #tpu.memory_space<vmem>>, %arg8: memref<128x128xf32, #tpu.memory_space<vmem>>) attributes {dimension_semantics = [#tpu.dimension_semantics<parallel>, #tpu.dimension_semantics<arbitrary>], iteration_bounds = array<i64: 1, 1>, scalar_prefetch = 0 : i64, scratch_operands = 2 : i64, tpu.core_type = #tpu.core_type<tc>, window_params = [{transform_indices = @transform_0, window_bounds = array<i64: 128, 128>}, {transform_indices = @transform_1, window_bounds = array<i64: 128, 128>}, {transform_indices = @transform_2, window_bounds = array<i64: 128, 128>}, {transform_indices = @transform_3, window_bounds = array<i64: 128, 128>}, {transform_indices = @transform_4, window_bounds = array<i64: 128, 128>}]} {
    %c0_i32 = arith.constant 0 : i32
    %0 = arith.cmpi eq, %arg1, %c0_i32 : i32
    %1 = arith.extui %0 : i1 to i32
    %c0_i32_0 = arith.constant 0 : i32
    %2 = arith.cmpi ne, %1, %c0_i32_0 : i32
    scf.if %2 {
      %cst_17 = arith.constant 0.000000e+00 : f32
      %17 = vector.broadcast %cst_17 : f32 to vector<128x128xf32>
      %c0_18 = arith.constant 0 : index
      %c0_19 = arith.constant 0 : index
      %18 = vector.load %arg7[%c0_18, %c0_19] : memref<128x128xf32, #tpu.memory_space<vmem>>, vector<128x128xf32>
      tpu.vector_store %arg7[%c0_18, %c0_19], %17 {strides = array<i32>} : memref<128x128xf32, #tpu.memory_space<vmem>>, vector<128x128xf32>,
      %cst_20 = arith.constant 0.000000e+00 : f32
      %19 = vector.broadcast %cst_20 : f32 to vector<128x128xf32>
      %c0_21 = arith.constant 0 : index
      %c0_22 = arith.constant 0 : index
      %20 = vector.load %arg8[%c0_21, %c0_22] : memref<128x128xf32, #tpu.memory_space<vmem>>, vector<128x128xf32>
      tpu.vector_store %arg8[%c0_21, %c0_22], %19 {strides = array<i32>} : memref<128x128xf32, #tpu.memory_space<vmem>>, vector<128x128xf32>,
    } else {
    }
    %c0 = arith.constant 0 : index
    %c0_1 = arith.constant 0 : index
    %3 = vector.load %arg2[%c0, %c0_1] : memref<128x128xbf16, #tpu.memory_space<vmem>>, vector<128x128xbf16>
    %c0_2 = arith.constant 0 : index
    %c0_3 = arith.constant 0 : index
    %4 = vector.load %arg7[%c0_2, %c0_3] : memref<128x128xf32, #tpu.memory_space<vmem>>, vector<128x128xf32>
    %c0_4 = arith.constant 0 : index
    %c0_5 = arith.constant 0 : index
    %5 = vector.load %arg3[%c0_4, %c0_5] : memref<128x128xbf16, #tpu.memory_space<vmem>>, vector<128x128xbf16>
    %cst = arith.constant dense<0.000000e+00> : vector<128x128xf32>
    %6 = tpu.matmul %3, %5, %cst {dimension_numbers = #tpu.dot_dimension_numbers<[1], [0], [0], [1], [0, 0, 1, 1], [], []>} : vector<128x128xbf16>, vector<128x128xbf16>, vector<128x128xf32> -> vector<128x128xf32>
    %7 = arith.addf %4, %6 : vector<128x128xf32>
    %c0_6 = arith.constant 0 : index
    %c0_7 = arith.constant 0 : index
    %8 = vector.load %arg7[%c0_6, %c0_7] : memref<128x128xf32, #tpu.memory_space<vmem>>, vector<128x128xf32>
    tpu.vector_store %arg7[%c0_6, %c0_7], %7 {strides = array<i32>} : memref<128x128xf32, #tpu.memory_space<vmem>>, vector<128x128xf32>,
    %c0_8 = arith.constant 0 : index
    %c0_9 = arith.constant 0 : index
    %9 = vector.load %arg8[%c0_8, %c0_9] : memref<128x128xf32, #tpu.memory_space<vmem>>, vector<128x128xf32>
    %c0_10 = arith.constant 0 : index
    %c0_11 = arith.constant 0 : index
    %10 = vector.load %arg4[%c0_10, %c0_11] : memref<128x128xbf16, #tpu.memory_space<vmem>>, vector<128x128xbf16>
    %cst_12 = arith.constant dense<0.000000e+00> : vector<128x128xf32>
    %11 = tpu.matmul %3, %10, %cst_12 {dimension_numbers = #tpu.dot_dimension_numbers<[1], [0], [0], [1], [0, 0, 1, 1], [], []>} : vector<128x128xbf16>, vector<128x128xbf16>, vector<128x128xf32> -> vector<128x128xf32>
    %12 = arith.addf %9, %11 : vector<128x128xf32>
    %c0_13 = arith.constant 0 : index
    %c0_14 = arith.constant 0 : index
    %13 = vector.load %arg8[%c0_13, %c0_14] : memref<128x128xf32, #tpu.memory_space<vmem>>, vector<128x128xf32>
    tpu.vector_store %arg8[%c0_13, %c0_14], %12 {strides = array<i32>} : memref<128x128xf32, #tpu.memory_space<vmem>>, vector<128x128xf32>,
    %c0_i32_15 = arith.constant 0 : i32
    %14 = arith.cmpi eq, %arg1, %c0_i32_15 : i32
    %15 = arith.extui %14 : i1 to i32
    %c0_i32_16 = arith.constant 0 : i32
    %16 = arith.cmpi ne, %15, %c0_i32_16 : i32
    scf.if %16 {
      %c0_17 = arith.constant 0 : index
      %c0_18 = arith.constant 0 : index
      %17 = vector.load %arg7[%c0_17, %c0_18] : memref<128x128xf32, #tpu.memory_space<vmem>>, vector<128x128xf32>
      %cst_19 = arith.constant 0.000000e+00 : f32
      %18 = vector.broadcast %cst_19 : f32 to vector<128x128xf32>
      %19 = arith.maximumf %17, %18 : vector<128x128xf32>
      %c0_20 = arith.constant 0 : index
      %c0_21 = arith.constant 0 : index
      %20 = vector.load %arg5[%c0_20, %c0_21] : memref<128x128xf32, #tpu.memory_space<vmem>>, vector<128x128xf32>
      tpu.vector_store %arg5[%c0_20, %c0_21], %19 {strides = array<i32>} : memref<128x128xf32, #tpu.memory_space<vmem>>, vector<128x128xf32>,
      %c0_22 = arith.constant 0 : index
      %c0_23 = arith.constant 0 : index
      %21 = vector.load %arg8[%c0_22, %c0_23] : memref<128x128xf32, #tpu.memory_space<vmem>>, vector<128x128xf32>
      %cst_24 = arith.constant 0.000000e+00 : f32
      %22 = vector.broadcast %cst_24 : f32 to vector<128x128xf32>
      %23 = arith.maximumf %21, %22 : vector<128x128xf32>
      %c0_25 = arith.constant 0 : index
      %c0_26 = arith.constant 0 : index
      %24 = vector.load %arg6[%c0_25, %c0_26] : memref<128x128xf32, #tpu.memory_space<vmem>>, vector<128x128xf32>
      tpu.vector_store %arg6[%c0_25, %c0_26], %23 {strides = array<i32>} : memref<128x128xf32, #tpu.memory_space<vmem>>, vector<128x128xf32>,
    } else {
    }
    return
  }
  func.func @transform_0(%arg0: i32, %arg1: i32) -> (i32, i32) {
    %c0_i32 = arith.constant 0 : i32
    return %arg0, %arg1 : i32, i32
  }
  func.func @transform_1(%arg0: i32, %arg1: i32) -> (i32, i32) {
    %c0_i32 = arith.constant 0 : i32
    %c0_i32_0 = arith.constant 0 : i32
    return %arg1, %c0_i32 : i32, i32
  }
  func.func @transform_2(%arg0: i32, %arg1: i32) -> (i32, i32) {
    %c0_i32 = arith.constant 0 : i32
    %c0_i32_0 = arith.constant 0 : i32
    return %arg1, %c0_i32 : i32, i32
  }
  func.func @transform_3(%arg0: i32, %arg1: i32) -> (i32, i32) {
    %c0_i32 = arith.constant 0 : i32
    %c0_i32_0 = arith.constant 0 : i32
    return %arg0, %c0_i32 : i32, i32
  }
  func.func @transform_4(%arg0: i32, %arg1: i32) -> (i32, i32) {
    %c0_i32 = arith.constant 0 : i32
    %c0_i32_0 = arith.constant 0 : i32
    return %arg0, %c0_i32 : i32, i32
  }
}

module attributes {stable_mosaic.version = 11 : i64} {
  func.func @_proj_gate_kernel(%arg0: i32, %arg1: memref<128x128xf32, #tpu.memory_space<vmem>>, %arg2: memref<128x128xf32, #tpu.memory_space<vmem>>, %arg3: memref<128x128xf32, #tpu.memory_space<vmem>>, %arg4: memref<1x128xf32, #tpu.memory_space<vmem>>, %arg5: memref<128x128xf32, #tpu.memory_space<vmem>>, %arg6: memref<1x128xf32, #tpu.memory_space<vmem>>, %arg7: memref<128x128xbf16, #tpu.memory_space<vmem>>, %arg8: memref<128x128xbf16, #tpu.memory_space<vmem>>) attributes {dimension_semantics = [#tpu.dimension_semantics<parallel>], iteration_bounds = array<i64: 1>, scalar_prefetch = 0 : i64, scratch_operands = 0 : i64, tpu.core_type = #tpu.core_type<tc>, window_params = [{transform_indices = @transform_0, window_bounds = array<i64: 128, 128>}, {transform_indices = @transform_1, window_bounds = array<i64: 128, 128>}, {pipeline_mode = #tpu.pipeline_mode<synchronous>, transform_indices = @transform_2, window_bounds = array<i64: 128, 128>}, {pipeline_mode = #tpu.pipeline_mode<synchronous>, transform_indices = @transform_3, window_bounds = array<i64: 1, 128>}, {pipeline_mode = #tpu.pipeline_mode<synchronous>, transform_indices = @transform_4, window_bounds = array<i64: 128, 128>}, {pipeline_mode = #tpu.pipeline_mode<synchronous>, transform_indices = @transform_5, window_bounds = array<i64: 1, 128>}, {transform_indices = @transform_6, window_bounds = array<i64: 128, 128>}, {transform_indices = @transform_7, window_bounds = array<i64: 128, 128>}]} {
    %c0 = arith.constant 0 : index
    %c0_0 = arith.constant 0 : index
    %0 = vector.load %arg1[%c0, %c0_0] : memref<128x128xf32, #tpu.memory_space<vmem>>, vector<128x128xf32>
    %c0_1 = arith.constant 0 : index
    %c0_2 = arith.constant 0 : index
    %1 = vector.load %arg3[%c0_1, %c0_2] : memref<128x128xf32, #tpu.memory_space<vmem>>, vector<128x128xf32>
    %cst = arith.constant dense<0.000000e+00> : vector<128x128xf32>
    %2 = tpu.matmul %0, %1, %cst {dimension_numbers = #tpu.dot_dimension_numbers<[1], [0], [0], [1], [0, 0, 1, 1], [], []>} : vector<128x128xf32>, vector<128x128xf32>, vector<128x128xf32> -> vector<128x128xf32>
    %c0_3 = arith.constant 0 : index
    %c0_4 = arith.constant 0 : index
    %3 = vector.load %arg4[%c0_3, %c0_4] : memref<1x128xf32, #tpu.memory_space<vmem>>, vector<1x128xf32>
    %4 = vector.broadcast %3 : vector<1x128xf32> to vector<128x128xf32>
    %5 = arith.addf %2, %4 : vector<128x128xf32>
    %c0_5 = arith.constant 0 : index
    %c0_6 = arith.constant 0 : index
    %6 = vector.load %arg2[%c0_5, %c0_6] : memref<128x128xf32, #tpu.memory_space<vmem>>, vector<128x128xf32>
    %c0_7 = arith.constant 0 : index
    %c0_8 = arith.constant 0 : index
    %7 = vector.load %arg5[%c0_7, %c0_8] : memref<128x128xf32, #tpu.memory_space<vmem>>, vector<128x128xf32>
    %cst_9 = arith.constant dense<0.000000e+00> : vector<128x128xf32>
    %8 = tpu.matmul %6, %7, %cst_9 {dimension_numbers = #tpu.dot_dimension_numbers<[1], [0], [0], [1], [0, 0, 1, 1], [], []>} : vector<128x128xf32>, vector<128x128xf32>, vector<128x128xf32> -> vector<128x128xf32>
    %c0_10 = arith.constant 0 : index
    %c0_11 = arith.constant 0 : index
    %9 = vector.load %arg6[%c0_10, %c0_11] : memref<1x128xf32, #tpu.memory_space<vmem>>, vector<1x128xf32>
    %10 = vector.broadcast %9 : vector<1x128xf32> to vector<128x128xf32>
    %11 = arith.addf %8, %10 : vector<128x128xf32>
    %cst_12 = arith.constant 0.000000e+00 : f32
    %12 = vector.broadcast %cst_12 : f32 to vector<128x128xf32>
    %13 = arith.maximumf %5, %12 : vector<128x128xf32>
    %cst_13 = arith.constant 0.000000e+00 : f32
    %14 = vector.broadcast %cst_13 : f32 to vector<128x128xf32>
    %15 = arith.maximumf %11, %14 : vector<128x128xf32>
    %cst_14 = arith.constant 0.000000e+00 : f32
    %16 = vector.broadcast %cst_14 : f32 to vector<128x128xf32>
    %17 = arith.subf %16, %15 : vector<128x128xf32>
    %18 = math.exp %17 : vector<128x128xf32>
    %19 = arith.mulf %13, %18 : vector<128x128xf32>
    %20 = arith.truncf %19 : vector<128x128xf32> to vector<128x128xbf16>
    %c0_15 = arith.constant 0 : index
    %c0_16 = arith.constant 0 : index
    %21 = vector.load %arg7[%c0_15, %c0_16] : memref<128x128xbf16, #tpu.memory_space<vmem>>, vector<128x128xbf16>
    tpu.vector_store %arg7[%c0_15, %c0_16], %20 {strides = array<i32>} : memref<128x128xbf16, #tpu.memory_space<vmem>>, vector<128x128xbf16>,
    %22 = arith.mulf %15, %18 : vector<128x128xf32>
    %23 = arith.mulf %22, %18 : vector<128x128xf32>
    %24 = arith.truncf %23 : vector<128x128xf32> to vector<128x128xbf16>
    %c0_17 = arith.constant 0 : index
    %c0_18 = arith.constant 0 : index
    %25 = vector.load %arg8[%c0_17, %c0_18] : memref<128x128xbf16, #tpu.memory_space<vmem>>, vector<128x128xbf16>
    tpu.vector_store %arg8[%c0_17, %c0_18], %24 {strides = array<i32>} : memref<128x128xbf16, #tpu.memory_space<vmem>>, vector<128x128xbf16>,
    return
  }
  func.func @transform_0(%arg0: i32) -> (i32, i32) {
    %c0_i32 = arith.constant 0 : i32
    %c0_i32_0 = arith.constant 0 : i32
    return %arg0, %c0_i32 : i32, i32
  }
  func.func @transform_1(%arg0: i32) -> (i32, i32) {
    %c0_i32 = arith.constant 0 : i32
    %c0_i32_0 = arith.constant 0 : i32
    return %arg0, %c0_i32 : i32, i32
  }
  func.func @transform_2(%arg0: i32) -> (i32, i32) {
    %c0_i32 = arith.constant 0 : i32
    %c0_i32_0 = arith.constant 0 : i32
    %c0_i32_1 = arith.constant 0 : i32
    return %c0_i32, %c0_i32_0 : i32, i32
  }
  func.func @transform_3(%arg0: i32) -> (i32, i32) {
    %c0_i32 = arith.constant 0 : i32
    %c0_i32_0 = arith.constant 0 : i32
    %c0_i32_1 = arith.constant 0 : i32
    return %c0_i32, %c0_i32_0 : i32, i32
  }
  func.func @transform_4(%arg0: i32) -> (i32, i32) {
    %c0_i32 = arith.constant 0 : i32
    %c0_i32_0 = arith.constant 0 : i32
    %c0_i32_1 = arith.constant 0 : i32
    return %c0_i32, %c0_i32_0 : i32, i32
  }
  func.func @transform_5(%arg0: i32) -> (i32, i32) {
    %c0_i32 = arith.constant 0 : i32
    %c0_i32_0 = arith.constant 0 : i32
    %c0_i32_1 = arith.constant 0 : i32
    return %c0_i32, %c0_i32_0 : i32, i32
  }
  func.func @transform_6(%arg0: i32) -> (i32, i32) {
    %c0_i32 = arith.constant 0 : i32
    %c0_i32_0 = arith.constant 0 : i32
    return %arg0, %c0_i32 : i32, i32
  }
  func.func @transform_7(%arg0: i32) -> (i32, i32) {
    %c0_i32 = arith.constant 0 : i32
    %c0_i32_0 = arith.constant 0 : i32
    return %arg0, %c0_i32 : i32, i32
  }
}

module attributes {stable_mosaic.version = 11 : i64} {
  func.func @_propagate_reparam_kernel(%arg0: i32, %arg1: i32, %arg2: memref<128x128xbf16, #tpu.memory_space<vmem>>, %arg3: memref<128x128xbf16, #tpu.memory_space<vmem>>, %arg4: memref<128x128xbf16, #tpu.memory_space<vmem>>, %arg5: memref<128x128xf32, #tpu.memory_space<vmem>>, %arg6: memref<128x128xf32, #tpu.memory_space<vmem>>, %arg7: memref<128x128xf32, #tpu.memory_space<vmem>>, %arg8: memref<128x128xf32, #tpu.memory_space<vmem>>) attributes {dimension_semantics = [#tpu.dimension_semantics<parallel>, #tpu.dimension_semantics<arbitrary>], iteration_bounds = array<i64: 1, 1>, scalar_prefetch = 0 : i64, scratch_operands = 2 : i64, tpu.core_type = #tpu.core_type<tc>, window_params = [{transform_indices = @transform_0, window_bounds = array<i64: 128, 128>}, {transform_indices = @transform_1, window_bounds = array<i64: 128, 128>}, {transform_indices = @transform_2, window_bounds = array<i64: 128, 128>}, {transform_indices = @transform_3, window_bounds = array<i64: 128, 128>}, {transform_indices = @transform_4, window_bounds = array<i64: 128, 128>}]} {
    %c0_i32 = arith.constant 0 : i32
    %0 = arith.cmpi eq, %arg1, %c0_i32 : i32
    %1 = arith.extui %0 : i1 to i32
    %c0_i32_0 = arith.constant 0 : i32
    %2 = arith.cmpi ne, %1, %c0_i32_0 : i32
    scf.if %2 {
      %cst_17 = arith.constant 0.000000e+00 : f32
      %17 = vector.broadcast %cst_17 : f32 to vector<128x128xf32>
      %c0_18 = arith.constant 0 : index
      %c0_19 = arith.constant 0 : index
      %18 = vector.load %arg7[%c0_18, %c0_19] : memref<128x128xf32, #tpu.memory_space<vmem>>, vector<128x128xf32>
      tpu.vector_store %arg7[%c0_18, %c0_19], %17 {strides = array<i32>} : memref<128x128xf32, #tpu.memory_space<vmem>>, vector<128x128xf32>,
      %cst_20 = arith.constant 0.000000e+00 : f32
      %19 = vector.broadcast %cst_20 : f32 to vector<128x128xf32>
      %c0_21 = arith.constant 0 : index
      %c0_22 = arith.constant 0 : index
      %20 = vector.load %arg8[%c0_21, %c0_22] : memref<128x128xf32, #tpu.memory_space<vmem>>, vector<128x128xf32>
      tpu.vector_store %arg8[%c0_21, %c0_22], %19 {strides = array<i32>} : memref<128x128xf32, #tpu.memory_space<vmem>>, vector<128x128xf32>,
    } else {
    }
    %c0 = arith.constant 0 : index
    %c0_1 = arith.constant 0 : index
    %3 = vector.load %arg2[%c0, %c0_1] : memref<128x128xbf16, #tpu.memory_space<vmem>>, vector<128x128xbf16>
    %c0_2 = arith.constant 0 : index
    %c0_3 = arith.constant 0 : index
    %4 = vector.load %arg7[%c0_2, %c0_3] : memref<128x128xf32, #tpu.memory_space<vmem>>, vector<128x128xf32>
    %c0_4 = arith.constant 0 : index
    %c0_5 = arith.constant 0 : index
    %5 = vector.load %arg3[%c0_4, %c0_5] : memref<128x128xbf16, #tpu.memory_space<vmem>>, vector<128x128xbf16>
    %cst = arith.constant dense<0.000000e+00> : vector<128x128xf32>
    %6 = tpu.matmul %3, %5, %cst {dimension_numbers = #tpu.dot_dimension_numbers<[1], [0], [0], [1], [0, 0, 1, 1], [], []>} : vector<128x128xbf16>, vector<128x128xbf16>, vector<128x128xf32> -> vector<128x128xf32>
    %7 = arith.addf %4, %6 : vector<128x128xf32>
    %c0_6 = arith.constant 0 : index
    %c0_7 = arith.constant 0 : index
    %8 = vector.load %arg7[%c0_6, %c0_7] : memref<128x128xf32, #tpu.memory_space<vmem>>, vector<128x128xf32>
    tpu.vector_store %arg7[%c0_6, %c0_7], %7 {strides = array<i32>} : memref<128x128xf32, #tpu.memory_space<vmem>>, vector<128x128xf32>,
    %c0_8 = arith.constant 0 : index
    %c0_9 = arith.constant 0 : index
    %9 = vector.load %arg8[%c0_8, %c0_9] : memref<128x128xf32, #tpu.memory_space<vmem>>, vector<128x128xf32>
    %c0_10 = arith.constant 0 : index
    %c0_11 = arith.constant 0 : index
    %10 = vector.load %arg4[%c0_10, %c0_11] : memref<128x128xbf16, #tpu.memory_space<vmem>>, vector<128x128xbf16>
    %cst_12 = arith.constant dense<0.000000e+00> : vector<128x128xf32>
    %11 = tpu.matmul %3, %10, %cst_12 {dimension_numbers = #tpu.dot_dimension_numbers<[1], [0], [0], [1], [0, 0, 1, 1], [], []>} : vector<128x128xbf16>, vector<128x128xbf16>, vector<128x128xf32> -> vector<128x128xf32>
    %12 = arith.addf %9, %11 : vector<128x128xf32>
    %c0_13 = arith.constant 0 : index
    %c0_14 = arith.constant 0 : index
    %13 = vector.load %arg8[%c0_13, %c0_14] : memref<128x128xf32, #tpu.memory_space<vmem>>, vector<128x128xf32>
    tpu.vector_store %arg8[%c0_13, %c0_14], %12 {strides = array<i32>} : memref<128x128xf32, #tpu.memory_space<vmem>>, vector<128x128xf32>,
    %c0_i32_15 = arith.constant 0 : i32
    %14 = arith.cmpi eq, %arg1, %c0_i32_15 : i32
    %15 = arith.extui %14 : i1 to i32
    %c0_i32_16 = arith.constant 0 : i32
    %16 = arith.cmpi ne, %15, %c0_i32_16 : i32
    scf.if %16 {
      %c0_17 = arith.constant 0 : index
      %c0_18 = arith.constant 0 : index
      %17 = vector.load %arg7[%c0_17, %c0_18] : memref<128x128xf32, #tpu.memory_space<vmem>>, vector<128x128xf32>
      %cst_19 = arith.constant 0.000000e+00 : f32
      %18 = vector.broadcast %cst_19 : f32 to vector<128x128xf32>
      %19 = arith.maximumf %17, %18 : vector<128x128xf32>
      %c0_20 = arith.constant 0 : index
      %c0_21 = arith.constant 0 : index
      %20 = vector.load %arg8[%c0_20, %c0_21] : memref<128x128xf32, #tpu.memory_space<vmem>>, vector<128x128xf32>
      %cst_22 = arith.constant 0.000000e+00 : f32
      %21 = vector.broadcast %cst_22 : f32 to vector<128x128xf32>
      %22 = arith.maximumf %20, %21 : vector<128x128xf32>
      %c0_23 = arith.constant 0 : index
      %c0_24 = arith.constant 0 : index
      %23 = vector.load %arg5[%c0_23, %c0_24] : memref<128x128xf32, #tpu.memory_space<vmem>>, vector<128x128xf32>
      %24 = math.sqrt %22 : vector<128x128xf32>
      %25 = arith.mulf %23, %24 : vector<128x128xf32>
      %26 = arith.addf %19, %25 : vector<128x128xf32>
      %c0_25 = arith.constant 0 : index
      %c0_26 = arith.constant 0 : index
      %27 = vector.load %arg6[%c0_25, %c0_26] : memref<128x128xf32, #tpu.memory_space<vmem>>, vector<128x128xf32>
      tpu.vector_store %arg6[%c0_25, %c0_26], %26 {strides = array<i32>} : memref<128x128xf32, #tpu.memory_space<vmem>>, vector<128x128xf32>,
    } else {
    }
    return
  }
  func.func @transform_0(%arg0: i32, %arg1: i32) -> (i32, i32) {
    %c0_i32 = arith.constant 0 : i32
    return %arg0, %arg1 : i32, i32
  }
  func.func @transform_1(%arg0: i32, %arg1: i32) -> (i32, i32) {
    %c0_i32 = arith.constant 0 : i32
    %c0_i32_0 = arith.constant 0 : i32
    return %arg1, %c0_i32 : i32, i32
  }
  func.func @transform_2(%arg0: i32, %arg1: i32) -> (i32, i32) {
    %c0_i32 = arith.constant 0 : i32
    %c0_i32_0 = arith.constant 0 : i32
    return %arg1, %c0_i32 : i32, i32
  }
  func.func @transform_3(%arg0: i32, %arg1: i32) -> (i32, i32) {
    %c0_i32 = arith.constant 0 : i32
    %c0_i32_0 = arith.constant 0 : i32
    return %arg0, %c0_i32 : i32, i32
  }
  func.func @transform_4(%arg0: i32, %arg1: i32) -> (i32, i32) {
    %c0_i32 = arith.constant 0 : i32
    %c0_i32_0 = arith.constant 0 : i32
    return %arg0, %c0_i32 : i32, i32
  }
}

</mosaic_0001>

<llo_original>
// kernel: encoder_forward.4
$region0: #{encoder_forward.4}
  #allocation0 [shape = 'u32[]', space=smem, size = 0x4, offset = 0x4, fixed_abs, tag = 'smem constant byte address 0x4 - core index']
  #allocation1 [shape = 'u32[144,128]{1,0:T(1,128)}', space=vmem, size = 0x12000, scoped, tag = 'internal scratch']
  %s0 = inlined_call_operand.vmem [shape: f32[128,128], index: 0, kind: input, shape index: {}]
  %s1 = inlined_call_operand.vmem [shape: f32[128,128], index: 1, kind: input, shape index: {}]
  %s2 = inlined_call_operand.vmem [shape: f32[1,128], index: 2, kind: input, shape index: {}]
  %s3 = inlined_call_operand.vmem [shape: bf16[128,128], index: 3, kind: output, shape index: {0}]
  %s4 = inlined_call_operand.vmem [shape: bf16[128,128], index: 4, kind: output, shape index: {1}]
  %5 = xla_tuple %s3, %s4
  %s6 = sld [smem:[#allocation0]]
  $region30: #{encoder_forward.4} parent=0
    _
  %s8 = ssub.s32 1, %s6
  %s9 = scalar_select 0, %s8, %s6
  // Predicated region
  $region2: #{encoder_forward.4} parent=0 // pred_check
    _
  $region3: #{encoder_forward.4} parent=0 // pred_check_branch
    %11 = sbr.rel (0) target = $region5
  $region4: #{encoder_forward.4} parent=0 // pred_region
    _
  $region5: #{encoder_forward.4} parent=0 // pred_fallthru
    _
  // Predicated region
  $region6: #{encoder_forward.4} parent=0 // pred_check
    _
  $region7: #{encoder_forward.4} parent=0 // pred_check_branch
    %13 = sbr.rel (0) target = $region9
  $region8: #{encoder_forward.4} parent=0 // pred_region
    _
  $region9: #{encoder_forward.4} parent=0 // pred_fallthru
    _
  // Predicated region
  $region10: #{encoder_forward.4} parent=0 // pred_check
    _
  $region11: #{encoder_forward.4} parent=0 // pred_check_branch
    %15 = sbr.rel (0) target = $region13
  $region12: #{encoder_forward.4} parent=0 // pred_region
    _
  $region13: #{encoder_forward.4} parent=0 // pred_fallthru
    _
  %v16 = vld [vmem:[%s0] sm:$0xff]
  %v17 = vld [vmem:[%s0 + $0x8] sm:$0xff]
  %v18 = vld [vmem:[%s0 + $0x10] sm:$0xff]
  %v19 = vld [vmem:[%s0 + $0x18] sm:$0xff]
  %v20 = vld [vmem:[%s0 + $0x20] sm:$0xff]
  %v21 = vld [vmem:[%s0 + $0x28] sm:$0xff]
  %v22 = vld [vmem:[%s0 + $0x30] sm:$0xff]
  %v23 = vld [vmem:[%s0 + $0x38] sm:$0xff]
  %v24 = vld [vmem:[%s0 + $0x40] sm:$0xff]
  %v25 = vld [vmem:[%s0 + $0x48] sm:$0xff]
  %v26 = vld [vmem:[%s0 + $0x50] sm:$0xff]
  %v27 = vld [vmem:[%s0 + $0x58] sm:$0xff]
  %v28 = vld [vmem:[%s0 + $0x60] sm:$0xff]
  %v29 = vld [vmem:[%s0 + $0x68] sm:$0xff]
  %v30 = vld [vmem:[%s0 + $0x70] sm:$0xff]
  %v31 = vld [vmem:[%s0 + $0x78] sm:$0xff]
  %v32 = vld [vmem:[%s1] sm:$0xff]
  %v33 = vld [vmem:[%s1 + $0x8] sm:$0xff]
  %v34 = vld [vmem:[%s1 + $0x10] sm:$0xff]
  %v35 = vld [vmem:[%s1 + $0x18] sm:$0xff]
  %v36 = vld [vmem:[%s1 + $0x20] sm:$0xff]
  %v37 = vld [vmem:[%s1 + $0x28] sm:$0xff]
  %v38 = vld [vmem:[%s1 + $0x30] sm:$0xff]
  %v39 = vld [vmem:[%s1 + $0x38] sm:$0xff]
  %v40 = vld [vmem:[%s1 + $0x40] sm:$0xff]
  %v41 = vld [vmem:[%s1 + $0x48] sm:$0xff]
  %v42 = vld [vmem:[%s1 + $0x50] sm:$0xff]
  %v43 = vld [vmem:[%s1 + $0x58] sm:$0xff]
  %v44 = vld [vmem:[%s1 + $0x60] sm:$0xff]
  %v45 = vld [vmem:[%s1 + $0x68] sm:$0xff]
  %v46 = vld [vmem:[%s1 + $0x70] sm:$0xff]
  %v47 = vld [vmem:[%s1 + $0x78] sm:$0xff]
  %v48 = vld [vmem:[%s2] sm:$0x1]
  %v50 = vlaneseq
  %v51 = vshrl.u32 %v50, 7
  %v52 = vsub.s32 0, %v51
  %v53 = vrot.slane %v48, %v52
  %55 = vmatprep.subr.mxu0 0.0
  %56 = vmatpush1.msra.mxu0 %v32
  %57 = vmatprep.subr.mxu0 0.0
  %58 = vmatpush1.msra.mxu0 %v33
  %59 = vmatprep.subr.mxu0 0.0
  %60 = vmatpush1.msra.mxu0 %v34
  %61 = vmatprep.subr.mxu0 0.0
  %62 = vmatpush1.msra.mxu0 %v35
  %63 = vmatprep.subr.mxu0 0.0
  %64 = vmatpush1.msra.mxu0 %v36
  %65 = vmatprep.subr.mxu0 0.0
  %66 = vmatpush1.msra.mxu0 %v37
  %67 = vmatprep.subr.mxu0 0.0
  %68 = vmatpush1.msra.mxu0 %v38
  %69 = vmatprep.subr.mxu0 0.0
  %70 = vmatpush1.msra.mxu0 %v39
  %71 = vmatprep.subr.mxu0 0.0
  %72 = vmatpush1.msra.mxu0 %v40
  %73 = vmatprep.subr.mxu0 0.0
  %74 = vmatpush1.msra.mxu0 %v41
  %75 = vmatprep.subr.mxu0 0.0
  %76 = vmatpush1.msra.mxu0 %v42
  %77 = vmatprep.subr.mxu0 0.0
  %78 = vmatpush1.msra.mxu0 %v43
  %79 = vmatprep.subr.mxu0 0.0
  %80 = vmatpush1.msra.mxu0 %v44
  %81 = vmatprep.subr.mxu0 0.0
  %82 = vmatpush1.msra.mxu0 %v45
  %83 = vmatprep.subr.mxu0 0.0
  %84 = vmatpush1.msra.mxu0 %v46
  %85 = vmatprep.subr.mxu0 0.0
  %86 = vmatpush1.msra.mxu0 %v47
  %87 = vmatprep.subr.mxu0 0.0
  %88 = vmatpush1.msra.mxu0 0.0
  %89 = vmatprep.subr.mxu0 0.0
  %90 = vmatpush1.msra.mxu0 0.0
  %91 = vmatprep.subr.mxu0 0.0
  %92 = vmatpush1.msra.mxu0 0.0
  %93 = vmatprep.subr.mxu0 0.0
  %94 = vmatpush1.msra.mxu0 0.0
  %95 = vmatprep.subr.mxu0 0.0
  %96 = vmatpush1.msra.mxu0 0.0
  %97 = vmatprep.subr.mxu0 0.0
  %98 = vmatpush1.msra.mxu0 0.0
  %99 = vmatprep.subr.mxu0 0.0
  %100 = vmatpush1.msra.mxu0 0.0
  %101 = vmatprep.subr.mxu0 0.0
  %102 = vmatpush1.msra.mxu0 0.0
  %103 = vmatprep.subr.mxu0 0.0
  %104 = vmatpush1.msra.mxu0 0.0
  %105 = vmatprep.subr.mxu0 0.0
  %106 = vmatpush1.msra.mxu0 0.0
  %107 = vmatprep.subr.mxu0 0.0
  %108 = vmatpush1.msra.mxu0 0.0
  %109 = vmatprep.subr.mxu0 0.0
  %110 = vmatpush1.msra.mxu0 0.0
  %111 = vmatprep.subr.mxu0 0.0
  %112 = vmatpush1.msra.mxu0 0.0
  %113 = vmatprep.subr.mxu0 0.0
  %114 = vmatpush1.msra.mxu0 0.0
  %115 = vmatprep.subr.mxu0 0.0
  %116 = vmatpush1.msra.mxu0 0.0
  %117 = vmatprep.subr.mxu0 0.0
  %118 = vmatpush1.msra.mxu0 0.0
  %119 = vmatprep.mubr.f32.mxu0 0.0
  %120 = vmatmul.mubr.f32.gmra.mrb[0].mxu0 %v16
  %v121 = vpop.f32.mrb[0].mxu0
  %v122 = vadd.f32 %v53, %v121
  %v123 = vpop.f32.mrb[0].mxu0
  %124 = vmatprep.mubr.f32.mxu0 0.0
  %125 = vmatmul.mubr.f32.gmra.mrb[0].mxu0 %v17
  %v126 = vpop.f32.mrb[0].mxu0
  %v127 = vadd.f32 %v53, %v126
  %v128 = vpop.f32.mrb[0].mxu0
  %129 = vmatprep.mubr.f32.mxu0 0.0
  %130 = vmatmul.mubr.f32.gmra.mrb[0].mxu0 %v18
  %v131 = vpop.f32.mrb[0].mxu0
  %v132 = vadd.f32 %v53, %v131
  %v133 = vpop.f32.mrb[0].mxu0
  %134 = vmatprep.mubr.f32.mxu0 0.0
  %135 = vmatmul.mubr.f32.gmra.mrb[0].mxu0 %v19
  %v136 = vpop.f32.mrb[0].mxu0
  %v137 = vadd.f32 %v53, %v136
  %v138 = vpop.f32.mrb[0].mxu0
  %139 = vmatprep.mubr.f32.mxu0 0.0
  %140 = vmatmul.mubr.f32.gmra.mrb[0].mxu0 %v20
  %v141 = vpop.f32.mrb[0].mxu0
  %v142 = vadd.f32 %v53, %v141
  %v143 = vpop.f32.mrb[0].mxu0
  %144 = vmatprep.mubr.f32.mxu0 0.0
  %145 = vmatmul.mubr.f32.gmra.mrb[0].mxu0 %v21
  %v146 = vpop.f32.mrb[0].mxu0
  %v147 = vadd.f32 %v53, %v146
  %v148 = vpop.f32.mrb[0].mxu0
  %149 = vmatprep.mubr.f32.mxu0 0.0
  %150 = vmatmul.mubr.f32.gmra.mrb[0].mxu0 %v22
  %v151 = vpop.f32.mrb[0].mxu0
  %v152 = vadd.f32 %v53, %v151
  %v153 = vpop.f32.mrb[0].mxu0
  %154 = vmatprep.mubr.f32.mxu0 0.0
  %155 = vmatmul.mubr.f32.gmra.mrb[0].mxu0 %v23
  %v156 = vpop.f32.mrb[0].mxu0
  %v157 = vadd.f32 %v53, %v156
  %v158 = vpop.f32.mrb[0].mxu0
  %159 = vmatprep.mubr.f32.mxu0 0.0
  %160 = vmatmul.mubr.f32.gmra.mrb[0].mxu0 %v24
  %v161 = vpop.f32.mrb[0].mxu0
  %v162 = vadd.f32 %v53, %v161
  %v163 = vpop.f32.mrb[0].mxu0
  %164 = vmatprep.mubr.f32.mxu0 0.0
  %165 = vmatmul.mubr.f32.gmra.mrb[0].mxu0 %v25
  %v166 = vpop.f32.mrb[0].mxu0
  %v167 = vadd.f32 %v53, %v166
  %v168 = vpop.f32.mrb[0].mxu0
  %169 = vmatprep.mubr.f32.mxu0 0.0
  %170 = vmatmul.mubr.f32.gmra.mrb[0].mxu0 %v26
  %v171 = vpop.f32.mrb[0].mxu0
  %v172 = vadd.f32 %v53, %v171
  %v173 = vpop.f32.mrb[0].mxu0
  %174 = vmatprep.mubr.f32.mxu0 0.0
  %175 = vmatmul.mubr.f32.gmra.mrb[0].mxu0 %v27
  %v176 = vpop.f32.mrb[0].mxu0
  %v177 = vadd.f32 %v53, %v176
  %v178 = vpop.f32.mrb[0].mxu0
  %179 = vmatprep.mubr.f32.mxu0 0.0
  %180 = vmatmul.mubr.f32.gmra.mrb[0].mxu0 %v28
  %v181 = vpop.f32.mrb[0].mxu0
  %v182 = vadd.f32 %v53, %v181
  %v183 = vpop.f32.mrb[0].mxu0
  %184 = vmatprep.mubr.f32.mxu0 0.0
  %185 = vmatmul.mubr.f32.gmra.mrb[0].mxu0 %v29
  %v186 = vpop.f32.mrb[0].mxu0
  %v187 = vadd.f32 %v53, %v186
  %v188 = vpop.f32.mrb[0].mxu0
  %189 = vmatprep.mubr.f32.mxu0 0.0
  %190 = vmatmul.mubr.f32.gmra.mrb[0].mxu0 %v30
  %v191 = vpop.f32.mrb[0].mxu0
  %v192 = vadd.f32 %v53, %v191
  %v193 = vpop.f32.mrb[0].mxu0
  %194 = vmatprep.mubr.f32.mxu0 0.0
  %195 = vmatmul.mubr.f32.gmra.mrb[0].mxu0 %v31
  %v196 = vpop.f32.mrb[0].mxu0
  %v197 = vadd.f32 %v53, %v196
  %v198 = vpop.f32.mrb[0].mxu0
  %199 = vdwg.mxu0
  %v200 = vmax.f32 %v122, 0.0
  %v201 = vmax.f32 %v127, 0.0
  %v202 = vmax.f32 %v132, 0.0
  %v203 = vmax.f32 %v137, 0.0
  %v204 = vmax.f32 %v142, 0.0
  %v205 = vmax.f32 %v147, 0.0
  %v206 = vmax.f32 %v152, 0.0
  %v207 = vmax.f32 %v157, 0.0
  %v208 = vmax.f32 %v162, 0.0
  %v209 = vmax.f32 %v167, 0.0
  %v210 = vmax.f32 %v172, 0.0
  %v211 = vmax.f32 %v177, 0.0
  %v212 = vmax.f32 %v182, 0.0
  %v213 = vmax.f32 %v187, 0.0
  %v214 = vmax.f32 %v192, 0.0
  %v215 = vmax.f32 %v197, 0.0
  %v216 = vsub.f32 0.0, %v200
  %v217 = vsub.f32 0.0, %v201
  %v218 = vsub.f32 0.0, %v202
  %v219 = vsub.f32 0.0, %v203
  %v220 = vsub.f32 0.0, %v204
  %v221 = vsub.f32 0.0, %v205
  %v222 = vsub.f32 0.0, %v206
  %v223 = vsub.f32 0.0, %v207
  %v224 = vsub.f32 0.0, %v208
  %v225 = vsub.f32 0.0, %v209
  %v226 = vsub.f32 0.0, %v210
  %v227 = vsub.f32 0.0, %v211
  %v228 = vsub.f32 0.0, %v212
  %v229 = vsub.f32 0.0, %v213
  %v230 = vsub.f32 0.0, %v214
  %v231 = vsub.f32 0.0, %v215
  %v232 = vmul.f32 %v216, 1.442695
  %v233 = vpow.pop %v232
  %v234 = vmul.f32 %v217, 1.442695
  %v235 = vpow.pop %v234
  %v236 = vmul.f32 %v218, 1.442695
  %v237 = vpow.pop %v236
  %v238 = vmul.f32 %v219, 1.442695
  %v239 = vpow.pop %v238
  %v240 = vmul.f32 %v220, 1.442695
  %v241 = vpow.pop %v240
  %v242 = vmul.f32 %v221, 1.442695
  %v243 = vpow.pop %v242
  %v244 = vmul.f32 %v222, 1.442695
  %v245 = vpow.pop %v244
  %v246 = vmul.f32 %v223, 1.442695
  %v247 = vpow.pop %v246
  %v248 = vmul.f32 %v224, 1.442695
  %v249 = vpow.pop %v248
  %v250 = vmul.f32 %v225, 1.442695
  %v251 = vpow.pop %v250
  %v252 = vmul.f32 %v226, 1.442695
  %v253 = vpow.pop %v252
  %v254 = vmul.f32 %v227, 1.442695
  %v255 = vpow.pop %v254
  %v256 = vmul.f32 %v228, 1.442695
  %v257 = vpow.pop %v256
  %v258 = vmul.f32 %v229, 1.442695
  %v259 = vpow.pop %v258
  %v260 = vmul.f32 %v230, 1.442695
  %v261 = vpow.pop %v260
  %v262 = vmul.f32 %v231, 1.442695
  %v263 = vpow.pop %v262
  %v264 = vmul.f32 %v200, %v233
  %v265 = vmul.f32 %v201, %v235
  %v266 = vmul.f32 %v202, %v237
  %v267 = vmul.f32 %v203, %v239
  %v268 = vmul.f32 %v204, %v241
  %v269 = vmul.f32 %v205, %v243
  %v270 = vmul.f32 %v206, %v245
  %v271 = vmul.f32 %v207, %v247
  %v272 = vmul.f32 %v208, %v249
  %v273 = vmul.f32 %v209, %v251
  %v274 = vmul.f32 %v210, %v253
  %v275 = vmul.f32 %v211, %v255
  %v276 = vmul.f32 %v212, %v257
  %v277 = vmul.f32 %v213, %v259
  %v278 = vmul.f32 %v214, %v261
  %v279 = vmul.f32 %v215, %v263
  %v280 = vpack.c.bf16 %v265, %v264
  %v281 = vpack.c.bf16 %v267, %v266
  %v282 = vpack.c.bf16 %v269, %v268
  %v283 = vpack.c.bf16 %v271, %v270
  %v284 = vpack.c.bf16 %v273, %v272
  %v285 = vpack.c.bf16 %v275, %v274
  %v286 = vpack.c.bf16 %v277, %v276
  %v287 = vpack.c.bf16 %v279, %v278
  %v296 = vunpack.c.l.b16 %v280
  %v297 = vunpack.c.h.b16 %v280
  %v298 = vunpack.c.l.b16 %v281
  %v299 = vunpack.c.h.b16 %v281
  %v300 = vunpack.c.l.b16 %v282
  %v301 = vunpack.c.h.b16 %v282
  %v302 = vunpack.c.l.b16 %v283
  %v303 = vunpack.c.h.b16 %v283
  %v304 = vunpack.c.l.b16 %v284
  %v305 = vunpack.c.h.b16 %v284
  %v306 = vunpack.c.l.b16 %v285
  %v307 = vunpack.c.h.b16 %v285
  %v308 = vunpack.c.l.b16 %v286
  %v309 = vunpack.c.h.b16 %v286
  %v310 = vunpack.c.l.b16 %v287
  %v311 = vunpack.c.h.b16 %v287
  %v312 = vpack.c.b16 %v296, %v296
  %v313 = vpack.c.b16 %v297, %v297
  %v314 = vpack.c.b16 %v298, %v298
  %v315 = vpack.c.b16 %v299, %v299
  %v316 = vpack.c.b16 %v300, %v300
  %v317 = vpack.c.b16 %v301, %v301
  %v318 = vpack.c.b16 %v302, %v302
  %v319 = vpack.c.b16 %v303, %v303
  %v320 = vpack.c.b16 %v304, %v304
  %v321 = vpack.c.b16 %v305, %v305
  %v322 = vpack.c.b16 %v306, %v306
  %v323 = vpack.c.b16 %v307, %v307
  %v324 = vpack.c.b16 %v308, %v308
  %v325 = vpack.c.b16 %v309, %v309
  %v326 = vpack.c.b16 %v310, %v310
  %v327 = vpack.c.b16 %v311, %v311
  %344 = vst [vmem:[%s3] sm:$0xf] %v312
  %345 = vst [vmem:[%s3 + $0x4] sm:$0xf] %v313
  %346 = vst [vmem:[%s3 + $0x8] sm:$0xf] %v314
  %347 = vst [vmem:[%s3 + $0xc] sm:$0xf] %v315
  %348 = vst [vmem:[%s3 + $0x10] sm:$0xf] %v316
  %349 = vst [vmem:[%s3 + $0x14] sm:$0xf] %v317
  %350 = vst [vmem:[%s3 + $0x18] sm:$0xf] %v318
  %351 = vst [vmem:[%s3 + $0x1c] sm:$0xf] %v319
  %352 = vst [vmem:[%s3 + $0x20] sm:$0xf] %v320
  %353 = vst [vmem:[%s3 + $0x24] sm:$0xf] %v321
  %354 = vst [vmem:[%s3 + $0x28] sm:$0xf] %v322
  %355 = vst [vmem:[%s3 + $0x2c] sm:$0xf] %v323
  %356 = vst [vmem:[%s3 + $0x30] sm:$0xf] %v324
  %357 = vst [vmem:[%s3 + $0x34] sm:$0xf] %v325
  %358 = vst [vmem:[%s3 + $0x38] sm:$0xf] %v326
  %359 = vst [vmem:[%s3 + $0x3c] sm:$0xf] %v327
  %v360 = vmul.f32 %v264, %v233
  %v361 = vmul.f32 %v265, %v235
  %v362 = vmul.f32 %v266, %v237
  %v363 = vmul.f32 %v267, %v239
  %v364 = vmul.f32 %v268, %v241
  %v365 = vmul.f32 %v269, %v243
  %v366 = vmul.f32 %v270, %v245
  %v367 = vmul.f32 %v271, %v247
  %v368 = vmul.f32 %v272, %v249
  %v369 = vmul.f32 %v273, %v251
  %v370 = vmul.f32 %v274, %v253
  %v371 = vmul.f32 %v275, %v255
  %v372 = vmul.f32 %v276, %v257
  %v373 = vmul.f32 %v277, %v259
  %v374 = vmul.f32 %v278, %v261
  %v375 = vmul.f32 %v279, %v263
  %v376 = vpack.c.bf16 %v361, %v360
  %v377 = vpack.c.bf16 %v363, %v362
  %v378 = vpack.c.bf16 %v365, %v364
  %v379 = vpack.c.bf16 %v367, %v366
  %v380 = vpack.c.bf16 %v369, %v368
  %v381 = vpack.c.bf16 %v371, %v370
  %v382 = vpack.c.bf16 %v373, %v372
  %v383 = vpack.c.bf16 %v375, %v374
  %v392 = vunpack.c.l.b16 %v376
  %v393 = vunpack.c.h.b16 %v376
  %v394 = vunpack.c.l.b16 %v377
  %v395 = vunpack.c.h.b16 %v377
  %v396 = vunpack.c.l.b16 %v378
  %v397 = vunpack.c.h.b16 %v378
  %v398 = vunpack.c.l.b16 %v379
  %v399 = vunpack.c.h.b16 %v379
  %v400 = vunpack.c.l.b16 %v380
  %v401 = vunpack.c.h.b16 %v380
  %v402 = vunpack.c.l.b16 %v381
  %v403 = vunpack.c.h.b16 %v381
  %v404 = vunpack.c.l.b16 %v382
  %v405 = vunpack.c.h.b16 %v382
  %v406 = vunpack.c.l.b16 %v383
  %v407 = vunpack.c.h.b16 %v383
  %v408 = vpack.c.b16 %v392, %v392
  %v409 = vpack.c.b16 %v393, %v393
  %v410 = vpack.c.b16 %v394, %v394
  %v411 = vpack.c.b16 %v395, %v395
  %v412 = vpack.c.b16 %v396, %v396
  %v413 = vpack.c.b16 %v397, %v397
  %v414 = vpack.c.b16 %v398, %v398
  %v415 = vpack.c.b16 %v399, %v399
  %v416 = vpack.c.b16 %v400, %v400
  %v417 = vpack.c.b16 %v401, %v401
  %v418 = vpack.c.b16 %v402, %v402
  %v419 = vpack.c.b16 %v403, %v403
  %v420 = vpack.c.b16 %v404, %v404
  %v421 = vpack.c.b16 %v405, %v405
  %v422 = vpack.c.b16 %v406, %v406
  %v423 = vpack.c.b16 %v407, %v407
  %440 = vst [vmem:[%s4] sm:$0xf] %v408
  %441 = vst [vmem:[%s4 + $0x4] sm:$0xf] %v409
  %442 = vst [vmem:[%s4 + $0x8] sm:$0xf] %v410
  %443 = vst [vmem:[%s4 + $0xc] sm:$0xf] %v411
  %444 = vst [vmem:[%s4 + $0x10] sm:$0xf] %v412
  %445 = vst [vmem:[%s4 + $0x14] sm:$0xf] %v413
  %446 = vst [vmem:[%s4 + $0x18] sm:$0xf] %v414
  %447 = vst [vmem:[%s4 + $0x1c] sm:$0xf] %v415
  %448 = vst [vmem:[%s4 + $0x20] sm:$0xf] %v416
  %449 = vst [vmem:[%s4 + $0x24] sm:$0xf] %v417
  %450 = vst [vmem:[%s4 + $0x28] sm:$0xf] %v418
  %451 = vst [vmem:[%s4 + $0x2c] sm:$0xf] %v419
  %452 = vst [vmem:[%s4 + $0x30] sm:$0xf] %v420
  %453 = vst [vmem:[%s4 + $0x34] sm:$0xf] %v421
  %454 = vst [vmem:[%s4 + $0x38] sm:$0xf] %v422
  %455 = vst [vmem:[%s4 + $0x3c] sm:$0xf] %v423
  // Predicated region
  $region14: #{encoder_forward.4} parent=0 // pred_check
    _
  $region15: #{encoder_forward.4} parent=0 // pred_check_branch
    %457 = sbr.rel (0) target = $region17
  $region16: #{encoder_forward.4} parent=0 // pred_region
    _
  $region17: #{encoder_forward.4} parent=0 // pred_fallthru
    _
  // Predicated region
  $region18: #{encoder_forward.4} parent=0 // pred_check
    _
  $region19: #{encoder_forward.4} parent=0 // pred_check_branch
    %459 = sbr.rel (0) target = $region21
  $region20: #{encoder_forward.4} parent=0 // pred_region
    _
  $region21: #{encoder_forward.4} parent=0 // pred_fallthru
    _
  // Predicated region
  $region22: #{encoder_forward.4} parent=0 // pred_check
    _
  $region23: #{encoder_forward.4} parent=0 // pred_check_branch
    %461 = sbr.rel (0) target = $region25
  $region24: #{encoder_forward.4} parent=0 // pred_region
    _
  $region25: #{encoder_forward.4} parent=0 // pred_fallthru
    _
  // Predicated region
  $region26: #{encoder_forward.4} parent=0 // pred_check
    _
  $region27: #{encoder_forward.4} parent=0 // pred_check_branch
    %463 = sbr.rel (0) target = $region29
  $region28: #{encoder_forward.4} parent=0 // pred_region
    _
  $region29: #{encoder_forward.4} parent=0 // pred_fallthru
    _

// kernel: encoder_forward.6
$region0: #{encoder_forward.6}
  #allocation0 [shape = 'u32[]', space=smem, size = 0x4, offset = 0x4, fixed_abs, tag = 'smem constant byte address 0x4 - core index']
  #allocation1 [shape = 'u32[144,128]{1,0:T(1,128)}', space=vmem, size = 0x12000, scoped, tag = 'internal scratch']
  %s0 = inlined_call_operand.vmem [shape: f32[128,128], index: 0, kind: input, shape index: {}]
  %s1 = inlined_call_operand.vmem [shape: f32[128,128], index: 1, kind: input, shape index: {}]
  %s2 = inlined_call_operand.vmem [shape: f32[128,128], index: 2, kind: input, shape index: {}]
  %s3 = inlined_call_operand.vmem [shape: f32[1,128], index: 3, kind: input, shape index: {}]
  %s4 = inlined_call_operand.vmem [shape: f32[128,128], index: 4, kind: input, shape index: {}]
  %s5 = inlined_call_operand.vmem [shape: f32[1,128], index: 5, kind: input, shape index: {}]
  %s6 = inlined_call_operand.vmem [shape: bf16[128,128], index: 6, kind: output, shape index: {0}]
  %s7 = inlined_call_operand.vmem [shape: bf16[128,128], index: 7, kind: output, shape index: {1}]
  %8 = xla_tuple %s6, %s7
  %s9 = sld [smem:[#allocation0]]
  $region42: #{encoder_forward.6} parent=0
    _
  %s11 = ssub.s32 1, %s9
  %s12 = scalar_select 0, %s11, %s9
  // Predicated region
  $region2: #{encoder_forward.6} parent=0 // pred_check
    _
  $region3: #{encoder_forward.6} parent=0 // pred_check_branch
    %14 = sbr.rel (0) target = $region5
  $region4: #{encoder_forward.6} parent=0 // pred_region
    _
  $region5: #{encoder_forward.6} parent=0 // pred_fallthru
    _
  // Predicated region
  $region6: #{encoder_forward.6} parent=0 // pred_check
    _
  $region7: #{encoder_forward.6} parent=0 // pred_check_branch
    %16 = sbr.rel (0) target = $region9
  $region8: #{encoder_forward.6} parent=0 // pred_region
    _
  $region9: #{encoder_forward.6} parent=0 // pred_fallthru
    _
  // Predicated region
  $region10: #{encoder_forward.6} parent=0 // pred_check
    _
  $region11: #{encoder_forward.6} parent=0 // pred_check_branch
    %18 = sbr.rel (0) target = $region13
  $region12: #{encoder_forward.6} parent=0 // pred_region
    _
  $region13: #{encoder_forward.6} parent=0 // pred_fallthru
    _
  // Predicated region
  $region14: #{encoder_forward.6} parent=0 // pred_check
    _
  $region15: #{encoder_forward.6} parent=0 // pred_check_branch
    %20 = sbr.rel (0) target = $region17
  $region16: #{encoder_forward.6} parent=0 // pred_region
    _
  $region17: #{encoder_forward.6} parent=0 // pred_fallthru
    _
  // Predicated region
  $region18: #{encoder_forward.6} parent=0 // pred_check
    _
  $region19: #{encoder_forward.6} parent=0 // pred_check_branch
    %22 = sbr.rel (0) target = $region21
  $region20: #{encoder_forward.6} parent=0 // pred_region
    _
  $region21: #{encoder_forward.6} parent=0 // pred_fallthru
    _
  // Predicated region
  $region22: #{encoder_forward.6} parent=0 // pred_check
    _
  $region23: #{encoder_forward.6} parent=0 // pred_check_branch
    %24 = sbr.rel (0) target = $region25
  $region24: #{encoder_forward.6} parent=0 // pred_region
    _
  $region25: #{encoder_forward.6} parent=0 // pred_fallthru
    _
  %v25 = vld [vmem:[%s0] sm:$0xff]
  %v26 = vld [vmem:[%s0 + $0x8] sm:$0xff]
  %v27 = vld [vmem:[%s0 + $0x10] sm:$0xff]
  %v28 = vld [vmem:[%s0 + $0x18] sm:$0xff]
  %v29 = vld [vmem:[%s0 + $0x20] sm:$0xff]
  %v30 = vld [vmem:[%s0 + $0x28] sm:$0xff]
  %v31 = vld [vmem:[%s0 + $0x30] sm:$0xff]
  %v32 = vld [vmem:[%s0 + $0x38] sm:$0xff]
  %v33 = vld [vmem:[%s0 + $0x40] sm:$0xff]
  %v34 = vld [vmem:[%s0 + $0x48] sm:$0xff]
  %v35 = vld [vmem:[%s0 + $0x50] sm:$0xff]
  %v36 = vld [vmem:[%s0 + $0x58] sm:$0xff]
  %v37 = vld [vmem:[%s0 + $0x60] sm:$0xff]
  %v38 = vld [vmem:[%s0 + $0x68] sm:$0xff]
  %v39 = vld [vmem:[%s0 + $0x70] sm:$0xff]
  %v40 = vld [vmem:[%s0 + $0x78] sm:$0xff]
  %v41 = vld [vmem:[%s2] sm:$0xff]
  %v42 = vld [vmem:[%s2 + $0x8] sm:$0xff]
  %v43 = vld [vmem:[%s2 + $0x10] sm:$0xff]
  %v44 = vld [vmem:[%s2 + $0x18] sm:$0xff]
  %v45 = vld [vmem:[%s2 + $0x20] sm:$0xff]
  %v46 = vld [vmem:[%s2 + $0x28] sm:$0xff]
  %v47 = vld [vmem:[%s2 + $0x30] sm:$0xff]
  %v48 = vld [vmem:[%s2 + $0x38] sm:$0xff]
  %v49 = vld [vmem:[%s2 + $0x40] sm:$0xff]
  %v50 = vld [vmem:[%s2 + $0x48] sm:$0xff]
  %v51 = vld [vmem:[%s2 + $0x50] sm:$0xff]
  %v52 = vld [vmem:[%s2 + $0x58] sm:$0xff]
  %v53 = vld [vmem:[%s2 + $0x60] sm:$0xff]
  %v54 = vld [vmem:[%s2 + $0x68] sm:$0xff]
  %v55 = vld [vmem:[%s2 + $0x70] sm:$0xff]
  %v56 = vld [vmem:[%s2 + $0x78] sm:$0xff]
  %v57 = vld [vmem:[%s3] sm:$0x1]
  %v59 = vlaneseq
  %v60 = vshrl.u32 %v59, 7
  %v61 = vsub.s32 0, %v60
  %v62 = vrot.slane %v57, %v61
  %64 = vmatprep.subr.mxu0 0.0
  %65 = vmatpush1.msra.mxu0 %v41
  %66 = vmatprep.subr.mxu0 0.0
  %67 = vmatpush1.msra.mxu0 %v42
  %68 = vmatprep.subr.mxu0 0.0
  %69 = vmatpush1.msra.mxu0 %v43
  %70 = vmatprep.subr.mxu0 0.0
  %71 = vmatpush1.msra.mxu0 %v44
  %72 = vmatprep.subr.mxu0 0.0
  %73 = vmatpush1.msra.mxu0 %v45
  %74 = vmatprep.subr.mxu0 0.0
  %75 = vmatpush1.msra.mxu0 %v46
  %76 = vmatprep.subr.mxu0 0.0
  %77 = vmatpush1.msra.mxu0 %v47
  %78 = vmatprep.subr.mxu0 0.0
  %79 = vmatpush1.msra.mxu0 %v48
  %80 = vmatprep.subr.mxu0 0.0
  %81 = vmatpush1.msra.mxu0 %v49
  %82 = vmatprep.subr.mxu0 0.0
  %83 = vmatpush1.msra.mxu0 %v50
  %84 = vmatprep.subr.mxu0 0.0
  %85 = vmatpush1.msra.mxu0 %v51
  %86 = vmatprep.subr.mxu0 0.0
  %87 = vmatpush1.msra.mxu0 %v52
  %88 = vmatprep.subr.mxu0 0.0
  %89 = vmatpush1.msra.mxu0 %v53
  %90 = vmatprep.subr.mxu0 0.0
  %91 = vmatpush1.msra.mxu0 %v54
  %92 = vmatprep.subr.mxu0 0.0
  %93 = vmatpush1.msra.mxu0 %v55
  %94 = vmatprep.subr.mxu0 0.0
  %95 = vmatpush1.msra.mxu0 %v56
  %96 = vmatprep.subr.mxu0 0.0
  %97 = vmatpush1.msra.mxu0 0.0
  %98 = vmatprep.subr.mxu0 0.0
  %99 = vmatpush1.msra.mxu0 0.0
  %100 = vmatprep.subr.mxu0 0.0
  %101 = vmatpush1.msra.mxu0 0.0
  %102 = vmatprep.subr.mxu0 0.0
  %103 = vmatpush1.msra.mxu0 0.0
  %104 = vmatprep.subr.mxu0 0.0
  %105 = vmatpush1.msra.mxu0 0.0
  %106 = vmatprep.subr.mxu0 0.0
  %107 = vmatpush1.msra.mxu0 0.0
  %108 = vmatprep.subr.mxu0 0.0
  %109 = vmatpush1.msra.mxu0 0.0
  %110 = vmatprep.subr.mxu0 0.0
  %111 = vmatpush1.msra.mxu0 0.0
  %112 = vmatprep.subr.mxu0 0.0
  %113 = vmatpush1.msra.mxu0 0.0
  %114 = vmatprep.subr.mxu0 0.0
  %115 = vmatpush1.msra.mxu0 0.0
  %116 = vmatprep.subr.mxu0 0.0
  %117 = vmatpush1.msra.mxu0 0.0
  %118 = vmatprep.subr.mxu0 0.0
  %119 = vmatpush1.msra.mxu0 0.0
  %120 = vmatprep.subr.mxu0 0.0
  %121 = vmatpush1.msra.mxu0 0.0
  %122 = vmatprep.subr.mxu0 0.0
  %123 = vmatpush1.msra.mxu0 0.0
  %124 = vmatprep.subr.mxu0 0.0
  %125 = vmatpush1.msra.mxu0 0.0
  %126 = vmatprep.subr.mxu0 0.0
  %127 = vmatpush1.msra.mxu0 0.0
  %128 = vmatprep.mubr.f32.mxu0 0.0
  %129 = vmatmul.mubr.f32.gmra.mrb[0].mxu0 %v25
  %v130 = vpop.f32.mrb[0].mxu0
  %v131 = vadd.f32 %v62, %v130
  %v132 = vpop.f32.mrb[0].mxu0
  %133 = vmatprep.mubr.f32.mxu0 0.0
  %134 = vmatmul.mubr.f32.gmra.mrb[0].mxu0 %v26
  %v135 = vpop.f32.mrb[0].mxu0
  %v136 = vadd.f32 %v62, %v135
  %v137 = vpop.f32.mrb[0].mxu0
  %138 = vmatprep.mubr.f32.mxu0 0.0
  %139 = vmatmul.mubr.f32.gmra.mrb[0].mxu0 %v27
  %v140 = vpop.f32.mrb[0].mxu0
  %v141 = vadd.f32 %v62, %v140
  %v142 = vpop.f32.mrb[0].mxu0
  %143 = vmatprep.mubr.f32.mxu0 0.0
  %144 = vmatmul.mubr.f32.gmra.mrb[0].mxu0 %v28
  %v145 = vpop.f32.mrb[0].mxu0
  %v146 = vadd.f32 %v62, %v145
  %v147 = vpop.f32.mrb[0].mxu0
  %148 = vmatprep.mubr.f32.mxu0 0.0
  %149 = vmatmul.mubr.f32.gmra.mrb[0].mxu0 %v29
  %v150 = vpop.f32.mrb[0].mxu0
  %v151 = vadd.f32 %v62, %v150
  %v152 = vpop.f32.mrb[0].mxu0
  %153 = vmatprep.mubr.f32.mxu0 0.0
  %154 = vmatmul.mubr.f32.gmra.mrb[0].mxu0 %v30
  %v155 = vpop.f32.mrb[0].mxu0
  %v156 = vadd.f32 %v62, %v155
  %v157 = vpop.f32.mrb[0].mxu0
  %158 = vmatprep.mubr.f32.mxu0 0.0
  %159 = vmatmul.mubr.f32.gmra.mrb[0].mxu0 %v31
  %v160 = vpop.f32.mrb[0].mxu0
  %v161 = vadd.f32 %v62, %v160
  %v162 = vpop.f32.mrb[0].mxu0
  %163 = vmatprep.mubr.f32.mxu0 0.0
  %164 = vmatmul.mubr.f32.gmra.mrb[0].mxu0 %v32
  %v165 = vpop.f32.mrb[0].mxu0
  %v166 = vadd.f32 %v62, %v165
  %v167 = vpop.f32.mrb[0].mxu0
  %168 = vmatprep.mubr.f32.mxu0 0.0
  %169 = vmatmul.mubr.f32.gmra.mrb[0].mxu0 %v33
  %v170 = vpop.f32.mrb[0].mxu0
  %v171 = vadd.f32 %v62, %v170
  %v172 = vpop.f32.mrb[0].mxu0
  %173 = vmatprep.mubr.f32.mxu0 0.0
  %174 = vmatmul.mubr.f32.gmra.mrb[0].mxu0 %v34
  %v175 = vpop.f32.mrb[0].mxu0
  %v176 = vadd.f32 %v62, %v175
  %v177 = vpop.f32.mrb[0].mxu0
  %178 = vmatprep.mubr.f32.mxu0 0.0
  %179 = vmatmul.mubr.f32.gmra.mrb[0].mxu0 %v35
  %v180 = vpop.f32.mrb[0].mxu0
  %v181 = vadd.f32 %v62, %v180
  %v182 = vpop.f32.mrb[0].mxu0
  %183 = vmatprep.mubr.f32.mxu0 0.0
  %184 = vmatmul.mubr.f32.gmra.mrb[0].mxu0 %v36
  %v185 = vpop.f32.mrb[0].mxu0
  %v186 = vadd.f32 %v62, %v185
  %v187 = vpop.f32.mrb[0].mxu0
  %188 = vmatprep.mubr.f32.mxu0 0.0
  %189 = vmatmul.mubr.f32.gmra.mrb[0].mxu0 %v37
  %v190 = vpop.f32.mrb[0].mxu0
  %v191 = vadd.f32 %v62, %v190
  %v192 = vpop.f32.mrb[0].mxu0
  %193 = vmatprep.mubr.f32.mxu0 0.0
  %194 = vmatmul.mubr.f32.gmra.mrb[0].mxu0 %v38
  %v195 = vpop.f32.mrb[0].mxu0
  %v196 = vadd.f32 %v62, %v195
  %v197 = vpop.f32.mrb[0].mxu0
  %198 = vmatprep.mubr.f32.mxu0 0.0
  %199 = vmatmul.mubr.f32.gmra.mrb[0].mxu0 %v39
  %v200 = vpop.f32.mrb[0].mxu0
  %v201 = vadd.f32 %v62, %v200
  %v202 = vpop.f32.mrb[0].mxu0
  %203 = vmatprep.mubr.f32.mxu0 0.0
  %204 = vmatmul.mubr.f32.gmra.mrb[0].mxu0 %v40
  %v205 = vpop.f32.mrb[0].mxu0
  %v206 = vadd.f32 %v62, %v205
  %v207 = vpop.f32.mrb[0].mxu0
  %208 = vdwg.mxu0
  %v209 = vld [vmem:[%s1] sm:$0xff]
  %v210 = vld [vmem:[%s1 + $0x8] sm:$0xff]
  %v211 = vld [vmem:[%s1 + $0x10] sm:$0xff]
  %v212 = vld [vmem:[%s1 + $0x18] sm:$0xff]
  %v213 = vld [vmem:[%s1 + $0x20] sm:$0xff]
  %v214 = vld [vmem:[%s1 + $0x28] sm:$0xff]
  %v215 = vld [vmem:[%s1 + $0x30] sm:$0xff]
  %v216 = vld [vmem:[%s1 + $0x38] sm:$0xff]
  %v217 = vld [vmem:[%s1 + $0x40] sm:$0xff]
  %v218 = vld [vmem:[%s1 + $0x48] sm:$0xff]
  %v219 = vld [vmem:[%s1 + $0x50] sm:$0xff]
  %v220 = vld [vmem:[%s1 + $0x58] sm:$0xff]
  %v221 = vld [vmem:[%s1 + $0x60] sm:$0xff]
  %v222 = vld [vmem:[%s1 + $0x68] sm:$0xff]
  %v223 = vld [vmem:[%s1 + $0x70] sm:$0xff]
  %v224 = vld [vmem:[%s1 + $0x78] sm:$0xff]
  %v225 = vld [vmem:[%s4] sm:$0xff]
  %v226 = vld [vmem:[%s4 + $0x8] sm:$0xff]
  %v227 = vld [vmem:[%s4 + $0x10] sm:$0xff]
  %v228 = vld [vmem:[%s4 + $0x18] sm:$0xff]
  %v229 = vld [vmem:[%s4 + $0x20] sm:$0xff]
  %v230 = vld [vmem:[%s4 + $0x28] sm:$0xff]
  %v231 = vld [vmem:[%s4 + $0x30] sm:$0xff]
  %v232 = vld [vmem:[%s4 + $0x38] sm:$0xff]
  %v233 = vld [vmem:[%s4 + $0x40] sm:$0xff]
  %v234 = vld [vmem:[%s4 + $0x48] sm:$0xff]
  %v235 = vld [vmem:[%s4 + $0x50] sm:$0xff]
  %v236 = vld [vmem:[%s4 + $0x58] sm:$0xff]
  %v237 = vld [vmem:[%s4 + $0x60] sm:$0xff]
  %v238 = vld [vmem:[%s4 + $0x68] sm:$0xff]
  %v239 = vld [vmem:[%s4 + $0x70] sm:$0xff]
  %v240 = vld [vmem:[%s4 + $0x78] sm:$0xff]
  %v241 = vld [vmem:[%s5] sm:$0x1]
  %v243 = vlaneseq
  %v244 = vshrl.u32 %v243, 7
  %v245 = vsub.s32 0, %v244
  %v246 = vrot.slane %v241, %v245
  %248 = vmatprep.subr.mxu0 0.0
  %249 = vmatpush1.msra.mxu0 %v225
  %250 = vmatprep.subr.mxu0 0.0
  %251 = vmatpush1.msra.mxu0 %v226
  %252 = vmatprep.subr.mxu0 0.0
  %253 = vmatpush1.msra.mxu0 %v227
  %254 = vmatprep.subr.mxu0 0.0
  %255 = vmatpush1.msra.mxu0 %v228
  %256 = vmatprep.subr.mxu0 0.0
  %257 = vmatpush1.msra.mxu0 %v229
  %258 = vmatprep.subr.mxu0 0.0
  %259 = vmatpush1.msra.mxu0 %v230
  %260 = vmatprep.subr.mxu0 0.0
  %261 = vmatpush1.msra.mxu0 %v231
  %262 = vmatprep.subr.mxu0 0.0
  %263 = vmatpush1.msra.mxu0 %v232
  %264 = vmatprep.subr.mxu0 0.0
  %265 = vmatpush1.msra.mxu0 %v233
  %266 = vmatprep.subr.mxu0 0.0
  %267 = vmatpush1.msra.mxu0 %v234
  %268 = vmatprep.subr.mxu0 0.0
  %269 = vmatpush1.msra.mxu0 %v235
  %270 = vmatprep.subr.mxu0 0.0
  %271 = vmatpush1.msra.mxu0 %v236
  %272 = vmatprep.subr.mxu0 0.0
  %273 = vmatpush1.msra.mxu0 %v237
  %274 = vmatprep.subr.mxu0 0.0
  %275 = vmatpush1.msra.mxu0 %v238
  %276 = vmatprep.subr.mxu0 0.0
  %277 = vmatpush1.msra.mxu0 %v239
  %278 = vmatprep.subr.mxu0 0.0
  %279 = vmatpush1.msra.mxu0 %v240
  %280 = vmatprep.subr.mxu0 0.0
  %281 = vmatpush1.msra.mxu0 0.0
  %282 = vmatprep.subr.mxu0 0.0
  %283 = vmatpush1.msra.mxu0 0.0
  %284 = vmatprep.subr.mxu0 0.0
  %285 = vmatpush1.msra.mxu0 0.0
  %286 = vmatprep.subr.mxu0 0.0
  %287 = vmatpush1.msra.mxu0 0.0
  %288 = vmatprep.subr.mxu0 0.0
  %289 = vmatpush1.msra.mxu0 0.0
  %290 = vmatprep.subr.mxu0 0.0
  %291 = vmatpush1.msra.mxu0 0.0
  %292 = vmatprep.subr.mxu0 0.0
  %293 = vmatpush1.msra.mxu0 0.0
  %294 = vmatprep.subr.mxu0 0.0
  %295 = vmatpush1.msra.mxu0 0.0
  %296 = vmatprep.subr.mxu0 0.0
  %297 = vmatpush1.msra.mxu0 0.0
  %298 = vmatprep.subr.mxu0 0.0
  %299 = vmatpush1.msra.mxu0 0.0
  %300 = vmatprep.subr.mxu0 0.0
  %301 = vmatpush1.msra.mxu0 0.0
  %302 = vmatprep.subr.mxu0 0.0
  %303 = vmatpush1.msra.mxu0 0.0
  %304 = vmatprep.subr.mxu0 0.0
  %305 = vmatpush1.msra.mxu0 0.0
  %306 = vmatprep.subr.mxu0 0.0
  %307 = vmatpush1.msra.mxu0 0.0
  %308 = vmatprep.subr.mxu0 0.0
  %309 = vmatpush1.msra.mxu0 0.0
  %310 = vmatprep.subr.mxu0 0.0
  %311 = vmatpush1.msra.mxu0 0.0
  %312 = vmatprep.mubr.f32.mxu0 0.0
  %313 = vmatmul.mubr.f32.gmra.mrb[0].mxu0 %v209
  %v314 = vpop.f32.mrb[0].mxu0
  %v315 = vadd.f32 %v246, %v314
  %v316 = vpop.f32.mrb[0].mxu0
  %317 = vmatprep.mubr.f32.mxu0 0.0
  %318 = vmatmul.mubr.f32.gmra.mrb[0].mxu0 %v210
  %v319 = vpop.f32.mrb[0].mxu0
  %v320 = vadd.f32 %v246, %v319
  %v321 = vpop.f32.mrb[0].mxu0
  %322 = vmatprep.mubr.f32.mxu0 0.0
  %323 = vmatmul.mubr.f32.gmra.mrb[0].mxu0 %v211
  %v324 = vpop.f32.mrb[0].mxu0
  %v325 = vadd.f32 %v246, %v324
  %v326 = vpop.f32.mrb[0].mxu0
  %327 = vmatprep.mubr.f32.mxu0 0.0
  %328 = vmatmul.mubr.f32.gmra.mrb[0].mxu0 %v212
  %v329 = vpop.f32.mrb[0].mxu0
  %v330 = vadd.f32 %v246, %v329
  %v331 = vpop.f32.mrb[0].mxu0
  %332 = vmatprep.mubr.f32.mxu0 0.0
  %333 = vmatmul.mubr.f32.gmra.mrb[0].mxu0 %v213
  %v334 = vpop.f32.mrb[0].mxu0
  %v335 = vadd.f32 %v246, %v334
  %v336 = vpop.f32.mrb[0].mxu0
  %337 = vmatprep.mubr.f32.mxu0 0.0
  %338 = vmatmul.mubr.f32.gmra.mrb[0].mxu0 %v214
  %v339 = vpop.f32.mrb[0].mxu0
  %v340 = vadd.f32 %v246, %v339
  %v341 = vpop.f32.mrb[0].mxu0
  %342 = vmatprep.mubr.f32.mxu0 0.0
  %343 = vmatmul.mubr.f32.gmra.mrb[0].mxu0 %v215
  %v344 = vpop.f32.mrb[0].mxu0
  %v345 = vadd.f32 %v246, %v344
  %v346 = vpop.f32.mrb[0].mxu0
  %347 = vmatprep.mubr.f32.mxu0 0.0
  %348 = vmatmul.mubr.f32.gmra.mrb[0].mxu0 %v216
  %v349 = vpop.f32.mrb[0].mxu0
  %v350 = vadd.f32 %v246, %v349
  %v351 = vpop.f32.mrb[0].mxu0
  %352 = vmatprep.mubr.f32.mxu0 0.0
  %353 = vmatmul.mubr.f32.gmra.mrb[0].mxu0 %v217
  %v354 = vpop.f32.mrb[0].mxu0
  %v355 = vadd.f32 %v246, %v354
  %v356 = vpop.f32.mrb[0].mxu0
  %357 = vmatprep.mubr.f32.mxu0 0.0
  %358 = vmatmul.mubr.f32.gmra.mrb[0].mxu0 %v218
  %v359 = vpop.f32.mrb[0].mxu0
  %v360 = vadd.f32 %v246, %v359
  %v361 = vpop.f32.mrb[0].mxu0
  %362 = vmatprep.mubr.f32.mxu0 0.0
  %363 = vmatmul.mubr.f32.gmra.mrb[0].mxu0 %v219
  %v364 = vpop.f32.mrb[0].mxu0
  %v365 = vadd.f32 %v246, %v364
  %v366 = vpop.f32.mrb[0].mxu0
  %367 = vmatprep.mubr.f32.mxu0 0.0
  %368 = vmatmul.mubr.f32.gmra.mrb[0].mxu0 %v220
  %v369 = vpop.f32.mrb[0].mxu0
  %v370 = vadd.f32 %v246, %v369
  %v371 = vpop.f32.mrb[0].mxu0
  %372 = vmatprep.mubr.f32.mxu0 0.0
  %373 = vmatmul.mubr.f32.gmra.mrb[0].mxu0 %v221
  %v374 = vpop.f32.mrb[0].mxu0
  %v375 = vadd.f32 %v246, %v374
  %v376 = vpop.f32.mrb[0].mxu0
  %377 = vmatprep.mubr.f32.mxu0 0.0
  %378 = vmatmul.mubr.f32.gmra.mrb[0].mxu0 %v222
  %v379 = vpop.f32.mrb[0].mxu0
  %v380 = vadd.f32 %v246, %v379
  %v381 = vpop.f32.mrb[0].mxu0
  %382 = vmatprep.mubr.f32.mxu0 0.0
  %383 = vmatmul.mubr.f32.gmra.mrb[0].mxu0 %v223
  %v384 = vpop.f32.mrb[0].mxu0
  %v385 = vadd.f32 %v246, %v384
  %v386 = vpop.f32.mrb[0].mxu0
  %387 = vmatprep.mubr.f32.mxu0 0.0
  %388 = vmatmul.mubr.f32.gmra.mrb[0].mxu0 %v224
  %v389 = vpop.f32.mrb[0].mxu0
  %v390 = vadd.f32 %v246, %v389
  %v391 = vpop.f32.mrb[0].mxu0
  %392 = vdwg.mxu0
  %v393 = vmax.f32 %v131, 0.0
  %v394 = vmax.f32 %v136, 0.0
  %v395 = vmax.f32 %v141, 0.0
  %v396 = vmax.f32 %v146, 0.0
  %v397 = vmax.f32 %v151, 0.0
  %v398 = vmax.f32 %v156, 0.0
  %v399 = vmax.f32 %v161, 0.0
  %v400 = vmax.f32 %v166, 0.0
  %v401 = vmax.f32 %v171, 0.0
  %v402 = vmax.f32 %v176, 0.0
  %v403 = vmax.f32 %v181, 0.0
  %v404 = vmax.f32 %v186, 0.0
  %v405 = vmax.f32 %v191, 0.0
  %v406 = vmax.f32 %v196, 0.0
  %v407 = vmax.f32 %v201, 0.0
  %v408 = vmax.f32 %v206, 0.0
  %v409 = vmax.f32 %v315, 0.0
  %v410 = vmax.f32 %v320, 0.0
  %v411 = vmax.f32 %v325, 0.0
  %v412 = vmax.f32 %v330, 0.0
  %v413 = vmax.f32 %v335, 0.0
  %v414 = vmax.f32 %v340, 0.0
  %v415 = vmax.f32 %v345, 0.0
  %v416 = vmax.f32 %v350, 0.0
  %v417 = vmax.f32 %v355, 0.0
  %v418 = vmax.f32 %v360, 0.0
  %v419 = vmax.f32 %v365, 0.0
  %v420 = vmax.f32 %v370, 0.0
  %v421 = vmax.f32 %v375, 0.0
  %v422 = vmax.f32 %v380, 0.0
  %v423 = vmax.f32 %v385, 0.0
  %v424 = vmax.f32 %v390, 0.0
  %v425 = vsub.f32 0.0, %v409
  %v426 = vsub.f32 0.0, %v410
  %v427 = vsub.f32 0.0, %v411
  %v428 = vsub.f32 0.0, %v412
  %v429 = vsub.f32 0.0, %v413
  %v430 = vsub.f32 0.0, %v414
  %v431 = vsub.f32 0.0, %v415
  %v432 = vsub.f32 0.0, %v416
  %v433 = vsub.f32 0.0, %v417
  %v434 = vsub.f32 0.0, %v418
  %v435 = vsub.f32 0.0, %v419
  %v436 = vsub.f32 0.0, %v420
  %v437 = vsub.f32 0.0, %v421
  %v438 = vsub.f32 0.0, %v422
  %v439 = vsub.f32 0.0, %v423
  %v440 = vsub.f32 0.0, %v424
  %v441 = vmul.f32 %v425, 1.442695
  %v442 = vpow.pop %v441
  %v443 = vmul.f32 %v426, 1.442695
  %v444 = vpow.pop %v443
  %v445 = vmul.f32 %v427, 1.442695
  %v446 = vpow.pop %v445
  %v447 = vmul.f32 %v428, 1.442695
  %v448 = vpow.pop %v447
  %v449 = vmul.f32 %v429, 1.442695
  %v450 = vpow.pop %v449
  %v451 = vmul.f32 %v430, 1.442695
  %v452 = vpow.pop %v451
  %v453 = vmul.f32 %v431, 1.442695
  %v454 = vpow.pop %v453
  %v455 = vmul.f32 %v432, 1.442695
  %v456 = vpow.pop %v455
  %v457 = vmul.f32 %v433, 1.442695
  %v458 = vpow.pop %v457
  %v459 = vmul.f32 %v434, 1.442695
  %v460 = vpow.pop %v459
  %v461 = vmul.f32 %v435, 1.442695
  %v462 = vpow.pop %v461
  %v463 = vmul.f32 %v436, 1.442695
  %v464 = vpow.pop %v463
  %v465 = vmul.f32 %v437, 1.442695
  %v466 = vpow.pop %v465
  %v467 = vmul.f32 %v438, 1.442695
  %v468 = vpow.pop %v467
  %v469 = vmul.f32 %v439, 1.442695
  %v470 = vpow.pop %v469
  %v471 = vmul.f32 %v440, 1.442695
  %v472 = vpow.pop %v471
  %v473 = vmul.f32 %v393, %v442
  %v474 = vmul.f32 %v394, %v444
  %v475 = vmul.f32 %v395, %v446
  %v476 = vmul.f32 %v396, %v448
  %v477 = vmul.f32 %v397, %v450
  %v478 = vmul.f32 %v398, %v452
  %v479 = vmul.f32 %v399, %v454
  %v480 = vmul.f32 %v400, %v456
  %v481 = vmul.f32 %v401, %v458
  %v482 = vmul.f32 %v402, %v460
  %v483 = vmul.f32 %v403, %v462
  %v484 = vmul.f32 %v404, %v464
  %v485 = vmul.f32 %v405, %v466
  %v486 = vmul.f32 %v406, %v468
  %v487 = vmul.f32 %v407, %v470
  %v488 = vmul.f32 %v408, %v472
  %v489 = vpack.c.bf16 %v474, %v473
  %v490 = vpack.c.bf16 %v476, %v475
  %v491 = vpack.c.bf16 %v478, %v477
  %v492 = vpack.c.bf16 %v480, %v479
  %v493 = vpack.c.bf16 %v482, %v481
  %v494 = vpack.c.bf16 %v484, %v483
  %v495 = vpack.c.bf16 %v486, %v485
  %v496 = vpack.c.bf16 %v488, %v487
  %v505 = vunpack.c.l.b16 %v489
  %v506 = vunpack.c.h.b16 %v489
  %v507 = vunpack.c.l.b16 %v490
  %v508 = vunpack.c.h.b16 %v490
  %v509 = vunpack.c.l.b16 %v491
  %v510 = vunpack.c.h.b16 %v491
  %v511 = vunpack.c.l.b16 %v492
  %v512 = vunpack.c.h.b16 %v492
  %v513 = vunpack.c.l.b16 %v493
  %v514 = vunpack.c.h.b16 %v493
  %v515 = vunpack.c.l.b16 %v494
  %v516 = vunpack.c.h.b16 %v494
  %v517 = vunpack.c.l.b16 %v495
  %v518 = vunpack.c.h.b16 %v495
  %v519 = vunpack.c.l.b16 %v496
  %v520 = vunpack.c.h.b16 %v496
  %v521 = vpack.c.b16 %v505, %v505
  %v522 = vpack.c.b16 %v506, %v506
  %v523 = vpack.c.b16 %v507, %v507
  %v524 = vpack.c.b16 %v508, %v508
  %v525 = vpack.c.b16 %v509, %v509
  %v526 = vpack.c.b16 %v510, %v510
  %v527 = vpack.c.b16 %v511, %v511
  %v528 = vpack.c.b16 %v512, %v512
  %v529 = vpack.c.b16 %v513, %v513
  %v530 = vpack.c.b16 %v514, %v514
  %v531 = vpack.c.b16 %v515, %v515
  %v532 = vpack.c.b16 %v516, %v516
  %v533 = vpack.c.b16 %v517, %v517
  %v534 = vpack.c.b16 %v518, %v518
  %v535 = vpack.c.b16 %v519, %v519
  %v536 = vpack.c.b16 %v520, %v520
  %553 = vst [vmem:[%s6] sm:$0xf] %v521
  %554 = vst [vmem:[%s6 + $0x4] sm:$0xf] %v522
  %555 = vst [vmem:[%s6 + $0x8] sm:$0xf] %v523
  %556 = vst [vmem:[%s6 + $0xc] sm:$0xf] %v524
  %557 = vst [vmem:[%s6 + $0x10] sm:$0xf] %v525
  %558 = vst [vmem:[%s6 + $0x14] sm:$0xf] %v526
  %559 = vst [vmem:[%s6 + $0x18] sm:$0xf] %v527
  %560 = vst [vmem:[%s6 + $0x1c] sm:$0xf] %v528
  %561 = vst [vmem:[%s6 + $0x20] sm:$0xf] %v529
  %562 = vst [vmem:[%s6 + $0x24] sm:$0xf] %v530
  %563 = vst [vmem:[%s6 + $0x28] sm:$0xf] %v531
  %564 = vst [vmem:[%s6 + $0x2c] sm:$0xf] %v532
  %565 = vst [vmem:[%s6 + $0x30] sm:$0xf] %v533
  %566 = vst [vmem:[%s6 + $0x34] sm:$0xf] %v534
  %567 = vst [vmem:[%s6 + $0x38] sm:$0xf] %v535
  %568 = vst [vmem:[%s6 + $0x3c] sm:$0xf] %v536
  %v569 = vmul.f32 %v409, %v442
  %v570 = vmul.f32 %v410, %v444
  %v571 = vmul.f32 %v411, %v446
  %v572 = vmul.f32 %v412, %v448
  %v573 = vmul.f32 %v413, %v450
  %v574 = vmul.f32 %v414, %v452
  %v575 = vmul.f32 %v415, %v454
  %v576 = vmul.f32 %v416, %v456
  %v577 = vmul.f32 %v417, %v458
  %v578 = vmul.f32 %v418, %v460
  %v579 = vmul.f32 %v419, %v462
  %v580 = vmul.f32 %v420, %v464
  %v581 = vmul.f32 %v421, %v466
  %v582 = vmul.f32 %v422, %v468
  %v583 = vmul.f32 %v423, %v470
  %v584 = vmul.f32 %v424, %v472
  %v585 = vmul.f32 %v569, %v442
  %v586 = vmul.f32 %v570, %v444
  %v587 = vmul.f32 %v571, %v446
  %v588 = vmul.f32 %v572, %v448
  %v589 = vmul.f32 %v573, %v450
  %v590 = vmul.f32 %v574, %v452
  %v591 = vmul.f32 %v575, %v454
  %v592 = vmul.f32 %v576, %v456
  %v593 = vmul.f32 %v577, %v458
  %v594 = vmul.f32 %v578, %v460
  %v595 = vmul.f32 %v579, %v462
  %v596 = vmul.f32 %v580, %v464
  %v597 = vmul.f32 %v581, %v466
  %v598 = vmul.f32 %v582, %v468
  %v599 = vmul.f32 %v583, %v470
  %v600 = vmul.f32 %v584, %v472
  %v601 = vpack.c.bf16 %v586, %v585
  %v602 = vpack.c.bf16 %v588, %v587
  %v603 = vpack.c.bf16 %v590, %v589
  %v604 = vpack.c.bf16 %v592, %v591
  %v605 = vpack.c.bf16 %v594, %v593
  %v606 = vpack.c.bf16 %v596, %v595
  %v607 = vpack.c.bf16 %v598, %v597
  %v608 = vpack.c.bf16 %v600, %v599
  %v617 = vunpack.c.l.b16 %v601
  %v618 = vunpack.c.h.b16 %v601
  %v619 = vunpack.c.l.b16 %v602
  %v620 = vunpack.c.h.b16 %v602
  %v621 = vunpack.c.l.b16 %v603
  %v622 = vunpack.c.h.b16 %v603
  %v623 = vunpack.c.l.b16 %v604
  %v624 = vunpack.c.h.b16 %v604
  %v625 = vunpack.c.l.b16 %v605
  %v626 = vunpack.c.h.b16 %v605
  %v627 = vunpack.c.l.b16 %v606
  %v628 = vunpack.c.h.b16 %v606
  %v629 = vunpack.c.l.b16 %v607
  %v630 = vunpack.c.h.b16 %v607
  %v631 = vunpack.c.l.b16 %v608
  %v632 = vunpack.c.h.b16 %v608
  %v633 = vpack.c.b16 %v617, %v617
  %v634 = vpack.c.b16 %v618, %v618
  %v635 = vpack.c.b16 %v619, %v619
  %v636 = vpack.c.b16 %v620, %v620
  %v637 = vpack.c.b16 %v621, %v621
  %v638 = vpack.c.b16 %v622, %v622
  %v639 = vpack.c.b16 %v623, %v623
  %v640 = vpack.c.b16 %v624, %v624
  %v641 = vpack.c.b16 %v625, %v625
  %v642 = vpack.c.b16 %v626, %v626
  %v643 = vpack.c.b16 %v627, %v627
  %v644 = vpack.c.b16 %v628, %v628
  %v645 = vpack.c.b16 %v629, %v629
  %v646 = vpack.c.b16 %v630, %v630
  %v647 = vpack.c.b16 %v631, %v631
  %v648 = vpack.c.b16 %v632, %v632
  %665 = vst [vmem:[%s7] sm:$0xf] %v633
  %666 = vst [vmem:[%s7 + $0x4] sm:$0xf] %v634
  %667 = vst [vmem:[%s7 + $0x8] sm:$0xf] %v635
  %668 = vst [vmem:[%s7 + $0xc] sm:$0xf] %v636
  %669 = vst [vmem:[%s7 + $0x10] sm:$0xf] %v637
  %670 = vst [vmem:[%s7 + $0x14] sm:$0xf] %v638
  %671 = vst [vmem:[%s7 + $0x18] sm:$0xf] %v639
  %672 = vst [vmem:[%s7 + $0x1c] sm:$0xf] %v640
  %673 = vst [vmem:[%s7 + $0x20] sm:$0xf] %v641
  %674 = vst [vmem:[%s7 + $0x24] sm:$0xf] %v642
  %675 = vst [vmem:[%s7 + $0x28] sm:$0xf] %v643
  %676 = vst [vmem:[%s7 + $0x2c] sm:$0xf] %v644
  %677 = vst [vmem:[%s7 + $0x30] sm:$0xf] %v645
  %678 = vst [vmem:[%s7 + $0x34] sm:$0xf] %v646
  %679 = vst [vmem:[%s7 + $0x38] sm:$0xf] %v647
  %680 = vst [vmem:[%s7 + $0x3c] sm:$0xf] %v648
  // Predicated region
  $region26: #{encoder_forward.6} parent=0 // pred_check
    _
  $region27: #{encoder_forward.6} parent=0 // pred_check_branch
    %682 = sbr.rel (0) target = $region29
  $region28: #{encoder_forward.6} parent=0 // pred_region
    _
  $region29: #{encoder_forward.6} parent=0 // pred_fallthru
    _
  // Predicated region
  $region30: #{encoder_forward.6} parent=0 // pred_check
    _
  $region31: #{encoder_forward.6} parent=0 // pred_check_branch
    %684 = sbr.rel (0) target = $region33
  $region32: #{encoder_forward.6} parent=0 // pred_region
    _
  $region33: #{encoder_forward.6} parent=0 // pred_fallthru
    _
  // Predicated region
  $region34: #{encoder_forward.6} parent=0 // pred_check
    _
  $region35: #{encoder_forward.6} parent=0 // pred_check_branch
    %686 = sbr.rel (0) target = $region37
  $region36: #{encoder_forward.6} parent=0 // pred_region
    _
  $region37: #{encoder_forward.6} parent=0 // pred_fallthru
    _
  // Predicated region
  $region38: #{encoder_forward.6} parent=0 // pred_check
    _
  $region39: #{encoder_forward.6} parent=0 // pred_check_branch
    %688 = sbr.rel (0) target = $region41
  $region40: #{encoder_forward.6} parent=0 // pred_region
    _
  $region41: #{encoder_forward.6} parent=0 // pred_fallthru
    _

// kernel: encoder_forward.5
$region0: #{encoder_forward.5}
  #allocation0 [shape = 'u32[]', space=smem, size = 0x4, offset = 0x4, fixed_abs, tag = 'smem constant byte address 0x4 - core index']
  #allocation1 [shape = 'u32[144,128]{1,0:T(1,128)}', space=vmem, size = 0x12000, scoped, tag = 'internal scratch']
  #allocation2 [shape = 'f32[128,128]{1,0:T(8,128)}', space=vmem, size = 0x10000, scoped, tag = 'scratch operand']
  #allocation3 [shape = 'f32[128,128]{1,0:T(8,128)}', space=vmem, size = 0x10000, scoped, tag = 'scratch operand']
  %s0 = inlined_call_operand.vmem [shape: bf16[128,128], index: 0, kind: input, shape index: {}]
  %s1 = inlined_call_operand.vmem [shape: bf16[128,128], index: 1, kind: input, shape index: {}]
  %s2 = inlined_call_operand.vmem [shape: bf16[128,128], index: 2, kind: input, shape index: {}]
  %s3 = inlined_call_operand.vmem [shape: f32[128,128], index: 3, kind: output, shape index: {0}]
  %s4 = inlined_call_operand.vmem [shape: f32[128,128], index: 4, kind: output, shape index: {1}]
  %5 = xla_tuple %s3, %s4
  %s6 = sld [smem:[#allocation0]]
  $region38: #{encoder_forward.5} parent=0
    _
  %s8 = ssub.s32 1, %s6
  %s9 = scalar_select 0, %s8, %s6
  // Predicated region
  $region2: #{encoder_forward.5} parent=0 // pred_check
    _
  $region3: #{encoder_forward.5} parent=0 // pred_check_branch
    %11 = sbr.rel (0) target = $region5
  $region4: #{encoder_forward.5} parent=0 // pred_region
    _
  $region5: #{encoder_forward.5} parent=0 // pred_fallthru
    _
  // Predicated region
  $region6: #{encoder_forward.5} parent=0 // pred_check
    _
  $region7: #{encoder_forward.5} parent=0 // pred_check_branch
    %13 = sbr.rel (0) target = $region9
  $region8: #{encoder_forward.5} parent=0 // pred_region
    _
  $region9: #{encoder_forward.5} parent=0 // pred_fallthru
    _
  // Predicated region
  $region10: #{encoder_forward.5} parent=0 // pred_check
    _
  $region11: #{encoder_forward.5} parent=0 // pred_check_branch
    %15 = sbr.rel (0) target = $region13
  $region12: #{encoder_forward.5} parent=0 // pred_region
    _
  $region13: #{encoder_forward.5} parent=0 // pred_fallthru
    _
  %p17 = scmp.eq.s32.totalorder 0, 0
  // Predicated region
  $region14: #{encoder_forward.5} parent=0 // pred_check
    %p18 = pneg %p17
  $region15: #{encoder_forward.5} parent=0 // pred_check_branch
    %20 = sbr.rel (%p18) target = $region17
  $region16: #{encoder_forward.5} parent=0 // pred_region
    %21 = vst [vmem:[#allocation2] sm:$0xff] 0.0
    %22 = vst [vmem:[#allocation2 + $0x8] sm:$0xff] 0.0
    %23 = vst [vmem:[#allocation2 + $0x10] sm:$0xff] 0.0
    %24 = vst [vmem:[#allocation2 + $0x18] sm:$0xff] 0.0
    %25 = vst [vmem:[#allocation2 + $0x20] sm:$0xff] 0.0
    %26 = vst [vmem:[#allocation2 + $0x28] sm:$0xff] 0.0
    %27 = vst [vmem:[#allocation2 + $0x30] sm:$0xff] 0.0
    %28 = vst [vmem:[#allocation2 + $0x38] sm:$0xff] 0.0
    %29 = vst [vmem:[#allocation2 + $0x40] sm:$0xff] 0.0
    %30 = vst [vmem:[#allocation2 + $0x48] sm:$0xff] 0.0
    %31 = vst [vmem:[#allocation2 + $0x50] sm:$0xff] 0.0
    %32 = vst [vmem:[#allocation2 + $0x58] sm:$0xff] 0.0
    %33 = vst [vmem:[#allocation2 + $0x60] sm:$0xff] 0.0
    %34 = vst [vmem:[#allocation2 + $0x68] sm:$0xff] 0.0
    %35 = vst [vmem:[#allocation2 + $0x70] sm:$0xff] 0.0
    %36 = vst [vmem:[#allocation2 + $0x78] sm:$0xff] 0.0
    %37 = vst [vmem:[#allocation3] sm:$0xff] 0.0
    %38 = vst [vmem:[#allocation3 + $0x8] sm:$0xff] 0.0
    %39 = vst [vmem:[#allocation3 + $0x10] sm:$0xff] 0.0
    %40 = vst [vmem:[#allocation3 + $0x18] sm:$0xff] 0.0
    %41 = vst [vmem:[#allocation3 + $0x20] sm:$0xff] 0.0
    %42 = vst [vmem:[#allocation3 + $0x28] sm:$0xff] 0.0
    %43 = vst [vmem:[#allocation3 + $0x30] sm:$0xff] 0.0
    %44 = vst [vmem:[#allocation3 + $0x38] sm:$0xff] 0.0
    %45 = vst [vmem:[#allocation3 + $0x40] sm:$0xff] 0.0
    %46 = vst [vmem:[#allocation3 + $0x48] sm:$0xff] 0.0
    %47 = vst [vmem:[#allocation3 + $0x50] sm:$0xff] 0.0
    %48 = vst [vmem:[#allocation3 + $0x58] sm:$0xff] 0.0
    %49 = vst [vmem:[#allocation3 + $0x60] sm:$0xff] 0.0
    %50 = vst [vmem:[#allocation3 + $0x68] sm:$0xff] 0.0
    %51 = vst [vmem:[#allocation3 + $0x70] sm:$0xff] 0.0
    %52 = vst [vmem:[#allocation3 + $0x78] sm:$0xff] 0.0
  $region17: #{encoder_forward.5} parent=0 // pred_fallthru
    _
  %v53 = vld [vmem:[%s0] sm:$0xf]
  %v54 = vld [vmem:[%s0 + $0x4] sm:$0xf]
  %v55 = vld [vmem:[%s0 + $0x8] sm:$0xf]
  %v56 = vld [vmem:[%s0 + $0xc] sm:$0xf]
  %v57 = vld [vmem:[%s0 + $0x10] sm:$0xf]
  %v58 = vld [vmem:[%s0 + $0x14] sm:$0xf]
  %v59 = vld [vmem:[%s0 + $0x18] sm:$0xf]
  %v60 = vld [vmem:[%s0 + $0x1c] sm:$0xf]
  %v61 = vld [vmem:[%s0 + $0x20] sm:$0xf]
  %v62 = vld [vmem:[%s0 + $0x24] sm:$0xf]
  %v63 = vld [vmem:[%s0 + $0x28] sm:$0xf]
  %v64 = vld [vmem:[%s0 + $0x2c] sm:$0xf]
  %v65 = vld [vmem:[%s0 + $0x30] sm:$0xf]
  %v66 = vld [vmem:[%s0 + $0x34] sm:$0xf]
  %v67 = vld [vmem:[%s0 + $0x38] sm:$0xf]
  %v68 = vld [vmem:[%s0 + $0x3c] sm:$0xf]
  %v69 = vld [vmem:[#allocation2] sm:$0xff]
  %v70 = vld [vmem:[#allocation2 + $0x8] sm:$0xff]
  %v71 = vld [vmem:[#allocation2 + $0x10] sm:$0xff]
  %v72 = vld [vmem:[#allocation2 + $0x18] sm:$0xff]
  %v73 = vld [vmem:[#allocation2 + $0x20] sm:$0xff]
  %v74 = vld [vmem:[#allocation2 + $0x28] sm:$0xff]
  %v75 = vld [vmem:[#allocation2 + $0x30] sm:$0xff]
  %v76 = vld [vmem:[#allocation2 + $0x38] sm:$0xff]
  %v77 = vld [vmem:[#allocation2 + $0x40] sm:$0xff]
  %v78 = vld [vmem:[#allocation2 + $0x48] sm:$0xff]
  %v79 = vld [vmem:[#allocation2 + $0x50] sm:$0xff]
  %v80 = vld [vmem:[#allocation2 + $0x58] sm:$0xff]
  %v81 = vld [vmem:[#allocation2 + $0x60] sm:$0xff]
  %v82 = vld [vmem:[#allocation2 + $0x68] sm:$0xff]
  %v83 = vld [vmem:[#allocation2 + $0x70] sm:$0xff]
  %v84 = vld [vmem:[#allocation2 + $0x78] sm:$0xff]
  %v85 = vld [vmem:[%s1] sm:$0xf]
  %v86 = vld [vmem:[%s1 + $0x4] sm:$0xf]
  %v87 = vld [vmem:[%s1 + $0x8] sm:$0xf]
  %v88 = vld [vmem:[%s1 + $0xc] sm:$0xf]
  %v89 = vld [vmem:[%s1 + $0x10] sm:$0xf]
  %v90 = vld [vmem:[%s1 + $0x14] sm:$0xf]
  %v91 = vld [vmem:[%s1 + $0x18] sm:$0xf]
  %v92 = vld [vmem:[%s1 + $0x1c] sm:$0xf]
  %v93 = vld [vmem:[%s1 + $0x20] sm:$0xf]
  %v94 = vld [vmem:[%s1 + $0x24] sm:$0xf]
  %v95 = vld [vmem:[%s1 + $0x28] sm:$0xf]
  %v96 = vld [vmem:[%s1 + $0x2c] sm:$0xf]
  %v97 = vld [vmem:[%s1 + $0x30] sm:$0xf]
  %v98 = vld [vmem:[%s1 + $0x34] sm:$0xf]
  %v99 = vld [vmem:[%s1 + $0x38] sm:$0xf]
  %v100 = vld [vmem:[%s1 + $0x3c] sm:$0xf]
  %v117 = vunpack.c.l.b16 %v53
  %v118 = vunpack.c.l.b16 %v54
  %v119 = vunpack.c.l.b16 %v55
  %v120 = vunpack.c.l.b16 %v56
  %v121 = vunpack.c.l.b16 %v57
  %v122 = vunpack.c.l.b16 %v58
  %v123 = vunpack.c.l.b16 %v59
  %v124 = vunpack.c.l.b16 %v60
  %v125 = vunpack.c.l.b16 %v61
  %v126 = vunpack.c.l.b16 %v62
  %v127 = vunpack.c.l.b16 %v63
  %v128 = vunpack.c.l.b16 %v64
  %v129 = vunpack.c.l.b16 %v65
  %v130 = vunpack.c.l.b16 %v66
  %v131 = vunpack.c.l.b16 %v67
  %v132 = vunpack.c.l.b16 %v68
  %v133 = vpack.c.b16 %v118, %v117
  %v134 = vpack.c.b16 %v120, %v119
  %v135 = vpack.c.b16 %v122, %v121
  %v136 = vpack.c.b16 %v124, %v123
  %v137 = vpack.c.b16 %v126, %v125
  %v138 = vpack.c.b16 %v128, %v127
  %v139 = vpack.c.b16 %v130, %v129
  %v140 = vpack.c.b16 %v132, %v131
  %v165 = vunpack.c.l.b16 %v85
  %v166 = vunpack.c.l.b16 %v86
  %v167 = vunpack.c.l.b16 %v87
  %v168 = vunpack.c.l.b16 %v88
  %v169 = vunpack.c.l.b16 %v89
  %v170 = vunpack.c.l.b16 %v90
  %v171 = vunpack.c.l.b16 %v91
  %v172 = vunpack.c.l.b16 %v92
  %v173 = vunpack.c.l.b16 %v93
  %v174 = vunpack.c.l.b16 %v94
  %v175 = vunpack.c.l.b16 %v95
  %v176 = vunpack.c.l.b16 %v96
  %v177 = vunpack.c.l.b16 %v97
  %v178 = vunpack.c.l.b16 %v98
  %v179 = vunpack.c.l.b16 %v99
  %v180 = vunpack.c.l.b16 %v100
  %v181 = vpack.c.b16 %v166, %v165
  %v182 = vpack.c.b16 %v168, %v167
  %v183 = vpack.c.b16 %v170, %v169
  %v184 = vpack.c.b16 %v172, %v171
  %v185 = vpack.c.b16 %v174, %v173
  %v186 = vpack.c.b16 %v176, %v175
  %v187 = vpack.c.b16 %v178, %v177
  %v188 = vpack.c.b16 %v180, %v179
  %197 = vmatprep.subr.bf16.mxu0 0
  %198 = vmatpush1.bf16.msra.mxu0 %v181
  %199 = vmatprep.subr.bf16.mxu0 0
  %200 = vmatpush1.bf16.msra.mxu0 %v182
  %201 = vmatprep.subr.bf16.mxu0 0
  %202 = vmatpush1.bf16.msra.mxu0 %v183
  %203 = vmatprep.subr.bf16.mxu0 0
  %204 = vmatpush1.bf16.msra.mxu0 %v184
  %205 = vmatprep.subr.bf16.mxu0 0
  %206 = vmatpush1.bf16.msra.mxu0 %v185
  %207 = vmatprep.subr.bf16.mxu0 0
  %208 = vmatpush1.bf16.msra.mxu0 %v186
  %209 = vmatprep.subr.bf16.mxu0 0
  %210 = vmatpush1.bf16.msra.mxu0 %v187
  %211 = vmatprep.subr.bf16.mxu0 0
  %212 = vmatpush1.bf16.msra.mxu0 %v188
  %213 = vmatprep.subr.bf16.mxu0 0
  %214 = vmatpush1.bf16.msra.mxu0 0
  %215 = vmatprep.subr.bf16.mxu0 0
  %216 = vmatpush1.bf16.msra.mxu0 0
  %217 = vmatprep.subr.bf16.mxu0 0
  %218 = vmatpush1.bf16.msra.mxu0 0
  %219 = vmatprep.subr.bf16.mxu0 0
  %220 = vmatpush1.bf16.msra.mxu0 0
  %221 = vmatprep.subr.bf16.mxu0 0
  %222 = vmatpush1.bf16.msra.mxu0 0
  %223 = vmatprep.subr.bf16.mxu0 0
  %224 = vmatpush1.bf16.msra.mxu0 0
  %225 = vmatprep.subr.bf16.mxu0 0
  %226 = vmatpush1.bf16.msra.mxu0 0
  %227 = vmatprep.subr.bf16.mxu0 0
  %228 = vmatpush1.bf16.msra.mxu0 0
  %229 = vmatprep.mubr.bf16.mxu0 0
  %230 = vmatmul.mubr.bf16.gmra.mrb[0].mxu0 %v133
  %v231 = vpop.f32.mrb[0].mxu0
  %v232 = vadd.f32 0.0, %v231
  %v233 = vpop.f32.mrb[0].mxu0
  %v234 = vpop.f32.mrb[0].mxu0
  %v235 = vadd.f32 0.0, %v234
  %v236 = vpop.f32.mrb[0].mxu0
  %237 = vmatprep.mubr.bf16.mxu0 0
  %238 = vmatmul.mubr.bf16.gmra.mrb[0].mxu0 %v134
  %v239 = vpop.f32.mrb[0].mxu0
  %v240 = vadd.f32 0.0, %v239
  %v241 = vpop.f32.mrb[0].mxu0
  %v242 = vpop.f32.mrb[0].mxu0
  %v243 = vadd.f32 0.0, %v242
  %v244 = vpop.f32.mrb[0].mxu0
  %245 = vmatprep.mubr.bf16.mxu0 0
  %246 = vmatmul.mubr.bf16.gmra.mrb[0].mxu0 %v135
  %v247 = vpop.f32.mrb[0].mxu0
  %v248 = vadd.f32 0.0, %v247
  %v249 = vpop.f32.mrb[0].mxu0
  %v250 = vpop.f32.mrb[0].mxu0
  %v251 = vadd.f32 0.0, %v250
  %v252 = vpop.f32.mrb[0].mxu0
  %253 = vmatprep.mubr.bf16.mxu0 0
  %254 = vmatmul.mubr.bf16.gmra.mrb[0].mxu0 %v136
  %v255 = vpop.f32.mrb[0].mxu0
  %v256 = vadd.f32 0.0, %v255
  %v257 = vpop.f32.mrb[0].mxu0
  %v258 = vpop.f32.mrb[0].mxu0
  %v259 = vadd.f32 0.0, %v258
  %v260 = vpop.f32.mrb[0].mxu0
  %261 = vmatprep.mubr.bf16.mxu0 0
  %262 = vmatmul.mubr.bf16.gmra.mrb[0].mxu0 %v137
  %v263 = vpop.f32.mrb[0].mxu0
  %v264 = vadd.f32 0.0, %v263
  %v265 = vpop.f32.mrb[0].mxu0
  %v266 = vpop.f32.mrb[0].mxu0
  %v267 = vadd.f32 0.0, %v266
  %v268 = vpop.f32.mrb[0].mxu0
  %269 = vmatprep.mubr.bf16.mxu0 0
  %270 = vmatmul.mubr.bf16.gmra.mrb[0].mxu0 %v138
  %v271 = vpop.f32.mrb[0].mxu0
  %v272 = vadd.f32 0.0, %v271
  %v273 = vpop.f32.mrb[0].mxu0
  %v274 = vpop.f32.mrb[0].mxu0
  %v275 = vadd.f32 0.0, %v274
  %v276 = vpop.f32.mrb[0].mxu0
  %277 = vmatprep.mubr.bf16.mxu0 0
  %278 = vmatmul.mubr.bf16.gmra.mrb[0].mxu0 %v139
  %v279 = vpop.f32.mrb[0].mxu0
  %v280 = vadd.f32 0.0, %v279
  %v281 = vpop.f32.mrb[0].mxu0
  %v282 = vpop.f32.mrb[0].mxu0
  %v283 = vadd.f32 0.0, %v282
  %v284 = vpop.f32.mrb[0].mxu0
  %285 = vmatprep.mubr.bf16.mxu0 0
  %286 = vmatmul.mubr.bf16.gmra.mrb[0].mxu0 %v140
  %v287 = vpop.f32.mrb[0].mxu0
  %v288 = vadd.f32 0.0, %v287
  %v289 = vpop.f32.mrb[0].mxu0
  %v290 = vpop.f32.mrb[0].mxu0
  %v291 = vadd.f32 0.0, %v290
  %v292 = vpop.f32.mrb[0].mxu0
  %293 = vdwg.mxu0
  %v294 = vadd.f32 %v69, %v232
  %v295 = vadd.f32 %v70, %v235
  %v296 = vadd.f32 %v71, %v240
  %v297 = vadd.f32 %v72, %v243
  %v298 = vadd.f32 %v73, %v248
  %v299 = vadd.f32 %v74, %v251
  %v300 = vadd.f32 %v75, %v256
  %v301 = vadd.f32 %v76, %v259
  %v302 = vadd.f32 %v77, %v264
  %v303 = vadd.f32 %v78, %v267
  %v304 = vadd.f32 %v79, %v272
  %v305 = vadd.f32 %v80, %v275
  %v306 = vadd.f32 %v81, %v280
  %v307 = vadd.f32 %v82, %v283
  %v308 = vadd.f32 %v83, %v288
  %v309 = vadd.f32 %v84, %v291
  %310 = vst [vmem:[#allocation2] sm:$0xff] %v294
  %311 = vst [vmem:[#allocation2 + $0x8] sm:$0xff] %v295
  %312 = vst [vmem:[#allocation2 + $0x10] sm:$0xff] %v296
  %313 = vst [vmem:[#allocation2 + $0x18] sm:$0xff] %v297
  %314 = vst [vmem:[#allocation2 + $0x20] sm:$0xff] %v298
  %315 = vst [vmem:[#allocation2 + $0x28] sm:$0xff] %v299
  %316 = vst [vmem:[#allocation2 + $0x30] sm:$0xff] %v300
  %317 = vst [vmem:[#allocation2 + $0x38] sm:$0xff] %v301
  %318 = vst [vmem:[#allocation2 + $0x40] sm:$0xff] %v302
  %319 = vst [vmem:[#allocation2 + $0x48] sm:$0xff] %v303
  %320 = vst [vmem:[#allocation2 + $0x50] sm:$0xff] %v304
  %321 = vst [vmem:[#allocation2 + $0x58] sm:$0xff] %v305
  %322 = vst [vmem:[#allocation2 + $0x60] sm:$0xff] %v306
  %323 = vst [vmem:[#allocation2 + $0x68] sm:$0xff] %v307
  %324 = vst [vmem:[#allocation2 + $0x70] sm:$0xff] %v308
  %325 = vst [vmem:[#allocation2 + $0x78] sm:$0xff] %v309
  %v326 = vld [vmem:[#allocation3] sm:$0xff]
  %v327 = vld [vmem:[#allocation3 + $0x8] sm:$0xff]
  %v328 = vld [vmem:[#allocation3 + $0x10] sm:$0xff]
  %v329 = vld [vmem:[#allocation3 + $0x18] sm:$0xff]
  %v330 = vld [vmem:[#allocation3 + $0x20] sm:$0xff]
  %v331 = vld [vmem:[#allocation3 + $0x28] sm:$0xff]
  %v332 = vld [vmem:[#allocation3 + $0x30] sm:$0xff]
  %v333 = vld [vmem:[#allocation3 + $0x38] sm:$0xff]
  %v334 = vld [vmem:[#allocation3 + $0x40] sm:$0xff]
  %v335 = vld [vmem:[#allocation3 + $0x48] sm:$0xff]
  %v336 = vld [vmem:[#allocation3 + $0x50] sm:$0xff]
  %v337 = vld [vmem:[#allocation3 + $0x58] sm:$0xff]
  %v338 = vld [vmem:[#allocation3 + $0x60] sm:$0xff]
  %v339 = vld [vmem:[#allocation3 + $0x68] sm:$0xff]
  %v340 = vld [vmem:[#allocation3 + $0x70] sm:$0xff]
  %v341 = vld [vmem:[#allocation3 + $0x78] sm:$0xff]
  %v342 = vld [vmem:[%s2] sm:$0xf]
  %v343 = vld [vmem:[%s2 + $0x4] sm:$0xf]
  %v344 = vld [vmem:[%s2 + $0x8] sm:$0xf]
  %v345 = vld [vmem:[%s2 + $0xc] sm:$0xf]
  %v346 = vld [vmem:[%s2 + $0x10] sm:$0xf]
  %v347 = vld [vmem:[%s2 + $0x14] sm:$0xf]
  %v348 = vld [vmem:[%s2 + $0x18] sm:$0xf]
  %v349 = vld [vmem:[%s2 + $0x1c] sm:$0xf]
  %v350 = vld [vmem:[%s2 + $0x20] sm:$0xf]
  %v351 = vld [vmem:[%s2 + $0x24] sm:$0xf]
  %v352 = vld [vmem:[%s2 + $0x28] sm:$0xf]
  %v353 = vld [vmem:[%s2 + $0x2c] sm:$0xf]
  %v354 = vld [vmem:[%s2 + $0x30] sm:$0xf]
  %v355 = vld [vmem:[%s2 + $0x34] sm:$0xf]
  %v356 = vld [vmem:[%s2 + $0x38] sm:$0xf]
  %v357 = vld [vmem:[%s2 + $0x3c] sm:$0xf]
  %v374 = vunpack.c.l.b16 %v342
  %v375 = vunpack.c.l.b16 %v343
  %v376 = vunpack.c.l.b16 %v344
  %v377 = vunpack.c.l.b16 %v345
  %v378 = vunpack.c.l.b16 %v346
  %v379 = vunpack.c.l.b16 %v347
  %v380 = vunpack.c.l.b16 %v348
  %v381 = vunpack.c.l.b16 %v349
  %v382 = vunpack.c.l.b16 %v350
  %v383 = vunpack.c.l.b16 %v351
  %v384 = vunpack.c.l.b16 %v352
  %v385 = vunpack.c.l.b16 %v353
  %v386 = vunpack.c.l.b16 %v354
  %v387 = vunpack.c.l.b16 %v355
  %v388 = vunpack.c.l.b16 %v356
  %v389 = vunpack.c.l.b16 %v357
  %v390 = vpack.c.b16 %v375, %v374
  %v391 = vpack.c.b16 %v377, %v376
  %v392 = vpack.c.b16 %v379, %v378
  %v393 = vpack.c.b16 %v381, %v380
  %v394 = vpack.c.b16 %v383, %v382
  %v395 = vpack.c.b16 %v385, %v384
  %v396 = vpack.c.b16 %v387, %v386
  %v397 = vpack.c.b16 %v389, %v388
  %406 = vmatprep.subr.bf16.mxu0 0
  %407 = vmatpush1.bf16.msra.mxu0 %v390
  %408 = vmatprep.subr.bf16.mxu0 0
  %409 = vmatpush1.bf16.msra.mxu0 %v391
  %410 = vmatprep.subr.bf16.mxu0 0
  %411 = vmatpush1.bf16.msra.mxu0 %v392
  %412 = vmatprep.subr.bf16.mxu0 0
  %413 = vmatpush1.bf16.msra.mxu0 %v393
  %414 = vmatprep.subr.bf16.mxu0 0
  %415 = vmatpush1.bf16.msra.mxu0 %v394
  %416 = vmatprep.subr.bf16.mxu0 0
  %417 = vmatpush1.bf16.msra.mxu0 %v395
  %418 = vmatprep.subr.bf16.mxu0 0
  %419 = vmatpush1.bf16.msra.mxu0 %v396
  %420 = vmatprep.subr.bf16.mxu0 0
  %421 = vmatpush1.bf16.msra.mxu0 %v397
  %422 = vmatprep.subr.bf16.mxu0 0
  %423 = vmatpush1.bf16.msra.mxu0 0
  %424 = vmatprep.subr.bf16.mxu0 0
  %425 = vmatpush1.bf16.msra.mxu0 0
  %426 = vmatprep.subr.bf16.mxu0 0
  %427 = vmatpush1.bf16.msra.mxu0 0
  %428 = vmatprep.subr.bf16.mxu0 0
  %429 = vmatpush1.bf16.msra.mxu0 0
  %430 = vmatprep.subr.bf16.mxu0 0
  %431 = vmatpush1.bf16.msra.mxu0 0
  %432 = vmatprep.subr.bf16.mxu0 0
  %433 = vmatpush1.bf16.msra.mxu0 0
  %434 = vmatprep.subr.bf16.mxu0 0
  %435 = vmatpush1.bf16.msra.mxu0 0
  %436 = vmatprep.subr.bf16.mxu0 0
  %437 = vmatpush1.bf16.msra.mxu0 0
  %438 = vmatprep.mubr.bf16.mxu0 0
  %439 = vmatmul.mubr.bf16.gmra.mrb[0].mxu0 %v133
  %v440 = vpop.f32.mrb[0].mxu0
  %v441 = vadd.f32 0.0, %v440
  %v442 = vpop.f32.mrb[0].mxu0
  %v443 = vpop.f32.mrb[0].mxu0
  %v444 = vadd.f32 0.0, %v443
  %v445 = vpop.f32.mrb[0].mxu0
  %446 = vmatprep.mubr.bf16.mxu0 0
  %447 = vmatmul.mubr.bf16.gmra.mrb[0].mxu0 %v134
  %v448 = vpop.f32.mrb[0].mxu0
  %v449 = vadd.f32 0.0, %v448
  %v450 = vpop.f32.mrb[0].mxu0
  %v451 = vpop.f32.mrb[0].mxu0
  %v452 = vadd.f32 0.0, %v451
  %v453 = vpop.f32.mrb[0].mxu0
  %454 = vmatprep.mubr.bf16.mxu0 0
  %455 = vmatmul.mubr.bf16.gmra.mrb[0].mxu0 %v135
  %v456 = vpop.f32.mrb[0].mxu0
  %v457 = vadd.f32 0.0, %v456
  %v458 = vpop.f32.mrb[0].mxu0
  %v459 = vpop.f32.mrb[0].mxu0
  %v460 = vadd.f32 0.0, %v459
  %v461 = vpop.f32.mrb[0].mxu0
  %462 = vmatprep.mubr.bf16.mxu0 0
  %463 = vmatmul.mubr.bf16.gmra.mrb[0].mxu0 %v136
  %v464 = vpop.f32.mrb[0].mxu0
  %v465 = vadd.f32 0.0, %v464
  %v466 = vpop.f32.mrb[0].mxu0
  %v467 = vpop.f32.mrb[0].mxu0
  %v468 = vadd.f32 0.0, %v467
  %v469 = vpop.f32.mrb[0].mxu0
  %470 = vmatprep.mubr.bf16.mxu0 0
  %471 = vmatmul.mubr.bf16.gmra.mrb[0].mxu0 %v137
  %v472 = vpop.f32.mrb[0].mxu0
  %v473 = vadd.f32 0.0, %v472
  %v474 = vpop.f32.mrb[0].mxu0
  %v475 = vpop.f32.mrb[0].mxu0
  %v476 = vadd.f32 0.0, %v475
  %v477 = vpop.f32.mrb[0].mxu0
  %478 = vmatprep.mubr.bf16.mxu0 0
  %479 = vmatmul.mubr.bf16.gmra.mrb[0].mxu0 %v138
  %v480 = vpop.f32.mrb[0].mxu0
  %v481 = vadd.f32 0.0, %v480
  %v482 = vpop.f32.mrb[0].mxu0
  %v483 = vpop.f32.mrb[0].mxu0
  %v484 = vadd.f32 0.0, %v483
  %v485 = vpop.f32.mrb[0].mxu0
  %486 = vmatprep.mubr.bf16.mxu0 0
  %487 = vmatmul.mubr.bf16.gmra.mrb[0].mxu0 %v139
  %v488 = vpop.f32.mrb[0].mxu0
  %v489 = vadd.f32 0.0, %v488
  %v490 = vpop.f32.mrb[0].mxu0
  %v491 = vpop.f32.mrb[0].mxu0
  %v492 = vadd.f32 0.0, %v491
  %v493 = vpop.f32.mrb[0].mxu0
  %494 = vmatprep.mubr.bf16.mxu0 0
  %495 = vmatmul.mubr.bf16.gmra.mrb[0].mxu0 %v140
  %v496 = vpop.f32.mrb[0].mxu0
  %v497 = vadd.f32 0.0, %v496
  %v498 = vpop.f32.mrb[0].mxu0
  %v499 = vpop.f32.mrb[0].mxu0
  %v500 = vadd.f32 0.0, %v499
  %v501 = vpop.f32.mrb[0].mxu0
  %502 = vdwg.mxu0
  %v503 = vadd.f32 %v326, %v441
  %v504 = vadd.f32 %v327, %v444
  %v505 = vadd.f32 %v328, %v449
  %v506 = vadd.f32 %v329, %v452
  %v507 = vadd.f32 %v330, %v457
  %v508 = vadd.f32 %v331, %v460
  %v509 = vadd.f32 %v332, %v465
  %v510 = vadd.f32 %v333, %v468
  %v511 = vadd.f32 %v334, %v473
  %v512 = vadd.f32 %v335, %v476
  %v513 = vadd.f32 %v336, %v481
  %v514 = vadd.f32 %v337, %v484
  %v515 = vadd.f32 %v338, %v489
  %v516 = vadd.f32 %v339, %v492
  %v517 = vadd.f32 %v340, %v497
  %v518 = vadd.f32 %v341, %v500
  %519 = vst [vmem:[#allocation3] sm:$0xff] %v503
  %520 = vst [vmem:[#allocation3 + $0x8] sm:$0xff] %v504
  %521 = vst [vmem:[#allocation3 + $0x10] sm:$0xff] %v505
  %522 = vst [vmem:[#allocation3 + $0x18] sm:$0xff] %v506
  %523 = vst [vmem:[#allocation3 + $0x20] sm:$0xff] %v507
  %524 = vst [vmem:[#allocation3 + $0x28] sm:$0xff] %v508
  %525 = vst [vmem:[#allocation3 + $0x30] sm:$0xff] %v509
  %526 = vst [vmem:[#allocation3 + $0x38] sm:$0xff] %v510
  %527 = vst [vmem:[#allocation3 + $0x40] sm:$0xff] %v511
  %528 = vst [vmem:[#allocation3 + $0x48] sm:$0xff] %v512
  %529 = vst [vmem:[#allocation3 + $0x50] sm:$0xff] %v513
  %530 = vst [vmem:[#allocation3 + $0x58] sm:$0xff] %v514
  %531 = vst [vmem:[#allocation3 + $0x60] sm:$0xff] %v515
  %532 = vst [vmem:[#allocation3 + $0x68] sm:$0xff] %v516
  %533 = vst [vmem:[#allocation3 + $0x70] sm:$0xff] %v517
  %534 = vst [vmem:[#allocation3 + $0x78] sm:$0xff] %v518
  // Predicated region
  $region18: #{encoder_forward.5} parent=0 // pred_check
    %p535 = pneg %p17
  $region19: #{encoder_forward.5} parent=0 // pred_check_branch
    %537 = sbr.rel (%p535) target = $region21
  $region20: #{encoder_forward.5} parent=0 // pred_region
    %v538 = vld [vmem:[#allocation2] sm:$0xff]
    %v539 = vld [vmem:[#allocation2 + $0x8] sm:$0xff]
    %v540 = vld [vmem:[#allocation2 + $0x10] sm:$0xff]
    %v541 = vld [vmem:[#allocation2 + $0x18] sm:$0xff]
    %v542 = vld [vmem:[#allocation2 + $0x20] sm:$0xff]
    %v543 = vld [vmem:[#allocation2 + $0x28] sm:$0xff]
    %v544 = vld [vmem:[#allocation2 + $0x30] sm:$0xff]
    %v545 = vld [vmem:[#allocation2 + $0x38] sm:$0xff]
    %v546 = vld [vmem:[#allocation2 + $0x40] sm:$0xff]
    %v547 = vld [vmem:[#allocation2 + $0x48] sm:$0xff]
    %v548 = vld [vmem:[#allocation2 + $0x50] sm:$0xff]
    %v549 = vld [vmem:[#allocation2 + $0x58] sm:$0xff]
    %v550 = vld [vmem:[#allocation2 + $0x60] sm:$0xff]
    %v551 = vld [vmem:[#allocation2 + $0x68] sm:$0xff]
    %v552 = vld [vmem:[#allocation2 + $0x70] sm:$0xff]
    %v553 = vld [vmem:[#allocation2 + $0x78] sm:$0xff]
    %v554 = vmax.f32 %v538, 0.0
    %v555 = vmax.f32 %v539, 0.0
    %v556 = vmax.f32 %v540, 0.0
    %v557 = vmax.f32 %v541, 0.0
    %v558 = vmax.f32 %v542, 0.0
    %v559 = vmax.f32 %v543, 0.0
    %v560 = vmax.f32 %v544, 0.0
    %v561 = vmax.f32 %v545, 0.0
    %v562 = vmax.f32 %v546, 0.0
    %v563 = vmax.f32 %v547, 0.0
    %v564 = vmax.f32 %v548, 0.0
    %v565 = vmax.f32 %v549, 0.0
    %v566 = vmax.f32 %v550, 0.0
    %v567 = vmax.f32 %v551, 0.0
    %v568 = vmax.f32 %v552, 0.0
    %v569 = vmax.f32 %v553, 0.0
    %570 = vst [vmem:[%s3] sm:$0xff] %v554
    %571 = vst [vmem:[%s3 + $0x8] sm:$0xff] %v555
    %572 = vst [vmem:[%s3 + $0x10] sm:$0xff] %v556
    %573 = vst [vmem:[%s3 + $0x18] sm:$0xff] %v557
    %574 = vst [vmem:[%s3 + $0x20] sm:$0xff] %v558
    %575 = vst [vmem:[%s3 + $0x28] sm:$0xff] %v559
    %576 = vst [vmem:[%s3 + $0x30] sm:$0xff] %v560
    %577 = vst [vmem:[%s3 + $0x38] sm:$0xff] %v561
    %578 = vst [vmem:[%s3 + $0x40] sm:$0xff] %v562
    %579 = vst [vmem:[%s3 + $0x48] sm:$0xff] %v563
    %580 = vst [vmem:[%s3 + $0x50] sm:$0xff] %v564
    %581 = vst [vmem:[%s3 + $0x58] sm:$0xff] %v565
    %582 = vst [vmem:[%s3 + $0x60] sm:$0xff] %v566
    %583 = vst [vmem:[%s3 + $0x68] sm:$0xff] %v567
    %584 = vst [vmem:[%s3 + $0x70] sm:$0xff] %v568
    %585 = vst [vmem:[%s3 + $0x78] sm:$0xff] %v569
    %v586 = vld [vmem:[#allocation3] sm:$0xff]
    %v587 = vld [vmem:[#allocation3 + $0x8] sm:$0xff]
    %v588 = vld [vmem:[#allocation3 + $0x10] sm:$0xff]
    %v589 = vld [vmem:[#allocation3 + $0x18] sm:$0xff]
    %v590 = vld [vmem:[#allocation3 + $0x20] sm:$0xff]
    %v591 = vld [vmem:[#allocation3 + $0x28] sm:$0xff]
    %v592 = vld [vmem:[#allocation3 + $0x30] sm:$0xff]
    %v593 = vld [vmem:[#allocation3 + $0x38] sm:$0xff]
    %v594 = vld [vmem:[#allocation3 + $0x40] sm:$0xff]
    %v595 = vld [vmem:[#allocation3 + $0x48] sm:$0xff]
    %v596 = vld [vmem:[#allocation3 + $0x50] sm:$0xff]
    %v597 = vld [vmem:[#allocation3 + $0x58] sm:$0xff]
    %v598 = vld [vmem:[#allocation3 + $0x60] sm:$0xff]
    %v599 = vld [vmem:[#allocation3 + $0x68] sm:$0xff]
    %v600 = vld [vmem:[#allocation3 + $0x70] sm:$0xff]
    %v601 = vld [vmem:[#allocation3 + $0x78] sm:$0xff]
    %v602 = vmax.f32 %v586, 0.0
    %v603 = vmax.f32 %v587, 0.0
    %v604 = vmax.f32 %v588, 0.0
    %v605 = vmax.f32 %v589, 0.0
    %v606 = vmax.f32 %v590, 0.0
    %v607 = vmax.f32 %v591, 0.0
    %v608 = vmax.f32 %v592, 0.0
    %v609 = vmax.f32 %v593, 0.0
    %v610 = vmax.f32 %v594, 0.0
    %v611 = vmax.f32 %v595, 0.0
    %v612 = vmax.f32 %v596, 0.0
    %v613 = vmax.f32 %v597, 0.0
    %v614 = vmax.f32 %v598, 0.0
    %v615 = vmax.f32 %v599, 0.0
    %v616 = vmax.f32 %v600, 0.0
    %v617 = vmax.f32 %v601, 0.0
    %618 = vst [vmem:[%s4] sm:$0xff] %v602
    %619 = vst [vmem:[%s4 + $0x8] sm:$0xff] %v603
    %620 = vst [vmem:[%s4 + $0x10] sm:$0xff] %v604
    %621 = vst [vmem:[%s4 + $0x18] sm:$0xff] %v605
    %622 = vst [vmem:[%s4 + $0x20] sm:$0xff] %v606
    %623 = vst [vmem:[%s4 + $0x28] sm:$0xff] %v607
    %624 = vst [vmem:[%s4 + $0x30] sm:$0xff] %v608
    %625 = vst [vmem:[%s4 + $0x38] sm:$0xff] %v609
    %626 = vst [vmem:[%s4 + $0x40] sm:$0xff] %v610
    %627 = vst [vmem:[%s4 + $0x48] sm:$0xff] %v611
    %628 = vst [vmem:[%s4 + $0x50] sm:$0xff] %v612
    %629 = vst [vmem:[%s4 + $0x58] sm:$0xff] %v613
    %630 = vst [vmem:[%s4 + $0x60] sm:$0xff] %v614
    %631 = vst [vmem:[%s4 + $0x68] sm:$0xff] %v615
    %632 = vst [vmem:[%s4 + $0x70] sm:$0xff] %v616
    %633 = vst [vmem:[%s4 + $0x78] sm:$0xff] %v617
  $region21: #{encoder_forward.5} parent=0 // pred_fallthru
    _
  // Predicated region
  $region22: #{encoder_forward.5} parent=0 // pred_check
    _
  $region23: #{encoder_forward.5} parent=0 // pred_check_branch
    %635 = sbr.rel (0) target = $region25
  $region24: #{encoder_forward.5} parent=0 // pred_region
    _
  $region25: #{encoder_forward.5} parent=0 // pred_fallthru
    _
  // Predicated region
  $region26: #{encoder_forward.5} parent=0 // pred_check
    _
  $region27: #{encoder_forward.5} parent=0 // pred_check_branch
    %637 = sbr.rel (0) target = $region29
  $region28: #{encoder_forward.5} parent=0 // pred_region
    _
  $region29: #{encoder_forward.5} parent=0 // pred_fallthru
    _
  // Predicated region
  $region30: #{encoder_forward.5} parent=0 // pred_check
    _
  $region31: #{encoder_forward.5} parent=0 // pred_check_branch
    %639 = sbr.rel (0) target = $region33
  $region32: #{encoder_forward.5} parent=0 // pred_region
    _
  $region33: #{encoder_forward.5} parent=0 // pred_fallthru
    _
  // Predicated region
  $region34: #{encoder_forward.5} parent=0 // pred_check
    _
  $region35: #{encoder_forward.5} parent=0 // pred_check_branch
    %641 = sbr.rel (0) target = $region37
  $region36: #{encoder_forward.5} parent=0 // pred_region
    _
  $region37: #{encoder_forward.5} parent=0 // pred_fallthru
    _

// kernel: encoder_forward.7
$region0: #{encoder_forward.7}
  #allocation0 [shape = 'u32[]', space=smem, size = 0x4, offset = 0x4, fixed_abs, tag = 'smem constant byte address 0x4 - core index']
  #allocation1 [shape = 'u32[144,128]{1,0:T(1,128)}', space=vmem, size = 0x12000, scoped, tag = 'internal scratch']
  #allocation2 [shape = 'f32[128,128]{1,0:T(8,128)}', space=vmem, size = 0x10000, scoped, tag = 'scratch operand']
  #allocation3 [shape = 'f32[128,128]{1,0:T(8,128)}', space=vmem, size = 0x10000, scoped, tag = 'scratch operand']
  %s0 = inlined_call_operand.vmem [shape: bf16[128,128], index: 0, kind: input, shape index: {}]
  %s1 = inlined_call_operand.vmem [shape: bf16[128,128], index: 1, kind: input, shape index: {}]
  %s2 = inlined_call_operand.vmem [shape: bf16[128,128], index: 2, kind: input, shape index: {}]
  %s3 = inlined_call_operand.vmem [shape: f32[128,128], index: 3, kind: input, shape index: {}]
  %s4 = inlined_call_operand.vmem [shape: f32[128,128], index: 4, kind: output, shape index: {}]
  %s5 = sld [smem:[#allocation0]]
  $region34: #{encoder_forward.7} parent=0
    _
  %s7 = ssub.s32 1, %s5
  %s8 = scalar_select 0, %s7, %s5
  // Predicated region
  $region2: #{encoder_forward.7} parent=0 // pred_check
    _
  $region3: #{encoder_forward.7} parent=0 // pred_check_branch
    %10 = sbr.rel (0) target = $region5
  $region4: #{encoder_forward.7} parent=0 // pred_region
    _
  $region5: #{encoder_forward.7} parent=0 // pred_fallthru
    _
  // Predicated region
  $region6: #{encoder_forward.7} parent=0 // pred_check
    _
  $region7: #{encoder_forward.7} parent=0 // pred_check_branch
    %12 = sbr.rel (0) target = $region9
  $region8: #{encoder_forward.7} parent=0 // pred_region
    _
  $region9: #{encoder_forward.7} parent=0 // pred_fallthru
    _
  // Predicated region
  $region10: #{encoder_forward.7} parent=0 // pred_check
    _
  $region11: #{encoder_forward.7} parent=0 // pred_check_branch
    %14 = sbr.rel (0) target = $region13
  $region12: #{encoder_forward.7} parent=0 // pred_region
    _
  $region13: #{encoder_forward.7} parent=0 // pred_fallthru
    _
  // Predicated region
  $region14: #{encoder_forward.7} parent=0 // pred_check
    _
  $region15: #{encoder_forward.7} parent=0 // pred_check_branch
    %16 = sbr.rel (0) target = $region17
  $region16: #{encoder_forward.7} parent=0 // pred_region
    _
  $region17: #{encoder_forward.7} parent=0 // pred_fallthru
    _
  %p18 = scmp.eq.s32.totalorder 0, 0
  // Predicated region
  $region18: #{encoder_forward.7} parent=0 // pred_check
    %p19 = pneg %p18
  $region19: #{encoder_forward.7} parent=0 // pred_check_branch
    %21 = sbr.rel (%p19) target = $region21
  $region20: #{encoder_forward.7} parent=0 // pred_region
    %22 = vst [vmem:[#allocation2] sm:$0xff] 0.0
    %23 = vst [vmem:[#allocation2 + $0x8] sm:$0xff] 0.0
    %24 = vst [vmem:[#allocation2 + $0x10] sm:$0xff] 0.0
    %25 = vst [vmem:[#allocation2 + $0x18] sm:$0xff] 0.0
    %26 = vst [vmem:[#allocation2 + $0x20] sm:$0xff] 0.0
    %27 = vst [vmem:[#allocation2 + $0x28] sm:$0xff] 0.0
    %28 = vst [vmem:[#allocation2 + $0x30] sm:$0xff] 0.0
    %29 = vst [vmem:[#allocation2 + $0x38] sm:$0xff] 0.0
    %30 = vst [vmem:[#allocation2 + $0x40] sm:$0xff] 0.0
    %31 = vst [vmem:[#allocation2 + $0x48] sm:$0xff] 0.0
    %32 = vst [vmem:[#allocation2 + $0x50] sm:$0xff] 0.0
    %33 = vst [vmem:[#allocation2 + $0x58] sm:$0xff] 0.0
    %34 = vst [vmem:[#allocation2 + $0x60] sm:$0xff] 0.0
    %35 = vst [vmem:[#allocation2 + $0x68] sm:$0xff] 0.0
    %36 = vst [vmem:[#allocation2 + $0x70] sm:$0xff] 0.0
    %37 = vst [vmem:[#allocation2 + $0x78] sm:$0xff] 0.0
    %38 = vst [vmem:[#allocation3] sm:$0xff] 0.0
    %39 = vst [vmem:[#allocation3 + $0x8] sm:$0xff] 0.0
    %40 = vst [vmem:[#allocation3 + $0x10] sm:$0xff] 0.0
    %41 = vst [vmem:[#allocation3 + $0x18] sm:$0xff] 0.0
    %42 = vst [vmem:[#allocation3 + $0x20] sm:$0xff] 0.0
    %43 = vst [vmem:[#allocation3 + $0x28] sm:$0xff] 0.0
    %44 = vst [vmem:[#allocation3 + $0x30] sm:$0xff] 0.0
    %45 = vst [vmem:[#allocation3 + $0x38] sm:$0xff] 0.0
    %46 = vst [vmem:[#allocation3 + $0x40] sm:$0xff] 0.0
    %47 = vst [vmem:[#allocation3 + $0x48] sm:$0xff] 0.0
    %48 = vst [vmem:[#allocation3 + $0x50] sm:$0xff] 0.0
    %49 = vst [vmem:[#allocation3 + $0x58] sm:$0xff] 0.0
    %50 = vst [vmem:[#allocation3 + $0x60] sm:$0xff] 0.0
    %51 = vst [vmem:[#allocation3 + $0x68] sm:$0xff] 0.0
    %52 = vst [vmem:[#allocation3 + $0x70] sm:$0xff] 0.0
    %53 = vst [vmem:[#allocation3 + $0x78] sm:$0xff] 0.0
  $region21: #{encoder_forward.7} parent=0 // pred_fallthru
    _
  %v54 = vld [vmem:[%s0] sm:$0xf]
  %v55 = vld [vmem:[%s0 + $0x4] sm:$0xf]
  %v56 = vld [vmem:[%s0 + $0x8] sm:$0xf]
  %v57 = vld [vmem:[%s0 + $0xc] sm:$0xf]
  %v58 = vld [vmem:[%s0 + $0x10] sm:$0xf]
  %v59 = vld [vmem:[%s0 + $0x14] sm:$0xf]
  %v60 = vld [vmem:[%s0 + $0x18] sm:$0xf]
  %v61 = vld [vmem:[%s0 + $0x1c] sm:$0xf]
  %v62 = vld [vmem:[%s0 + $0x20] sm:$0xf]
  %v63 = vld [vmem:[%s0 + $0x24] sm:$0xf]
  %v64 = vld [vmem:[%s0 + $0x28] sm:$0xf]
  %v65 = vld [vmem:[%s0 + $0x2c] sm:$0xf]
  %v66 = vld [vmem:[%s0 + $0x30] sm:$0xf]
  %v67 = vld [vmem:[%s0 + $0x34] sm:$0xf]
  %v68 = vld [vmem:[%s0 + $0x38] sm:$0xf]
  %v69 = vld [vmem:[%s0 + $0x3c] sm:$0xf]
  %v70 = vld [vmem:[#allocation2] sm:$0xff]
  %v71 = vld [vmem:[#allocation2 + $0x8] sm:$0xff]
  %v72 = vld [vmem:[#allocation2 + $0x10] sm:$0xff]
  %v73 = vld [vmem:[#allocation2 + $0x18] sm:$0xff]
  %v74 = vld [vmem:[#allocation2 + $0x20] sm:$0xff]
  %v75 = vld [vmem:[#allocation2 + $0x28] sm:$0xff]
  %v76 = vld [vmem:[#allocation2 + $0x30] sm:$0xff]
  %v77 = vld [vmem:[#allocation2 + $0x38] sm:$0xff]
  %v78 = vld [vmem:[#allocation2 + $0x40] sm:$0xff]
  %v79 = vld [vmem:[#allocation2 + $0x48] sm:$0xff]
  %v80 = vld [vmem:[#allocation2 + $0x50] sm:$0xff]
  %v81 = vld [vmem:[#allocation2 + $0x58] sm:$0xff]
  %v82 = vld [vmem:[#allocation2 + $0x60] sm:$0xff]
  %v83 = vld [vmem:[#allocation2 + $0x68] sm:$0xff]
  %v84 = vld [vmem:[#allocation2 + $0x70] sm:$0xff]
  %v85 = vld [vmem:[#allocation2 + $0x78] sm:$0xff]
  %v86 = vld [vmem:[%s1] sm:$0xf]
  %v87 = vld [vmem:[%s1 + $0x4] sm:$0xf]
  %v88 = vld [vmem:[%s1 + $0x8] sm:$0xf]
  %v89 = vld [vmem:[%s1 + $0xc] sm:$0xf]
  %v90 = vld [vmem:[%s1 + $0x10] sm:$0xf]
  %v91 = vld [vmem:[%s1 + $0x14] sm:$0xf]
  %v92 = vld [vmem:[%s1 + $0x18] sm:$0xf]
  %v93 = vld [vmem:[%s1 + $0x1c] sm:$0xf]
  %v94 = vld [vmem:[%s1 + $0x20] sm:$0xf]
  %v95 = vld [vmem:[%s1 + $0x24] sm:$0xf]
  %v96 = vld [vmem:[%s1 + $0x28] sm:$0xf]
  %v97 = vld [vmem:[%s1 + $0x2c] sm:$0xf]
  %v98 = vld [vmem:[%s1 + $0x30] sm:$0xf]
  %v99 = vld [vmem:[%s1 + $0x34] sm:$0xf]
  %v100 = vld [vmem:[%s1 + $0x38] sm:$0xf]
  %v101 = vld [vmem:[%s1 + $0x3c] sm:$0xf]
  %v118 = vunpack.c.l.b16 %v54
  %v119 = vunpack.c.l.b16 %v55
  %v120 = vunpack.c.l.b16 %v56
  %v121 = vunpack.c.l.b16 %v57
  %v122 = vunpack.c.l.b16 %v58
  %v123 = vunpack.c.l.b16 %v59
  %v124 = vunpack.c.l.b16 %v60
  %v125 = vunpack.c.l.b16 %v61
  %v126 = vunpack.c.l.b16 %v62
  %v127 = vunpack.c.l.b16 %v63
  %v128 = vunpack.c.l.b16 %v64
  %v129 = vunpack.c.l.b16 %v65
  %v130 = vunpack.c.l.b16 %v66
  %v131 = vunpack.c.l.b16 %v67
  %v132 = vunpack.c.l.b16 %v68
  %v133 = vunpack.c.l.b16 %v69
  %v134 = vpack.c.b16 %v119, %v118
  %v135 = vpack.c.b16 %v121, %v120
  %v136 = vpack.c.b16 %v123, %v122
  %v137 = vpack.c.b16 %v125, %v124
  %v138 = vpack.c.b16 %v127, %v126
  %v139 = vpack.c.b16 %v129, %v128
  %v140 = vpack.c.b16 %v131, %v130
  %v141 = vpack.c.b16 %v133, %v132
  %v166 = vunpack.c.l.b16 %v86
  %v167 = vunpack.c.l.b16 %v87
  %v168 = vunpack.c.l.b16 %v88
  %v169 = vunpack.c.l.b16 %v89
  %v170 = vunpack.c.l.b16 %v90
  %v171 = vunpack.c.l.b16 %v91
  %v172 = vunpack.c.l.b16 %v92
  %v173 = vunpack.c.l.b16 %v93
  %v174 = vunpack.c.l.b16 %v94
  %v175 = vunpack.c.l.b16 %v95
  %v176 = vunpack.c.l.b16 %v96
  %v177 = vunpack.c.l.b16 %v97
  %v178 = vunpack.c.l.b16 %v98
  %v179 = vunpack.c.l.b16 %v99
  %v180 = vunpack.c.l.b16 %v100
  %v181 = vunpack.c.l.b16 %v101
  %v182 = vpack.c.b16 %v167, %v166
  %v183 = vpack.c.b16 %v169, %v168
  %v184 = vpack.c.b16 %v171, %v170
  %v185 = vpack.c.b16 %v173, %v172
  %v186 = vpack.c.b16 %v175, %v174
  %v187 = vpack.c.b16 %v177, %v176
  %v188 = vpack.c.b16 %v179, %v178
  %v189 = vpack.c.b16 %v181, %v180
  %198 = vmatprep.subr.bf16.mxu0 0
  %199 = vmatpush1.bf16.msra.mxu0 %v182
  %200 = vmatprep.subr.bf16.mxu0 0
  %201 = vmatpush1.bf16.msra.mxu0 %v183
  %202 = vmatprep.subr.bf16.mxu0 0
  %203 = vmatpush1.bf16.msra.mxu0 %v184
  %204 = vmatprep.subr.bf16.mxu0 0
  %205 = vmatpush1.bf16.msra.mxu0 %v185
  %206 = vmatprep.subr.bf16.mxu0 0
  %207 = vmatpush1.bf16.msra.mxu0 %v186
  %208 = vmatprep.subr.bf16.mxu0 0
  %209 = vmatpush1.bf16.msra.mxu0 %v187
  %210 = vmatprep.subr.bf16.mxu0 0
  %211 = vmatpush1.bf16.msra.mxu0 %v188
  %212 = vmatprep.subr.bf16.mxu0 0
  %213 = vmatpush1.bf16.msra.mxu0 %v189
  %214 = vmatprep.subr.bf16.mxu0 0
  %215 = vmatpush1.bf16.msra.mxu0 0
  %216 = vmatprep.subr.bf16.mxu0 0
  %217 = vmatpush1.bf16.msra.mxu0 0
  %218 = vmatprep.subr.bf16.mxu0 0
  %219 = vmatpush1.bf16.msra.mxu0 0
  %220 = vmatprep.subr.bf16.mxu0 0
  %221 = vmatpush1.bf16.msra.mxu0 0
  %222 = vmatprep.subr.bf16.mxu0 0
  %223 = vmatpush1.bf16.msra.mxu0 0
  %224 = vmatprep.subr.bf16.mxu0 0
  %225 = vmatpush1.bf16.msra.mxu0 0
  %226 = vmatprep.subr.bf16.mxu0 0
  %227 = vmatpush1.bf16.msra.mxu0 0
  %228 = vmatprep.subr.bf16.mxu0 0
  %229 = vmatpush1.bf16.msra.mxu0 0
  %230 = vmatprep.mubr.bf16.mxu0 0
  %231 = vmatmul.mubr.bf16.gmra.mrb[0].mxu0 %v134
  %v232 = vpop.f32.mrb[0].mxu0
  %v233 = vadd.f32 0.0, %v232
  %v234 = vpop.f32.mrb[0].mxu0
  %v235 = vpop.f32.mrb[0].mxu0
  %v236 = vadd.f32 0.0, %v235
  %v237 = vpop.f32.mrb[0].mxu0
  %238 = vmatprep.mubr.bf16.mxu0 0
  %239 = vmatmul.mubr.bf16.gmra.mrb[0].mxu0 %v135
  %v240 = vpop.f32.mrb[0].mxu0
  %v241 = vadd.f32 0.0, %v240
  %v242 = vpop.f32.mrb[0].mxu0
  %v243 = vpop.f32.mrb[0].mxu0
  %v244 = vadd.f32 0.0, %v243
  %v245 = vpop.f32.mrb[0].mxu0
  %246 = vmatprep.mubr.bf16.mxu0 0
  %247 = vmatmul.mubr.bf16.gmra.mrb[0].mxu0 %v136
  %v248 = vpop.f32.mrb[0].mxu0
  %v249 = vadd.f32 0.0, %v248
  %v250 = vpop.f32.mrb[0].mxu0
  %v251 = vpop.f32.mrb[0].mxu0
  %v252 = vadd.f32 0.0, %v251
  %v253 = vpop.f32.mrb[0].mxu0
  %254 = vmatprep.mubr.bf16.mxu0 0
  %255 = vmatmul.mubr.bf16.gmra.mrb[0].mxu0 %v137
  %v256 = vpop.f32.mrb[0].mxu0
  %v257 = vadd.f32 0.0, %v256
  %v258 = vpop.f32.mrb[0].mxu0
  %v259 = vpop.f32.mrb[0].mxu0
  %v260 = vadd.f32 0.0, %v259
  %v261 = vpop.f32.mrb[0].mxu0
  %262 = vmatprep.mubr.bf16.mxu0 0
  %263 = vmatmul.mubr.bf16.gmra.mrb[0].mxu0 %v138
  %v264 = vpop.f32.mrb[0].mxu0
  %v265 = vadd.f32 0.0, %v264
  %v266 = vpop.f32.mrb[0].mxu0
  %v267 = vpop.f32.mrb[0].mxu0
  %v268 = vadd.f32 0.0, %v267
  %v269 = vpop.f32.mrb[0].mxu0
  %270 = vmatprep.mubr.bf16.mxu0 0
  %271 = vmatmul.mubr.bf16.gmra.mrb[0].mxu0 %v139
  %v272 = vpop.f32.mrb[0].mxu0
  %v273 = vadd.f32 0.0, %v272
  %v274 = vpop.f32.mrb[0].mxu0
  %v275 = vpop.f32.mrb[0].mxu0
  %v276 = vadd.f32 0.0, %v275
  %v277 = vpop.f32.mrb[0].mxu0
  %278 = vmatprep.mubr.bf16.mxu0 0
  %279 = vmatmul.mubr.bf16.gmra.mrb[0].mxu0 %v140
  %v280 = vpop.f32.mrb[0].mxu0
  %v281 = vadd.f32 0.0, %v280
  %v282 = vpop.f32.mrb[0].mxu0
  %v283 = vpop.f32.mrb[0].mxu0
  %v284 = vadd.f32 0.0, %v283
  %v285 = vpop.f32.mrb[0].mxu0
  %286 = vmatprep.mubr.bf16.mxu0 0
  %287 = vmatmul.mubr.bf16.gmra.mrb[0].mxu0 %v141
  %v288 = vpop.f32.mrb[0].mxu0
  %v289 = vadd.f32 0.0, %v288
  %v290 = vpop.f32.mrb[0].mxu0
  %v291 = vpop.f32.mrb[0].mxu0
  %v292 = vadd.f32 0.0, %v291
  %v293 = vpop.f32.mrb[0].mxu0
  %294 = vdwg.mxu0
  %v295 = vadd.f32 %v70, %v233
  %v296 = vadd.f32 %v71, %v236
  %v297 = vadd.f32 %v72, %v241
  %v298 = vadd.f32 %v73, %v244
  %v299 = vadd.f32 %v74, %v249
  %v300 = vadd.f32 %v75, %v252
  %v301 = vadd.f32 %v76, %v257
  %v302 = vadd.f32 %v77, %v260
  %v303 = vadd.f32 %v78, %v265
  %v304 = vadd.f32 %v79, %v268
  %v305 = vadd.f32 %v80, %v273
  %v306 = vadd.f32 %v81, %v276
  %v307 = vadd.f32 %v82, %v281
  %v308 = vadd.f32 %v83, %v284
  %v309 = vadd.f32 %v84, %v289
  %v310 = vadd.f32 %v85, %v292
  %311 = vst [vmem:[#allocation2] sm:$0xff] %v295
  %312 = vst [vmem:[#allocation2 + $0x8] sm:$0xff] %v296
  %313 = vst [vmem:[#allocation2 + $0x10] sm:$0xff] %v297
  %314 = vst [vmem:[#allocation2 + $0x18] sm:$0xff] %v298
  %315 = vst [vmem:[#allocation2 + $0x20] sm:$0xff] %v299
  %316 = vst [vmem:[#allocation2 + $0x28] sm:$0xff] %v300
  %317 = vst [vmem:[#allocation2 + $0x30] sm:$0xff] %v301
  %318 = vst [vmem:[#allocation2 + $0x38] sm:$0xff] %v302
  %319 = vst [vmem:[#allocation2 + $0x40] sm:$0xff] %v303
  %320 = vst [vmem:[#allocation2 + $0x48] sm:$0xff] %v304
  %321 = vst [vmem:[#allocation2 + $0x50] sm:$0xff] %v305
  %322 = vst [vmem:[#allocation2 + $0x58] sm:$0xff] %v306
  %323 = vst [vmem:[#allocation2 + $0x60] sm:$0xff] %v307
  %324 = vst [vmem:[#allocation2 + $0x68] sm:$0xff] %v308
  %325 = vst [vmem:[#allocation2 + $0x70] sm:$0xff] %v309
  %326 = vst [vmem:[#allocation2 + $0x78] sm:$0xff] %v310
  %v327 = vld [vmem:[#allocation3] sm:$0xff]
  %v328 = vld [vmem:[#allocation3 + $0x8] sm:$0xff]
  %v329 = vld [vmem:[#allocation3 + $0x10] sm:$0xff]
  %v330 = vld [vmem:[#allocation3 + $0x18] sm:$0xff]
  %v331 = vld [vmem:[#allocation3 + $0x20] sm:$0xff]
  %v332 = vld [vmem:[#allocation3 + $0x28] sm:$0xff]
  %v333 = vld [vmem:[#allocation3 + $0x30] sm:$0xff]
  %v334 = vld [vmem:[#allocation3 + $0x38] sm:$0xff]
  %v335 = vld [vmem:[#allocation3 + $0x40] sm:$0xff]
  %v336 = vld [vmem:[#allocation3 + $0x48] sm:$0xff]
  %v337 = vld [vmem:[#allocation3 + $0x50] sm:$0xff]
  %v338 = vld [vmem:[#allocation3 + $0x58] sm:$0xff]
  %v339 = vld [vmem:[#allocation3 + $0x60] sm:$0xff]
  %v340 = vld [vmem:[#allocation3 + $0x68] sm:$0xff]
  %v341 = vld [vmem:[#allocation3 + $0x70] sm:$0xff]
  %v342 = vld [vmem:[#allocation3 + $0x78] sm:$0xff]
  %v343 = vld [vmem:[%s2] sm:$0xf]
  %v344 = vld [vmem:[%s2 + $0x4] sm:$0xf]
  %v345 = vld [vmem:[%s2 + $0x8] sm:$0xf]
  %v346 = vld [vmem:[%s2 + $0xc] sm:$0xf]
  %v347 = vld [vmem:[%s2 + $0x10] sm:$0xf]
  %v348 = vld [vmem:[%s2 + $0x14] sm:$0xf]
  %v349 = vld [vmem:[%s2 + $0x18] sm:$0xf]
  %v350 = vld [vmem:[%s2 + $0x1c] sm:$0xf]
  %v351 = vld [vmem:[%s2 + $0x20] sm:$0xf]
  %v352 = vld [vmem:[%s2 + $0x24] sm:$0xf]
  %v353 = vld [vmem:[%s2 + $0x28] sm:$0xf]
  %v354 = vld [vmem:[%s2 + $0x2c] sm:$0xf]
  %v355 = vld [vmem:[%s2 + $0x30] sm:$0xf]
  %v356 = vld [vmem:[%s2 + $0x34] sm:$0xf]
  %v357 = vld [vmem:[%s2 + $0x38] sm:$0xf]
  %v358 = vld [vmem:[%s2 + $0x3c] sm:$0xf]
  %v375 = vunpack.c.l.b16 %v343
  %v376 = vunpack.c.l.b16 %v344
  %v377 = vunpack.c.l.b16 %v345
  %v378 = vunpack.c.l.b16 %v346
  %v379 = vunpack.c.l.b16 %v347
  %v380 = vunpack.c.l.b16 %v348
  %v381 = vunpack.c.l.b16 %v349
  %v382 = vunpack.c.l.b16 %v350
  %v383 = vunpack.c.l.b16 %v351
  %v384 = vunpack.c.l.b16 %v352
  %v385 = vunpack.c.l.b16 %v353
  %v386 = vunpack.c.l.b16 %v354
  %v387 = vunpack.c.l.b16 %v355
  %v388 = vunpack.c.l.b16 %v356
  %v389 = vunpack.c.l.b16 %v357
  %v390 = vunpack.c.l.b16 %v358
  %v391 = vpack.c.b16 %v376, %v375
  %v392 = vpack.c.b16 %v378, %v377
  %v393 = vpack.c.b16 %v380, %v379
  %v394 = vpack.c.b16 %v382, %v381
  %v395 = vpack.c.b16 %v384, %v383
  %v396 = vpack.c.b16 %v386, %v385
  %v397 = vpack.c.b16 %v388, %v387
  %v398 = vpack.c.b16 %v390, %v389
  %407 = vmatprep.subr.bf16.mxu0 0
  %408 = vmatpush1.bf16.msra.mxu0 %v391
  %409 = vmatprep.subr.bf16.mxu0 0
  %410 = vmatpush1.bf16.msra.mxu0 %v392
  %411 = vmatprep.subr.bf16.mxu0 0
  %412 = vmatpush1.bf16.msra.mxu0 %v393
  %413 = vmatprep.subr.bf16.mxu0 0
  %414 = vmatpush1.bf16.msra.mxu0 %v394
  %415 = vmatprep.subr.bf16.mxu0 0
  %416 = vmatpush1.bf16.msra.mxu0 %v395
  %417 = vmatprep.subr.bf16.mxu0 0
  %418 = vmatpush1.bf16.msra.mxu0 %v396
  %419 = vmatprep.subr.bf16.mxu0 0
  %420 = vmatpush1.bf16.msra.mxu0 %v397
  %421 = vmatprep.subr.bf16.mxu0 0
  %422 = vmatpush1.bf16.msra.mxu0 %v398
  %423 = vmatprep.subr.bf16.mxu0 0
  %424 = vmatpush1.bf16.msra.mxu0 0
  %425 = vmatprep.subr.bf16.mxu0 0
  %426 = vmatpush1.bf16.msra.mxu0 0
  %427 = vmatprep.subr.bf16.mxu0 0
  %428 = vmatpush1.bf16.msra.mxu0 0
  %429 = vmatprep.subr.bf16.mxu0 0
  %430 = vmatpush1.bf16.msra.mxu0 0
  %431 = vmatprep.subr.bf16.mxu0 0
  %432 = vmatpush1.bf16.msra.mxu0 0
  %433 = vmatprep.subr.bf16.mxu0 0
  %434 = vmatpush1.bf16.msra.mxu0 0
  %435 = vmatprep.subr.bf16.mxu0 0
  %436 = vmatpush1.bf16.msra.mxu0 0
  %437 = vmatprep.subr.bf16.mxu0 0
  %438 = vmatpush1.bf16.msra.mxu0 0
  %439 = vmatprep.mubr.bf16.mxu0 0
  %440 = vmatmul.mubr.bf16.gmra.mrb[0].mxu0 %v134
  %v441 = vpop.f32.mrb[0].mxu0
  %v442 = vadd.f32 0.0, %v441
  %v443 = vpop.f32.mrb[0].mxu0
  %v444 = vpop.f32.mrb[0].mxu0
  %v445 = vadd.f32 0.0, %v444
  %v446 = vpop.f32.mrb[0].mxu0
  %447 = vmatprep.mubr.bf16.mxu0 0
  %448 = vmatmul.mubr.bf16.gmra.mrb[0].mxu0 %v135
  %v449 = vpop.f32.mrb[0].mxu0
  %v450 = vadd.f32 0.0, %v449
  %v451 = vpop.f32.mrb[0].mxu0
  %v452 = vpop.f32.mrb[0].mxu0
  %v453 = vadd.f32 0.0, %v452
  %v454 = vpop.f32.mrb[0].mxu0
  %455 = vmatprep.mubr.bf16.mxu0 0
  %456 = vmatmul.mubr.bf16.gmra.mrb[0].mxu0 %v136
  %v457 = vpop.f32.mrb[0].mxu0
  %v458 = vadd.f32 0.0, %v457
  %v459 = vpop.f32.mrb[0].mxu0
  %v460 = vpop.f32.mrb[0].mxu0
  %v461 = vadd.f32 0.0, %v460
  %v462 = vpop.f32.mrb[0].mxu0
  %463 = vmatprep.mubr.bf16.mxu0 0
  %464 = vmatmul.mubr.bf16.gmra.mrb[0].mxu0 %v137
  %v465 = vpop.f32.mrb[0].mxu0
  %v466 = vadd.f32 0.0, %v465
  %v467 = vpop.f32.mrb[0].mxu0
  %v468 = vpop.f32.mrb[0].mxu0
  %v469 = vadd.f32 0.0, %v468
  %v470 = vpop.f32.mrb[0].mxu0
  %471 = vmatprep.mubr.bf16.mxu0 0
  %472 = vmatmul.mubr.bf16.gmra.mrb[0].mxu0 %v138
  %v473 = vpop.f32.mrb[0].mxu0
  %v474 = vadd.f32 0.0, %v473
  %v475 = vpop.f32.mrb[0].mxu0
  %v476 = vpop.f32.mrb[0].mxu0
  %v477 = vadd.f32 0.0, %v476
  %v478 = vpop.f32.mrb[0].mxu0
  %479 = vmatprep.mubr.bf16.mxu0 0
  %480 = vmatmul.mubr.bf16.gmra.mrb[0].mxu0 %v139
  %v481 = vpop.f32.mrb[0].mxu0
  %v482 = vadd.f32 0.0, %v481
  %v483 = vpop.f32.mrb[0].mxu0
  %v484 = vpop.f32.mrb[0].mxu0
  %v485 = vadd.f32 0.0, %v484
  %v486 = vpop.f32.mrb[0].mxu0
  %487 = vmatprep.mubr.bf16.mxu0 0
  %488 = vmatmul.mubr.bf16.gmra.mrb[0].mxu0 %v140
  %v489 = vpop.f32.mrb[0].mxu0
  %v490 = vadd.f32 0.0, %v489
  %v491 = vpop.f32.mrb[0].mxu0
  %v492 = vpop.f32.mrb[0].mxu0
  %v493 = vadd.f32 0.0, %v492
  %v494 = vpop.f32.mrb[0].mxu0
  %495 = vmatprep.mubr.bf16.mxu0 0
  %496 = vmatmul.mubr.bf16.gmra.mrb[0].mxu0 %v141
  %v497 = vpop.f32.mrb[0].mxu0
  %v498 = vadd.f32 0.0, %v497
  %v499 = vpop.f32.mrb[0].mxu0
  %v500 = vpop.f32.mrb[0].mxu0
  %v501 = vadd.f32 0.0, %v500
  %v502 = vpop.f32.mrb[0].mxu0
  %503 = vdwg.mxu0
  %v504 = vadd.f32 %v327, %v442
  %v505 = vadd.f32 %v328, %v445
  %v506 = vadd.f32 %v329, %v450
  %v507 = vadd.f32 %v330, %v453
  %v508 = vadd.f32 %v331, %v458
  %v509 = vadd.f32 %v332, %v461
  %v510 = vadd.f32 %v333, %v466
  %v511 = vadd.f32 %v334, %v469
  %v512 = vadd.f32 %v335, %v474
  %v513 = vadd.f32 %v336, %v477
  %v514 = vadd.f32 %v337, %v482
  %v515 = vadd.f32 %v338, %v485
  %v516 = vadd.f32 %v339, %v490
  %v517 = vadd.f32 %v340, %v493
  %v518 = vadd.f32 %v341, %v498
  %v519 = vadd.f32 %v342, %v501
  %520 = vst [vmem:[#allocation3] sm:$0xff] %v504
  %521 = vst [vmem:[#allocation3 + $0x8] sm:$0xff] %v505
  %522 = vst [vmem:[#allocation3 + $0x10] sm:$0xff] %v506
  %523 = vst [vmem:[#allocation3 + $0x18] sm:$0xff] %v507
  %524 = vst [vmem:[#allocation3 + $0x20] sm:$0xff] %v508
  %525 = vst [vmem:[#allocation3 + $0x28] sm:$0xff] %v509
  %526 = vst [vmem:[#allocation3 + $0x30] sm:$0xff] %v510
  %527 = vst [vmem:[#allocation3 + $0x38] sm:$0xff] %v511
  %528 = vst [vmem:[#allocation3 + $0x40] sm:$0xff] %v512
  %529 = vst [vmem:[#allocation3 + $0x48] sm:$0xff] %v513
  %530 = vst [vmem:[#allocation3 + $0x50] sm:$0xff] %v514
  %531 = vst [vmem:[#allocation3 + $0x58] sm:$0xff] %v515
  %532 = vst [vmem:[#allocation3 + $0x60] sm:$0xff] %v516
  %533 = vst [vmem:[#allocation3 + $0x68] sm:$0xff] %v517
  %534 = vst [vmem:[#allocation3 + $0x70] sm:$0xff] %v518
  %535 = vst [vmem:[#allocation3 + $0x78] sm:$0xff] %v519
  // Predicated region
  $region22: #{encoder_forward.7} parent=0 // pred_check
    %p536 = pneg %p18
  $region23: #{encoder_forward.7} parent=0 // pred_check_branch
    %538 = sbr.rel (%p536) target = $region25
  $region24: #{encoder_forward.7} parent=0 // pred_region
    %v539 = vld [vmem:[#allocation2] sm:$0xff]
    %v540 = vld [vmem:[#allocation2 + $0x8] sm:$0xff]
    %v541 = vld [vmem:[#allocation2 + $0x10] sm:$0xff]
    %v542 = vld [vmem:[#allocation2 + $0x18] sm:$0xff]
    %v543 = vld [vmem:[#allocation2 + $0x20] sm:$0xff]
    %v544 = vld [vmem:[#allocation2 + $0x28] sm:$0xff]
    %v545 = vld [vmem:[#allocation2 + $0x30] sm:$0xff]
    %v546 = vld [vmem:[#allocation2 + $0x38] sm:$0xff]
    %v547 = vld [vmem:[#allocation2 + $0x40] sm:$0xff]
    %v548 = vld [vmem:[#allocation2 + $0x48] sm:$0xff]
    %v549 = vld [vmem:[#allocation2 + $0x50] sm:$0xff]
    %v550 = vld [vmem:[#allocation2 + $0x58] sm:$0xff]
    %v551 = vld [vmem:[#allocation2 + $0x60] sm:$0xff]
    %v552 = vld [vmem:[#allocation2 + $0x68] sm:$0xff]
    %v553 = vld [vmem:[#allocation2 + $0x70] sm:$0xff]
    %v554 = vld [vmem:[#allocation2 + $0x78] sm:$0xff]
    %v555 = vmax.f32 %v539, 0.0
    %v556 = vmax.f32 %v540, 0.0
    %v557 = vmax.f32 %v541, 0.0
    %v558 = vmax.f32 %v542, 0.0
    %v559 = vmax.f32 %v543, 0.0
    %v560 = vmax.f32 %v544, 0.0
    %v561 = vmax.f32 %v545, 0.0
    %v562 = vmax.f32 %v546, 0.0
    %v563 = vmax.f32 %v547, 0.0
    %v564 = vmax.f32 %v548, 0.0
    %v565 = vmax.f32 %v549, 0.0
    %v566 = vmax.f32 %v550, 0.0
    %v567 = vmax.f32 %v551, 0.0
    %v568 = vmax.f32 %v552, 0.0
    %v569 = vmax.f32 %v553, 0.0
    %v570 = vmax.f32 %v554, 0.0
    %v571 = vld [vmem:[#allocation3] sm:$0xff]
    %v572 = vld [vmem:[#allocation3 + $0x8] sm:$0xff]
    %v573 = vld [vmem:[#allocation3 + $0x10] sm:$0xff]
    %v574 = vld [vmem:[#allocation3 + $0x18] sm:$0xff]
    %v575 = vld [vmem:[#allocation3 + $0x20] sm:$0xff]
    %v576 = vld [vmem:[#allocation3 + $0x28] sm:$0xff]
    %v577 = vld [vmem:[#allocation3 + $0x30] sm:$0xff]
    %v578 = vld [vmem:[#allocation3 + $0x38] sm:$0xff]
    %v579 = vld [vmem:[#allocation3 + $0x40] sm:$0xff]
    %v580 = vld [vmem:[#allocation3 + $0x48] sm:$0xff]
    %v581 = vld [vmem:[#allocation3 + $0x50] sm:$0xff]
    %v582 = vld [vmem:[#allocation3 + $0x58] sm:$0xff]
    %v583 = vld [vmem:[#allocation3 + $0x60] sm:$0xff]
    %v584 = vld [vmem:[#allocation3 + $0x68] sm:$0xff]
    %v585 = vld [vmem:[#allocation3 + $0x70] sm:$0xff]
    %v586 = vld [vmem:[#allocation3 + $0x78] sm:$0xff]
    %v587 = vmax.f32 %v571, 0.0
    %v588 = vmax.f32 %v572, 0.0
    %v589 = vmax.f32 %v573, 0.0
    %v590 = vmax.f32 %v574, 0.0
    %v591 = vmax.f32 %v575, 0.0
    %v592 = vmax.f32 %v576, 0.0
    %v593 = vmax.f32 %v577, 0.0
    %v594 = vmax.f32 %v578, 0.0
    %v595 = vmax.f32 %v579, 0.0
    %v596 = vmax.f32 %v580, 0.0
    %v597 = vmax.f32 %v581, 0.0
    %v598 = vmax.f32 %v582, 0.0
    %v599 = vmax.f32 %v583, 0.0
    %v600 = vmax.f32 %v584, 0.0
    %v601 = vmax.f32 %v585, 0.0
    %v602 = vmax.f32 %v586, 0.0
    %v603 = vld [vmem:[%s3] sm:$0xff]
    %v604 = vld [vmem:[%s3 + $0x8] sm:$0xff]
    %v605 = vld [vmem:[%s3 + $0x10] sm:$0xff]
    %v606 = vld [vmem:[%s3 + $0x18] sm:$0xff]
    %v607 = vld [vmem:[%s3 + $0x20] sm:$0xff]
    %v608 = vld [vmem:[%s3 + $0x28] sm:$0xff]
    %v609 = vld [vmem:[%s3 + $0x30] sm:$0xff]
    %v610 = vld [vmem:[%s3 + $0x38] sm:$0xff]
    %v611 = vld [vmem:[%s3 + $0x40] sm:$0xff]
    %v612 = vld [vmem:[%s3 + $0x48] sm:$0xff]
    %v613 = vld [vmem:[%s3 + $0x50] sm:$0xff]
    %v614 = vld [vmem:[%s3 + $0x58] sm:$0xff]
    %v615 = vld [vmem:[%s3 + $0x60] sm:$0xff]
    %v616 = vld [vmem:[%s3 + $0x68] sm:$0xff]
    %v617 = vld [vmem:[%s3 + $0x70] sm:$0xff]
    %v618 = vld [vmem:[%s3 + $0x78] sm:$0xff]
    %v619 = vrsqrt.pop %v587
    %v620 = vmul.f32 %v587, %v619
    %vm621 = vcmp.eq.f32.partialorder %v587, inf
    %v622 = vsel %vm621, %v587, %v620
    %vm623 = vcmp.eq.f32.partialorder %v587, 0.0
    %v624 = vand.u32 %v587, 2147483648
    %v625 = vsel %vm623, %v624, %v622
    %v626 = vrsqrt.pop %v588
    %v627 = vmul.f32 %v588, %v626
    %vm628 = vcmp.eq.f32.partialorder %v588, inf
    %v629 = vsel %vm628, %v588, %v627
    %vm630 = vcmp.eq.f32.partialorder %v588, 0.0
    %v631 = vand.u32 %v588, 2147483648
    %v632 = vsel %vm630, %v631, %v629
    %v633 = vrsqrt.pop %v589
    %v634 = vmul.f32 %v589, %v633
    %vm635 = vcmp.eq.f32.partialorder %v589, inf
    %v636 = vsel %vm635, %v589, %v634
    %vm637 = vcmp.eq.f32.partialorder %v589, 0.0
    %v638 = vand.u32 %v589, 2147483648
    %v639 = vsel %vm637, %v638, %v636
    %v640 = vrsqrt.pop %v590
    %v641 = vmul.f32 %v590, %v640
    %vm642 = vcmp.eq.f32.partialorder %v590, inf
    %v643 = vsel %vm642, %v590, %v641
    %vm644 = vcmp.eq.f32.partialorder %v590, 0.0
    %v645 = vand.u32 %v590, 2147483648
    %v646 = vsel %vm644, %v645, %v643
    %v647 = vrsqrt.pop %v591
    %v648 = vmul.f32 %v591, %v647
    %vm649 = vcmp.eq.f32.partialorder %v591, inf
    %v650 = vsel %vm649, %v591, %v648
    %vm651 = vcmp.eq.f32.partialorder %v591, 0.0
    %v652 = vand.u32 %v591, 2147483648
    %v653 = vsel %vm651, %v652, %v650
    %v654 = vrsqrt.pop %v592
    %v655 = vmul.f32 %v592, %v654
    %vm656 = vcmp.eq.f32.partialorder %v592, inf
    %v657 = vsel %vm656, %v592, %v655
    %vm658 = vcmp.eq.f32.partialorder %v592, 0.0
    %v659 = vand.u32 %v592, 2147483648
    %v660 = vsel %vm658, %v659, %v657
    %v661 = vrsqrt.pop %v593
    %v662 = vmul.f32 %v593, %v661
    %vm663 = vcmp.eq.f32.partialorder %v593, inf
    %v664 = vsel %vm663, %v593, %v662
    %vm665 = vcmp.eq.f32.partialorder %v593, 0.0
    %v666 = vand.u32 %v593, 2147483648
    %v667 = vsel %vm665, %v666, %v664
    %v668 = vrsqrt.pop %v594
    %v669 = vmul.f32 %v594, %v668
    %vm670 = vcmp.eq.f32.partialorder %v594, inf
    %v671 = vsel %vm670, %v594, %v669
    %vm672 = vcmp.eq.f32.partialorder %v594, 0.0
    %v673 = vand.u32 %v594, 2147483648
    %v674 = vsel %vm672, %v673, %v671
    %v675 = vrsqrt.pop %v595
    %v676 = vmul.f32 %v595, %v675
    %vm677 = vcmp.eq.f32.partialorder %v595, inf
    %v678 = vsel %vm677, %v595, %v676
    %vm679 = vcmp.eq.f32.partialorder %v595, 0.0
    %v680 = vand.u32 %v595, 2147483648
    %v681 = vsel %vm679, %v680, %v678
    %v682 = vrsqrt.pop %v596
    %v683 = vmul.f32 %v596, %v682
    %vm684 = vcmp.eq.f32.partialorder %v596, inf
    %v685 = vsel %vm684, %v596, %v683
    %vm686 = vcmp.eq.f32.partialorder %v596, 0.0
    %v687 = vand.u32 %v596, 2147483648
    %v688 = vsel %vm686, %v687, %v685
    %v689 = vrsqrt.pop %v597
    %v690 = vmul.f32 %v597, %v689
    %vm691 = vcmp.eq.f32.partialorder %v597, inf
    %v692 = vsel %vm691, %v597, %v690
    %vm693 = vcmp.eq.f32.partialorder %v597, 0.0
    %v694 = vand.u32 %v597, 2147483648
    %v695 = vsel %vm693, %v694, %v692
    %v696 = vrsqrt.pop %v598
    %v697 = vmul.f32 %v598, %v696
    %vm698 = vcmp.eq.f32.partialorder %v598, inf
    %v699 = vsel %vm698, %v598, %v697
    %vm700 = vcmp.eq.f32.partialorder %v598, 0.0
    %v701 = vand.u32 %v598, 2147483648
    %v702 = vsel %vm700, %v701, %v699
    %v703 = vrsqrt.pop %v599
    %v704 = vmul.f32 %v599, %v703
    %vm705 = vcmp.eq.f32.partialorder %v599, inf
    %v706 = vsel %vm705, %v599, %v704
    %vm707 = vcmp.eq.f32.partialorder %v599, 0.0
    %v708 = vand.u32 %v599, 2147483648
    %v709 = vsel %vm707, %v708, %v706
    %v710 = vrsqrt.pop %v600
    %v711 = vmul.f32 %v600, %v710
    %vm712 = vcmp.eq.f32.partialorder %v600, inf
    %v713 = vsel %vm712, %v600, %v711
    %vm714 = vcmp.eq.f32.partialorder %v600, 0.0
    %v715 = vand.u32 %v600, 2147483648
    %v716 = vsel %vm714, %v715, %v713
    %v717 = vrsqrt.pop %v601
    %v718 = vmul.f32 %v601, %v717
    %vm719 = vcmp.eq.f32.partialorder %v601, inf
    %v720 = vsel %vm719, %v601, %v718
    %vm721 = vcmp.eq.f32.partialorder %v601, 0.0
    %v722 = vand.u32 %v601, 2147483648
    %v723 = vsel %vm721, %v722, %v720
    %v724 = vrsqrt.pop %v602
    %v725 = vmul.f32 %v602, %v724
    %vm726 = vcmp.eq.f32.partialorder %v602, inf
    %v727 = vsel %vm726, %v602, %v725
    %vm728 = vcmp.eq.f32.partialorder %v602, 0.0
    %v729 = vand.u32 %v602, 2147483648
    %v730 = vsel %vm728, %v729, %v727
    %v731 = vmul.f32 %v603, %v625
    %v732 = vmul.f32 %v604, %v632
    %v733 = vmul.f32 %v605, %v639
    %v734 = vmul.f32 %v606, %v646
    %v735 = vmul.f32 %v607, %v653
    %v736 = vmul.f32 %v608, %v660
    %v737 = vmul.f32 %v609, %v667
    %v738 = vmul.f32 %v610, %v674
    %v739 = vmul.f32 %v611, %v681
    %v740 = vmul.f32 %v612, %v688
    %v741 = vmul.f32 %v613, %v695
    %v742 = vmul.f32 %v614, %v702
    %v743 = vmul.f32 %v615, %v709
    %v744 = vmul.f32 %v616, %v716
    %v745 = vmul.f32 %v617, %v723
    %v746 = vmul.f32 %v618, %v730
    %v747 = vadd.f32 %v555, %v731
    %v748 = vadd.f32 %v556, %v732
    %v749 = vadd.f32 %v557, %v733
    %v750 = vadd.f32 %v558, %v734
    %v751 = vadd.f32 %v559, %v735
    %v752 = vadd.f32 %v560, %v736
    %v753 = vadd.f32 %v561, %v737
    %v754 = vadd.f32 %v562, %v738
    %v755 = vadd.f32 %v563, %v739
    %v756 = vadd.f32 %v564, %v740
    %v757 = vadd.f32 %v565, %v741
    %v758 = vadd.f32 %v566, %v742
    %v759 = vadd.f32 %v567, %v743
    %v760 = vadd.f32 %v568, %v744
    %v761 = vadd.f32 %v569, %v745
    %v762 = vadd.f32 %v570, %v746
    %763 = vst [vmem:[%s4] sm:$0xff] %v747
    %764 = vst [vmem:[%s4 + $0x8] sm:$0xff] %v748
    %765 = vst [vmem:[%s4 + $0x10] sm:$0xff] %v749
    %766 = vst [vmem:[%s4 + $0x18] sm:$0xff] %v750
    %767 = vst [vmem:[%s4 + $0x20] sm:$0xff] %v751
    %768 = vst [vmem:[%s4 + $0x28] sm:$0xff] %v752
    %769 = vst [vmem:[%s4 + $0x30] sm:$0xff] %v753
    %770 = vst [vmem:[%s4 + $0x38] sm:$0xff] %v754
    %771 = vst [vmem:[%s4 + $0x40] sm:$0xff] %v755
    %772 = vst [vmem:[%s4 + $0x48] sm:$0xff] %v756
    %773 = vst [vmem:[%s4 + $0x50] sm:$0xff] %v757
    %774 = vst [vmem:[%s4 + $0x58] sm:$0xff] %v758
    %775 = vst [vmem:[%s4 + $0x60] sm:$0xff] %v759
    %776 = vst [vmem:[%s4 + $0x68] sm:$0xff] %v760
    %777 = vst [vmem:[%s4 + $0x70] sm:$0xff] %v761
    %778 = vst [vmem:[%s4 + $0x78] sm:$0xff] %v762
  $region25: #{encoder_forward.7} parent=0 // pred_fallthru
    _
  // Predicated region
  $region26: #{encoder_forward.7} parent=0 // pred_check
    _
  $region27: #{encoder_forward.7} parent=0 // pred_check_branch
    %780 = sbr.rel (0) target = $region29
  $region28: #{encoder_forward.7} parent=0 // pred_region
    _
  $region29: #{encoder_forward.7} parent=0 // pred_fallthru
    _
  // Predicated region
  $region30: #{encoder_forward.7} parent=0 // pred_check
    _
  $region31: #{encoder_forward.7} parent=0 // pred_check_branch
    %782 = sbr.rel (0) target = $region33
  $region32: #{encoder_forward.7} parent=0 // pred_region
    _
  $region33: #{encoder_forward.7} parent=0 // pred_fallthru
    _

</llo_original>
